<compile_context>
chip_gen: v6e
topology: v6e:2x2x1
jax: 0.10.0
libtpu: 0.0.40
codegen_flags: <defaults>
</compile_context>

<pallas_src>
import jax
import jax.numpy as jnp
from jax.experimental import pallas as pl
from jax.experimental.pallas import tpu as pltpu

M = 32          # feature width m
N_CLASSES = 20  # output classes
IN_CH = 3       # input point features (e.g. RGB)


def _fused_kernel(x_ref, w1_ref, shift_ref, w2_ref, b2_ref, o_ref):
    # x_ref:     (IN_CH, TN)      bf16  channel-major point-feature tile (lane-dense)
    # w1_ref:    (M, IN_CH)       bf16  center-tap conv weight, BN scale folded
    # shift_ref: (M, 1)           f32   BN shift (beta - mean*scale)
    # w2_ref:    (M, N_CLASSES)   bf16  linear weight (transposed)
    # b2_ref:    (1, N_CLASSES)   f32   linear bias
    # o_ref:     (TN, N_CLASSES)  bf16  row-major logits tile
    #
    # Center-tap submanifold conv (pointwise 3 -> M); BN scale pre-folded.
    h = jnp.dot(w1_ref[...], x_ref[...],
                preferred_element_type=jnp.float32)              # (M, TN) f32
    # BatchNormReLU(m), inference form (scale already folded into w1).
    h = jnp.maximum(h + shift_ref[...], 0.0)
    # Switch to point-major so the final store is row-major (TN, 20).  The
    # (M, TN) -> (TN, M) transpose runs on the XLU and hides under the DMAs.
    h_t = jnp.transpose(h).astype(jnp.bfloat16)                  # (TN, M) bf16
    # nn.Linear(m, 20).  Last dim 20 < 128 lanes -> masked stores; hidden under
    # the write DMA on v6e/v7x, only mildly exposed on v5e (single vst slot).
    out = jnp.dot(h_t, w2_ref[...],
                  preferred_element_type=jnp.float32)            # (TN, 20) f32
    o_ref[...] = (out + b2_ref[...]).astype(o_ref.dtype)


def pick_tile(n, *, max_tile=4096, min_tile=512):
    """Largest tile (<= max_tile) that keeps >= 2 grid steps when n allows,
    so both v7x TensorCores get work under dimension_semantics=("parallel",)."""
    if n >= 2 * max_tile:
        return max_tile
    half = -(-n // 2)                              # cdiv(n, 2)
    half = -(-half // min_tile) * min_tile         # round up to min_tile
    return int(max(min_tile, min(max_tile, half)))


def prepare_point_features(x, tile_n):
    """One-time layout prep (done when the sparse point set is built, NOT on the
    per-call hot path): cast to bf16, transpose to channel-major (3, N), pad N
    to a multiple of tile_n."""
    n = x.shape[0]
    n_pad = pl.cdiv(n, tile_n) * tile_n
    x_cm = jnp.transpose(x.astype(jnp.bfloat16))                  # (3, N)
    if n_pad != n:
        x_cm = jnp.pad(x_cm, ((0, 0), (0, n_pad - n)))
    return x_cm


def model_forward(x_cm, n, params, *, tile_n):
    """x_cm: (3, n_pad) bf16 channel-major point features (pre-prepared).
    Returns (n, 20) bf16 logits, row-major -- no wrapper-side transpose."""
    w1, bn_shift, w2t, b2 = params
    n_pad = x_cm.shape[1]
    assert n_pad % tile_n == 0

    grid = (n_pad // tile_n,)
    out = pl.pallas_call(
        _fused_kernel,
        out_shape=jax.ShapeDtypeStruct((n_pad, N_CLASSES), jnp.bfloat16),
        grid=grid,
        in_specs=[
            pl.BlockSpec((IN_CH, tile_n), lambda i: (0, i)),      # x tile (lane-dense)
            pl.BlockSpec((M, IN_CH), lambda i: (0, 0)),           # conv W (resident)
            pl.BlockSpec((M, 1), lambda i: (0, 0)),               # bn shift (resident)
            pl.BlockSpec((M, N_CLASSES), lambda i: (0, 0)),       # linear W^T (resident)
            pl.BlockSpec((1, N_CLASSES), lambda i: (0, 0)),       # linear b (resident)
        ],
        out_specs=pl.BlockSpec((tile_n, N_CLASSES), lambda i: (i, 0)),
        compiler_params=pltpu.CompilerParams(
            dimension_semantics=("parallel",)),
    )(x_cm, w1, bn_shift, w2t, b2)

    # Padded tail points produce garbage logits; never expose them downstream.
    return out[:n]                                                # (N, 20)


def init_params(key):
    k1, k2, k3, k4, k5, k6 = jax.random.split(key, 6)
    # SubmanifoldConvolution(3, m, 3, bias=False) -- center tap weight only.
    w1 = jax.random.normal(k1, (IN_CH, M), jnp.float32) * 0.1
    # BatchNormReLU(m): gamma, beta, running mean/var -> fused scale/shift.
    gamma = 1.0 + 0.05 * jax.random.normal(k2, (M,), jnp.float32)
    beta = 0.05 * jax.random.normal(k3, (M,), jnp.float32)
    run_mean = 0.1 * jax.random.normal(k4, (M,), jnp.float32)
    run_var = jnp.abs(1.0 + 0.1 * jax.random.normal(k5, (M,), jnp.float32))
    eps = 1e-5
    bn_scale = gamma / jnp.sqrt(run_var + eps)                    # (M,)
    bn_shift = beta - run_mean * bn_scale                         # (M,)
    # Fold BN scale into the conv weight (exact, done once offline).
    w1_scaled_t = jnp.transpose(w1 * bn_scale[None, :])           # (M, 3)
    # nn.Linear(m, 20)
    w2 = jax.random.normal(k6, (N_CLASSES, M), jnp.float32) * (1.0 / jnp.sqrt(M))
    b2 = jnp.zeros((N_CLASSES,), jnp.float32)
    return (w1_scaled_t.astype(jnp.bfloat16),          # (M, 3)    bf16 (MXU operand)
            bn_shift.reshape(M, 1),                    # (M, 1)    f32
            jnp.transpose(w2).astype(jnp.bfloat16),    # (M, 20)   bf16 (MXU operand)
            b2.reshape(1, N_CLASSES))                  # (1, 20)   f32


def reference_forward(x_f32, params):
    """Pure-JAX reference mirroring the kernel's numerics (bf16 casts included)."""
    w1, bn_shift, w2t, b2 = params
    xb = x_f32.astype(jnp.bfloat16).astype(jnp.float32)           # (N, 3)
    h = xb @ w1.astype(jnp.float32).T                             # (N, M)
    h = jnp.maximum(h + bn_shift.reshape(1, M), 0.0)
    hb = h.astype(jnp.bfloat16).astype(jnp.float32)
    return hb @ w2t.astype(jnp.float32) + b2.reshape(1, N_CLASSES)  # (N, 20)


if __name__ == "__main__":
    key = jax.random.PRNGKey(0)
    kx, kp = jax.random.split(key)

    N = 4096  # number of active sparse points (small test size)
    x = jax.random.normal(kx, (N, IN_CH), jnp.float32)
    params = init_params(kp)

    tile_n = pick_tile(N)                       # -> 2048: 2 parallel grid steps
    x_cm = prepare_point_features(x, tile_n)    # one-time layout prep

    out = model_forward(x_cm, N, params, tile_n=tile_n)
    out = jax.block_until_ready(out)

    ref = reference_forward(x, params)
    assert out.shape == (N, N_CLASSES)
    assert jnp.allclose(out.astype(jnp.float32), ref, atol=2e-2, rtol=2e-2)
    print("KERNEL_OK")
</pallas_src>

<mosaic_0001>
module attributes {stable_mosaic.version = 11 : i64} {
  func.func @_fused_kernel(%arg0: i32, %arg1: memref<3x2048xbf16, #tpu.memory_space<vmem>>, %arg2: memref<32x3xbf16, #tpu.memory_space<vmem>>, %arg3: memref<32x1xf32, #tpu.memory_space<vmem>>, %arg4: memref<32x20xbf16, #tpu.memory_space<vmem>>, %arg5: memref<1x20xf32, #tpu.memory_space<vmem>>, %arg6: memref<2048x20xbf16, #tpu.memory_space<vmem>>) attributes {dimension_semantics = [#tpu.dimension_semantics<parallel>], iteration_bounds = array<i64: 2>, scalar_prefetch = 0 : i64, scratch_operands = 0 : i64, tpu.core_type = #tpu.core_type<tc>, window_params = [{transform_indices = @transform_0, window_bounds = array<i64: 3, 2048>}, {pipeline_mode = #tpu.pipeline_mode<synchronous>, transform_indices = @transform_1, window_bounds = array<i64: 32, 3>}, {pipeline_mode = #tpu.pipeline_mode<synchronous>, transform_indices = @transform_2, window_bounds = array<i64: 32, 1>}, {pipeline_mode = #tpu.pipeline_mode<synchronous>, transform_indices = @transform_3, window_bounds = array<i64: 32, 20>}, {pipeline_mode = #tpu.pipeline_mode<synchronous>, transform_indices = @transform_4, window_bounds = array<i64: 1, 20>}, {transform_indices = @transform_5, window_bounds = array<i64: 2048, 20>}]} {
    %c0 = arith.constant 0 : index
    %c0_0 = arith.constant 0 : index
    %0 = vector.load %arg2[%c0, %c0_0] : memref<32x3xbf16, #tpu.memory_space<vmem>>, vector<32x3xbf16>
    %c0_1 = arith.constant 0 : index
    %c0_2 = arith.constant 0 : index
    %1 = vector.load %arg1[%c0_1, %c0_2] : memref<3x2048xbf16, #tpu.memory_space<vmem>>, vector<3x2048xbf16>
    %cst = arith.constant dense<0.000000e+00> : vector<32x2048xf32>
    %2 = tpu.matmul %0, %1, %cst {dimension_numbers = #tpu.dot_dimension_numbers<[1], [0], [0], [1], [0, 0, 1, 1], [], []>} : vector<32x3xbf16>, vector<3x2048xbf16>, vector<32x2048xf32> -> vector<32x2048xf32>
    %c0_3 = arith.constant 0 : index
    %c0_4 = arith.constant 0 : index
    %3 = vector.load %arg3[%c0_3, %c0_4] : memref<32x1xf32, #tpu.memory_space<vmem>>, vector<32x1xf32>
    %4 = vector.broadcast %3 : vector<32x1xf32> to vector<32x2048xf32>
    %5 = arith.addf %2, %4 : vector<32x2048xf32>
    %cst_5 = arith.constant 0.000000e+00 : f32
    %6 = vector.broadcast %cst_5 : f32 to vector<32x2048xf32>
    %7 = arith.maximumf %5, %6 : vector<32x2048xf32>
    %8 = tpu.transpose %7, [1, 0] : vector<32x2048xf32> -> vector<2048x32xf32>
    %9 = arith.truncf %8 : vector<2048x32xf32> to vector<2048x32xbf16>
    %c0_6 = arith.constant 0 : index
    %c0_7 = arith.constant 0 : index
    %10 = vector.load %arg4[%c0_6, %c0_7] : memref<32x20xbf16, #tpu.memory_space<vmem>>, vector<32x20xbf16>
    %cst_8 = arith.constant dense<0.000000e+00> : vector<2048x20xf32>
    %11 = tpu.matmul %9, %10, %cst_8 {dimension_numbers = #tpu.dot_dimension_numbers<[1], [0], [0], [1], [0, 0, 1, 1], [], []>} : vector<2048x32xbf16>, vector<32x20xbf16>, vector<2048x20xf32> -> vector<2048x20xf32>
    %c0_9 = arith.constant 0 : index
    %c0_10 = arith.constant 0 : index
    %12 = vector.load %arg5[%c0_9, %c0_10] : memref<1x20xf32, #tpu.memory_space<vmem>>, vector<1x20xf32>
    %13 = vector.broadcast %12 : vector<1x20xf32> to vector<2048x20xf32>
    %14 = arith.addf %11, %13 : vector<2048x20xf32>
    %15 = arith.truncf %14 : vector<2048x20xf32> to vector<2048x20xbf16>
    %c0_11 = arith.constant 0 : index
    %c0_12 = arith.constant 0 : index
    %16 = vector.load %arg6[%c0_11, %c0_12] : memref<2048x20xbf16, #tpu.memory_space<vmem>>, vector<2048x20xbf16>
    tpu.vector_store %arg6[%c0_11, %c0_12], %15 {strides = array<i32>} : memref<2048x20xbf16, #tpu.memory_space<vmem>>, vector<2048x20xbf16>,
    return
  }
  func.func @transform_0(%arg0: i32) -> (i32, i32) {
    %c0_i32 = arith.constant 0 : i32
    %c0_i32_0 = arith.constant 0 : i32
    return %c0_i32, %arg0 : i32, i32
  }
  func.func @transform_1(%arg0: i32) -> (i32, i32) {
    %c0_i32 = arith.constant 0 : i32
    %c0_i32_0 = arith.constant 0 : i32
    %c0_i32_1 = arith.constant 0 : i32
    return %c0_i32, %c0_i32_0 : i32, i32
  }
  func.func @transform_2(%arg0: i32) -> (i32, i32) {
    %c0_i32 = arith.constant 0 : i32
    %c0_i32_0 = arith.constant 0 : i32
    %c0_i32_1 = arith.constant 0 : i32
    return %c0_i32, %c0_i32_0 : i32, i32
  }
  func.func @transform_3(%arg0: i32) -> (i32, i32) {
    %c0_i32 = arith.constant 0 : i32
    %c0_i32_0 = arith.constant 0 : i32
    %c0_i32_1 = arith.constant 0 : i32
    return %c0_i32, %c0_i32_0 : i32, i32
  }
  func.func @transform_4(%arg0: i32) -> (i32, i32) {
    %c0_i32 = arith.constant 0 : i32
    %c0_i32_0 = arith.constant 0 : i32
    %c0_i32_1 = arith.constant 0 : i32
    return %c0_i32, %c0_i32_0 : i32, i32
  }
  func.func @transform_5(%arg0: i32) -> (i32, i32) {
    %c0_i32 = arith.constant 0 : i32
    %c0_i32_0 = arith.constant 0 : i32
    return %arg0, %c0_i32 : i32, i32
  }
}

</mosaic_0001>

<llo_original>
// kernel: tpu_custom_call.1
$region0: #{tpu_custom_call.1}
  #allocation0 [shape = 'u32[]', space=smem, size = 0x4, offset = 0x4, fixed_abs, tag = 'smem constant byte address 0x4 - core index']
  #allocation1 [shape = 'u32[144,128]{1,0:T(1,128)}', space=vmem, size = 0x12000, scoped, tag = 'internal scratch']
  %s0 = inlined_call_operand.vmem [shape: bf16[3,4096], index: 0, kind: input, shape index: {}]
  %s1 = inlined_call_operand.vmem [shape: bf16[32,3], index: 1, kind: input, shape index: {}]
  %s2 = inlined_call_operand.vmem [shape: f32[32,1], index: 2, kind: input, shape index: {}]
  %s3 = inlined_call_operand.vmem [shape: bf16[32,20], index: 3, kind: input, shape index: {}]
  %s4 = inlined_call_operand.vmem [shape: f32[1,20], index: 4, kind: input, shape index: {}]
  %s5 = inlined_call_operand.vmem [shape: bf16[4096,20], index: 5, kind: output, shape index: {}]
  %s6 = sld [smem:[#allocation0]]
  $region53: #{tpu_custom_call.1} parent=0
    _
  %s8 = ssub.s32 1, %s6
  %s9 = scalar_select 0, %s8, %s6
  loop: start=0, step=1, limit=4
  $region2: #{tpu_custom_call.1} parent=0 // loop_pre_header
    _
  $region3: #{tpu_custom_call.1} parent=0 // loop_header
    %s11 = sphi 0, %s15
    %p12 = scmp.ge.s32.totalorder %s11, 4
    %s21 = sphi 0, %s23
    %s24 = sphi 0, %s21
    %s25 = sphi 0, %s24
    %s41 = sphi 0, %s25
    %s45 = sphi 0, %s45
    %s47 = sphi 0, %s45
    %s48 = sphi 0, %s47
    %s62 = sphi 0, %s48
    %s66 = sphi 0, %s66
    %s68 = sphi 0, %s66
    %s69 = sphi 0, %s68
    %s83 = sphi 0, %s69
    %s87 = sphi 0, %s87
    %s89 = sphi 0, %s87
    %s90 = sphi 0, %s89
    %s104 = sphi 0, %s90
    %s108 = sphi 0, %s108
    %s110 = sphi 0, %s108
    %s111 = sphi 0, %s110
    %s125 = sphi 0, %s111
    %s131 = sphi 0, %s133
    %s134 = sphi 0, %s131
    %s135 = sphi 0, %s134
    %s151 = sphi 0, %s135
  $region4: #{tpu_custom_call.1} parent=0 // loop_header_branch
    %14 = sbr.rel (%p12) target = $region8
  $region5: #{tpu_custom_call.1} parent=0 // loop_body
    %s16 = ssub.s32 %s11, 1
    %s17 = ssub.s32 %s11, 2
    %s18 = sadd.s32 %s11, 1
    %s19 = ssub.s32 %s11, %s18
    %p20 = scmp.eq.s32.totalorder %s19, 0
    %s22 = sadd.s32 %s21, 1
    %s23 = scalar_select %p20, %s21, %s22
    %p26 = pneg %p20
    %p27 = scmp.eq.s32.totalorder %s11, 1
    %p28 = por %p26, %p27
    %p29 = scmp.ne.s32.totalorder %s21, %s24
    %p30 = scmp.eq.s32.totalorder %s11, 0
    %p31 = por %p29, %p30
    %p32 = scmp.ne.s32.totalorder %s21, %s24
    %p33 = scmp.eq.s32.totalorder %s16, 1
    %p34 = por %p32, %p33
    %p35 = scmp.ne.s32.totalorder %s24, %s25
    %p36 = scmp.eq.s32.totalorder %s16, 0
    %p37 = por %p35, %p36
    %p38 = scmp.ne.s32.totalorder %s24, %s25
    %p39 = scmp.eq.s32.totalorder %s17, 1
    %p40 = por %p38, %p39
    %p42 = scmp.ne.s32.totalorder %s25, %s41
    %p43 = scmp.eq.s32.totalorder %s17, 0
    %p44 = por %p42, %p43
    %s46 = sadd.s32 %s45, 1
    %p49 = scmp.eq.s32.totalorder %s11, 1
    %p50 = scmp.ne.s32.totalorder %s45, %s47
    %p51 = scmp.eq.s32.totalorder %s11, 0
    %p52 = por %p50, %p51
    %p53 = scmp.ne.s32.totalorder %s45, %s47
    %p54 = scmp.eq.s32.totalorder %s16, 1
    %p55 = por %p53, %p54
    %p56 = scmp.ne.s32.totalorder %s47, %s48
    %p57 = scmp.eq.s32.totalorder %s16, 0
    %p58 = por %p56, %p57
    %p59 = scmp.ne.s32.totalorder %s47, %s48
    %p60 = scmp.eq.s32.totalorder %s17, 1
    %p61 = por %p59, %p60
    %p63 = scmp.ne.s32.totalorder %s48, %s62
    %p64 = scmp.eq.s32.totalorder %s17, 0
    %p65 = por %p63, %p64
    %s67 = sadd.s32 %s66, 1
    %p70 = scmp.eq.s32.totalorder %s11, 1
    %p71 = scmp.ne.s32.totalorder %s66, %s68
    %p72 = scmp.eq.s32.totalorder %s11, 0
    %p73 = por %p71, %p72
    %p74 = scmp.ne.s32.totalorder %s66, %s68
    %p75 = scmp.eq.s32.totalorder %s16, 1
    %p76 = por %p74, %p75
    %p77 = scmp.ne.s32.totalorder %s68, %s69
    %p78 = scmp.eq.s32.totalorder %s16, 0
    %p79 = por %p77, %p78
    %p80 = scmp.ne.s32.totalorder %s68, %s69
    %p81 = scmp.eq.s32.totalorder %s17, 1
    %p82 = por %p80, %p81
    %p84 = scmp.ne.s32.totalorder %s69, %s83
    %p85 = scmp.eq.s32.totalorder %s17, 0
    %p86 = por %p84, %p85
    %s88 = sadd.s32 %s87, 1
    %p91 = scmp.eq.s32.totalorder %s11, 1
    %p92 = scmp.ne.s32.totalorder %s87, %s89
    %p93 = scmp.eq.s32.totalorder %s11, 0
    %p94 = por %p92, %p93
    %p95 = scmp.ne.s32.totalorder %s87, %s89
    %p96 = scmp.eq.s32.totalorder %s16, 1
    %p97 = por %p95, %p96
    %p98 = scmp.ne.s32.totalorder %s89, %s90
    %p99 = scmp.eq.s32.totalorder %s16, 0
    %p100 = por %p98, %p99
    %p101 = scmp.ne.s32.totalorder %s89, %s90
    %p102 = scmp.eq.s32.totalorder %s17, 1
    %p103 = por %p101, %p102
    %p105 = scmp.ne.s32.totalorder %s90, %s104
    %p106 = scmp.eq.s32.totalorder %s17, 0
    %p107 = por %p105, %p106
    %s109 = sadd.s32 %s108, 1
    %p112 = scmp.eq.s32.totalorder %s11, 1
    %p113 = scmp.ne.s32.totalorder %s108, %s110
    %p114 = scmp.eq.s32.totalorder %s11, 0
    %p115 = por %p113, %p114
    %p116 = scmp.ne.s32.totalorder %s108, %s110
    %p117 = scmp.eq.s32.totalorder %s16, 1
    %p118 = por %p116, %p117
    %p119 = scmp.ne.s32.totalorder %s110, %s111
    %p120 = scmp.eq.s32.totalorder %s16, 0
    %p121 = por %p119, %p120
    %p122 = scmp.ne.s32.totalorder %s110, %s111
    %p123 = scmp.eq.s32.totalorder %s17, 1
    %p124 = por %p122, %p123
    %p126 = scmp.ne.s32.totalorder %s111, %s125
    %p127 = scmp.eq.s32.totalorder %s17, 0
    %p128 = por %p126, %p127
    %s129 = ssub.s32 %s11, %s18
    %p130 = scmp.eq.s32.totalorder %s129, 0
    %s132 = sadd.s32 %s131, 1
    %s133 = scalar_select %p130, %s131, %s132
    %p136 = pneg %p130
    %p137 = scmp.eq.s32.totalorder %s11, 1
    %p138 = por %p136, %p137
    %p139 = scmp.ne.s32.totalorder %s131, %s134
    %p140 = scmp.eq.s32.totalorder %s11, 0
    %p141 = por %p139, %p140
    %p142 = scmp.ne.s32.totalorder %s131, %s134
    %p143 = scmp.eq.s32.totalorder %s16, 1
    %p144 = por %p142, %p143
    %p145 = scmp.ne.s32.totalorder %s134, %s135
    %p146 = scmp.eq.s32.totalorder %s16, 0
    %p147 = por %p145, %p146
    %p148 = scmp.ne.s32.totalorder %s134, %s135
    %p149 = scmp.eq.s32.totalorder %s17, 1
    %p150 = por %p148, %p149
    %p152 = scmp.ne.s32.totalorder %s135, %s151
    %p153 = scmp.eq.s32.totalorder %s17, 0
    %p154 = por %p152, %p153
    %p155 = scmp.le.s32.totalorder 1, %s11
    %p156 = scmp.lt.s32.totalorder %s11, 3
    %p157 = pnand %p155, %p156
    %p158 = pneg %p157
    // Predicated region
    $region9: #{tpu_custom_call.1} parent=5 // pred_check
      _
    $region10: #{tpu_custom_call.1} parent=5 // pred_check_branch
      %160 = sbr.rel (%p157) target = $region12
    $region11: #{tpu_custom_call.1} parent=5 // pred_region
      %s161 = ssub.s32 %s11, 1
      // Predicated region
      $region13: #{tpu_custom_call.1} parent=11 // pred_check
        %p162 = pneg %p58
      $region14: #{tpu_custom_call.1} parent=11 // pred_check_branch
        %164 = sbr.rel (%p162) target = $region16
      $region15: #{tpu_custom_call.1} parent=11 // pred_region
        _
      $region16: #{tpu_custom_call.1} parent=11 // pred_fallthru
        _
      // Predicated region
      $region17: #{tpu_custom_call.1} parent=11 // pred_check
        %p165 = pneg %p79
      $region18: #{tpu_custom_call.1} parent=11 // pred_check_branch
        %167 = sbr.rel (%p165) target = $region20
      $region19: #{tpu_custom_call.1} parent=11 // pred_region
        _
      $region20: #{tpu_custom_call.1} parent=11 // pred_fallthru
        _
      // Predicated region
      $region21: #{tpu_custom_call.1} parent=11 // pred_check
        %p168 = pneg %p100
      $region22: #{tpu_custom_call.1} parent=11 // pred_check_branch
        %170 = sbr.rel (%p168) target = $region24
      $region23: #{tpu_custom_call.1} parent=11 // pred_region
        _
      $region24: #{tpu_custom_call.1} parent=11 // pred_fallthru
        _
      // Predicated region
      $region25: #{tpu_custom_call.1} parent=11 // pred_check
        %p171 = pneg %p121
      $region26: #{tpu_custom_call.1} parent=11 // pred_check_branch
        %173 = sbr.rel (%p171) target = $region28
      $region27: #{tpu_custom_call.1} parent=11 // pred_region
        _
      $region28: #{tpu_custom_call.1} parent=11 // pred_fallthru
        _
    $region12: #{tpu_custom_call.1} parent=5 // pred_fallthru
      _
    %p174 = scmp.lt.s32.totalorder %s11, 2
    // Predicated region
    $region29: #{tpu_custom_call.1} parent=5 // pred_check
      %p175 = pneg %p174
    $region30: #{tpu_custom_call.1} parent=5 // pred_check_branch
      %177 = sbr.rel (%p175) target = $region32
    $region31: #{tpu_custom_call.1} parent=5 // pred_region
      // Predicated region
      $region33: #{tpu_custom_call.1} parent=31 // pred_check
        %p178 = pneg %p31
      $region34: #{tpu_custom_call.1} parent=31 // pred_check_branch
        %180 = sbr.rel (%p178) target = $region36
      $region35: #{tpu_custom_call.1} parent=31 // pred_region
        %s181 = smul.u32 16, %s11
        %p182 = scmp.lt.s32.totalorder %s181, 31
        %s183 = scalar_select %p182, %s181, 31
        %s184 = smul.addr %s183, 2
        %s185 = scalar_lea.vmem %s0, %s184
        %s186 = smul.u32 16, %s11
      $region36: #{tpu_custom_call.1} parent=31 // pred_fallthru
        _
    $region32: #{tpu_custom_call.1} parent=5 // pred_fallthru
      _
    %p187 = scmp.le.s32.totalorder 1, %s11
    %p188 = scmp.lt.s32.totalorder %s11, 3
    %p189 = pnand %p187, %p188
    %p190 = pneg %p189
    // Predicated region
    $region37: #{tpu_custom_call.1} parent=5 // pred_check
      _
    $region38: #{tpu_custom_call.1} parent=5 // pred_check_branch
      %192 = sbr.rel (%p189) target = $region40
    $region39: #{tpu_custom_call.1} parent=5 // pred_region
      %s193 = ssub.s32 %s11, 1
      %s194 = smul.u32 16, %s16
      %p195 = scmp.lt.s32.totalorder %s194, 31
      %s196 = scalar_select %p195, %s194, 31
      %s197 = smul.addr %s196, 2
      %s198 = scalar_lea.vmem %s0, %s197
      %p199 = pneg %p37
      %p200 = pneg %p34
      %p201 = pneg %p58
      %p202 = pneg %p55
      %p203 = pneg %p79
      %p204 = pneg %p76
      %p205 = pneg %p100
      %p206 = pneg %p97
      %p207 = pneg %p121
      %p208 = pneg %p118
      %p209 = pneg %p147
      %p210 = pneg %p144
      %s211 = smul.u32 256, %s16
      %p212 = scmp.lt.s32.totalorder %s211, 511
      %s213 = scalar_select %p212, %s211, 511
      %s214 = smul.addr %s213, 4
      %s215 = scalar_lea.vmem %s5, %s214
      %s216 = smul.u32 16, %s16
      %p217 = scmp.lt.s32.totalorder %s216, 31
      %s218 = scalar_select %p217, %s216, 31
      %s219 = smul.addr %s218, 2
      %s220 = scalar_lea.vmem %s0, %s219
      %s221 = smul.u32 16, %s16
      %s222 = smul.u32 256, %s16
      %p223 = scmp.lt.s32.totalorder %s222, 511
      %s224 = scalar_select %p223, %s222, 511
      %s225 = smul.addr %s224, 4
      %s226 = scalar_lea.vmem %s5, %s225
      %s227 = smul.u32 256, %s16
      %v229 = vld [vmem:[%s1] sm:$0xf]
      %v230 = vld [vmem:[%s1 + $0x4] sm:$0xf]
      %v231 = vld [vmem:[%s1 + $0x8] sm:$0xf]
      %v232 = vld [vmem:[%s1 + $0xc] sm:$0xf]
      %v233 = vld [vmem:[%s220] sm:$0xff]
      %v234 = vld [vmem:[%s220 + $0x8] sm:$0xff]
      %v235 = vld [vmem:[%s220 + $0x10] sm:$0xff]
      %v236 = vld [vmem:[%s220 + $0x18] sm:$0xff]
      %v237 = vld [vmem:[%s2] sm:$0xff]
      %v238 = vld [vmem:[%s2 + $0x8] sm:$0xff]
      %v239 = vld [vmem:[%s2 + $0x10] sm:$0xff]
      %v240 = vld [vmem:[%s2 + $0x18] sm:$0xff]
      %242 = vset.pattern.permute.xlu0 0
      %243 = vperm.xlu0 %242, %v237
      %v244 = vpop.permute.xlu0 %243
      %247 = vset.pattern.permute.xlu0 0
      %248 = vperm.xlu0 %247, %v238
      %v249 = vpop.permute.xlu0 %248
      %252 = vset.pattern.permute.xlu0 0
      %253 = vperm.xlu0 %252, %v239
      %v254 = vpop.permute.xlu0 %253
      %257 = vset.pattern.permute.xlu0 0
      %258 = vperm.xlu0 %257, %v240
      %v259 = vpop.permute.xlu0 %258
      %v265 = vunpack.c.l.b16 %v229
      %v266 = vunpack.c.l.b16 %v230
      %v267 = vunpack.c.l.b16 %v231
      %v268 = vunpack.c.l.b16 %v232
      %v269 = vpack.c.b16 %v266, %v265
      %v270 = vpack.c.b16 %v268, %v267
      %v275 = vcombine.high %v233, %v233
      %v277 = vunpack.c.l.s4 1983009808
      %v278 = vunpack.c.0.s8 %v277
      %v279 = vlaneseq
      %v280 = vshrl.u32 %v279, 7
      %v281 = vsub.s32 %v278, %v280
      %v282 = vrot.slane %v233, %v281
      %v284 = vunpack.c.l.s4 1983009808
      %v285 = vunpack.c.0.s8 %v284
      %v286 = vlaneseq
      %v287 = vshrl.u32 %v286, 7
      %v288 = vsub.s32 %v285, %v287
      %v289 = vrot.slane %v275, %v288
      %v290 = vcombine.high %v282, %v282
      %v291 = vcombine.high %v289, %v289
      %v292 = vcombine.high %v234, %v234
      %v294 = vunpack.c.l.s4 1983009808
      %v295 = vunpack.c.0.s8 %v294
      %v296 = vlaneseq
      %v297 = vshrl.u32 %v296, 7
      %v298 = vsub.s32 %v295, %v297
      %v299 = vrot.slane %v234, %v298
      %v301 = vunpack.c.l.s4 1983009808
      %v302 = vunpack.c.0.s8 %v301
      %v303 = vlaneseq
      %v304 = vshrl.u32 %v303, 7
      %v305 = vsub.s32 %v302, %v304
      %v306 = vrot.slane %v292, %v305
      %v307 = vcombine.high %v299, %v299
      %v308 = vcombine.high %v306, %v306
      %v309 = vcombine.high %v235, %v235
      %v311 = vunpack.c.l.s4 1983009808
      %v312 = vunpack.c.0.s8 %v311
      %v313 = vlaneseq
      %v314 = vshrl.u32 %v313, 7
      %v315 = vsub.s32 %v312, %v314
      %v316 = vrot.slane %v235, %v315
      %v318 = vunpack.c.l.s4 1983009808
      %v319 = vunpack.c.0.s8 %v318
      %v320 = vlaneseq
      %v321 = vshrl.u32 %v320, 7
      %v322 = vsub.s32 %v319, %v321
      %v323 = vrot.slane %v309, %v322
      %v324 = vcombine.high %v316, %v316
      %v325 = vcombine.high %v323, %v323
      %v326 = vcombine.high %v236, %v236
      %v328 = vunpack.c.l.s4 1983009808
      %v329 = vunpack.c.0.s8 %v328
      %v330 = vlaneseq
      %v331 = vshrl.u32 %v330, 7
      %v332 = vsub.s32 %v329, %v331
      %v333 = vrot.slane %v236, %v332
      %v335 = vunpack.c.l.s4 1983009808
      %v336 = vunpack.c.0.s8 %v335
      %v337 = vlaneseq
      %v338 = vshrl.u32 %v337, 7
      %v339 = vsub.s32 %v336, %v338
      %v340 = vrot.slane %v326, %v339
      %v341 = vcombine.high %v333, %v333
      %v342 = vcombine.high %v340, %v340
      %vm343 = vcmask 23552
      %v345 = vsel %vm343, %v269, 0
      %v348 = vsel %vm343, %v270, 0
      %vm350 = vcmask 1040384
      %vm351 = vcmask 1041408
      %v352 = vsel %vm350, 4294967295, 65535
      %v353 = vsel %vm351, %v352, 0
      %v355 = vand.u32 %v282, %v353
      %v358 = vand.u32 %v290, %v353
      %v361 = vand.u32 %v289, %v353
      %v364 = vand.u32 %v291, %v353
      %v367 = vand.u32 %v299, %v353
      %v370 = vand.u32 %v307, %v353
      %v373 = vand.u32 %v306, %v353
      %v376 = vand.u32 %v308, %v353
      %v379 = vand.u32 %v316, %v353
      %v382 = vand.u32 %v324, %v353
      %v385 = vand.u32 %v323, %v353
      %v388 = vand.u32 %v325, %v353
      %v391 = vand.u32 %v333, %v353
      %v394 = vand.u32 %v341, %v353
      %v397 = vand.u32 %v340, %v353
      %v400 = vand.u32 %v342, %v353
      %402 = vmatprep.subr.bf16.mxu0 0
      %403 = vmatpush1.bf16.msra.mxu0 0
      %404 = vmatprep.subr.bf16.mxu0 0
      %405 = vmatpush1.bf16.msra.mxu0 0
      %406 = vmatprep.subr.bf16.mxu0 0
      %407 = vmatpush1.bf16.msra.mxu0 0
      %408 = vmatprep.subr.bf16.mxu0 0
      %409 = vmatpush1.bf16.msra.mxu0 0
      %410 = vmatprep.subr.bf16.mxu0 0
      %411 = vmatpush1.bf16.msra.mxu0 0
      %412 = vmatprep.subr.bf16.mxu0 0
      %413 = vmatpush1.bf16.msra.mxu0 0
      %414 = vmatprep.subr.bf16.mxu0 0
      %415 = vmatpush1.bf16.msra.mxu0 0
      %416 = vmatprep.subr.bf16.mxu0 %v358
      %417 = vmatpush1.bf16.msra.mxu0 %v355
      %418 = vmatprep.subr.bf16.mxu0 0
      %419 = vmatpush2.bf16.msra.mxu0 0
      %420 = vmatprep.subr.bf16.mxu0 0
      %421 = vmatpush2.bf16.msra.mxu0 0
      %422 = vmatprep.subr.bf16.mxu0 0
      %423 = vmatpush2.bf16.msra.mxu0 0
      %424 = vmatprep.subr.bf16.mxu0 0
      %425 = vmatpush2.bf16.msra.mxu0 0
      %426 = vmatprep.subr.bf16.mxu0 0
      %427 = vmatpush2.bf16.msra.mxu0 0
      %428 = vmatprep.subr.bf16.mxu0 0
      %429 = vmatpush2.bf16.msra.mxu0 0
      %430 = vmatprep.subr.bf16.mxu0 0
      %431 = vmatpush2.bf16.msra.mxu0 0
      %432 = vmatprep.subr.bf16.mxu0 0
      %433 = vmatpush2.bf16.msra.mxu0 0
      %434 = vmatprep.mubr.bf16.mxu0 0
      %435 = vmatmul.mubr.bf16.gmra.mxu0 %v345
      %v436 = vpop.f32.mrf.mxu0
      %v437 = vadd.f32 %v244, %v436
      %v438 = vpop.f32.mrf.mxu0
      %v439 = vadd.f32 %v244, %v438
      %v440 = vpop.f32.mrf.mxu0
      %v441 = vadd.f32 %v249, %v440
      %v442 = vpop.f32.mrf.mxu0
      %v443 = vadd.f32 %v249, %v442
      %444 = vmatprep.mubr.bf16.mxu0 0
      %445 = vmatmul.mubr.bf16.gmra.mxu0 %v348
      %v446 = vpop.f32.mrf.mxu0
      %v447 = vadd.f32 %v254, %v446
      %v448 = vpop.f32.mrf.mxu0
      %v449 = vadd.f32 %v254, %v448
      %v450 = vpop.f32.mrf.mxu0
      %v451 = vadd.f32 %v259, %v450
      %v452 = vpop.f32.mrf.mxu0
      %v453 = vadd.f32 %v259, %v452
      %454 = vdwg.mxu0
      %455 = vmatprep.subr.bf16.mxu0 0
      %456 = vmatpush1.bf16.msra.mxu0 0
      %457 = vmatprep.subr.bf16.mxu0 0
      %458 = vmatpush1.bf16.msra.mxu0 0
      %459 = vmatprep.subr.bf16.mxu0 0
      %460 = vmatpush1.bf16.msra.mxu0 0
      %461 = vmatprep.subr.bf16.mxu0 0
      %462 = vmatpush1.bf16.msra.mxu0 0
      %463 = vmatprep.subr.bf16.mxu0 0
      %464 = vmatpush1.bf16.msra.mxu0 0
      %465 = vmatprep.subr.bf16.mxu0 0
      %466 = vmatpush1.bf16.msra.mxu0 0
      %467 = vmatprep.subr.bf16.mxu0 0
      %468 = vmatpush1.bf16.msra.mxu0 0
      %469 = vmatprep.subr.bf16.mxu0 %v364
      %470 = vmatpush1.bf16.msra.mxu0 %v361
      %471 = vmatprep.subr.bf16.mxu0 0
      %472 = vmatpush2.bf16.msra.mxu0 0
      %473 = vmatprep.subr.bf16.mxu0 0
      %474 = vmatpush2.bf16.msra.mxu0 0
      %475 = vmatprep.subr.bf16.mxu0 0
      %476 = vmatpush2.bf16.msra.mxu0 0
      %477 = vmatprep.subr.bf16.mxu0 0
      %478 = vmatpush2.bf16.msra.mxu0 0
      %479 = vmatprep.subr.bf16.mxu0 0
      %480 = vmatpush2.bf16.msra.mxu0 0
      %481 = vmatprep.subr.bf16.mxu0 0
      %482 = vmatpush2.bf16.msra.mxu0 0
      %483 = vmatprep.subr.bf16.mxu0 0
      %484 = vmatpush2.bf16.msra.mxu0 0
      %485 = vmatprep.subr.bf16.mxu0 0
      %486 = vmatpush2.bf16.msra.mxu0 0
      %487 = vmatprep.mubr.bf16.mxu0 0
      %488 = vmatmul.mubr.bf16.gmra.mxu0 %v345
      %v489 = vpop.f32.mrf.mxu0
      %v490 = vadd.f32 %v244, %v489
      %v491 = vpop.f32.mrf.mxu0
      %v492 = vadd.f32 %v244, %v491
      %v493 = vpop.f32.mrf.mxu0
      %v494 = vadd.f32 %v249, %v493
      %v495 = vpop.f32.mrf.mxu0
      %v496 = vadd.f32 %v249, %v495
      %497 = vmatprep.mubr.bf16.mxu0 0
      %498 = vmatmul.mubr.bf16.gmra.mxu0 %v348
      %v499 = vpop.f32.mrf.mxu0
      %v500 = vadd.f32 %v254, %v499
      %v501 = vpop.f32.mrf.mxu0
      %v502 = vadd.f32 %v254, %v501
      %v503 = vpop.f32.mrf.mxu0
      %v504 = vadd.f32 %v259, %v503
      %v505 = vpop.f32.mrf.mxu0
      %v506 = vadd.f32 %v259, %v505
      %507 = vdwg.mxu0
      %508 = vmatprep.subr.bf16.mxu0 0
      %509 = vmatpush1.bf16.msra.mxu0 0
      %510 = vmatprep.subr.bf16.mxu0 0
      %511 = vmatpush1.bf16.msra.mxu0 0
      %512 = vmatprep.subr.bf16.mxu0 0
      %513 = vmatpush1.bf16.msra.mxu0 0
      %514 = vmatprep.subr.bf16.mxu0 0
      %515 = vmatpush1.bf16.msra.mxu0 0
      %516 = vmatprep.subr.bf16.mxu0 0
      %517 = vmatpush1.bf16.msra.mxu0 0
      %518 = vmatprep.subr.bf16.mxu0 0
      %519 = vmatpush1.bf16.msra.mxu0 0
      %520 = vmatprep.subr.bf16.mxu0 0
      %521 = vmatpush1.bf16.msra.mxu0 0
      %522 = vmatprep.subr.bf16.mxu0 %v370
      %523 = vmatpush1.bf16.msra.mxu0 %v367
      %524 = vmatprep.subr.bf16.mxu0 0
      %525 = vmatpush2.bf16.msra.mxu0 0
      %526 = vmatprep.subr.bf16.mxu0 0
      %527 = vmatpush2.bf16.msra.mxu0 0
      %528 = vmatprep.subr.bf16.mxu0 0
      %529 = vmatpush2.bf16.msra.mxu0 0
      %530 = vmatprep.subr.bf16.mxu0 0
      %531 = vmatpush2.bf16.msra.mxu0 0
      %532 = vmatprep.subr.bf16.mxu0 0
      %533 = vmatpush2.bf16.msra.mxu0 0
      %534 = vmatprep.subr.bf16.mxu0 0
      %535 = vmatpush2.bf16.msra.mxu0 0
      %536 = vmatprep.subr.bf16.mxu0 0
      %537 = vmatpush2.bf16.msra.mxu0 0
      %538 = vmatprep.subr.bf16.mxu0 0
      %539 = vmatpush2.bf16.msra.mxu0 0
      %540 = vmatprep.mubr.bf16.mxu0 0
      %541 = vmatmul.mubr.bf16.gmra.mxu0 %v345
      %v542 = vpop.f32.mrf.mxu0
      %v543 = vadd.f32 %v244, %v542
      %v544 = vpop.f32.mrf.mxu0
      %v545 = vadd.f32 %v244, %v544
      %v546 = vpop.f32.mrf.mxu0
      %v547 = vadd.f32 %v249, %v546
      %v548 = vpop.f32.mrf.mxu0
      %v549 = vadd.f32 %v249, %v548
      %550 = vmatprep.mubr.bf16.mxu0 0
      %551 = vmatmul.mubr.bf16.gmra.mxu0 %v348
      %v552 = vpop.f32.mrf.mxu0
      %v553 = vadd.f32 %v254, %v552
      %v554 = vpop.f32.mrf.mxu0
      %v555 = vadd.f32 %v254, %v554
      %v556 = vpop.f32.mrf.mxu0
      %v557 = vadd.f32 %v259, %v556
      %v558 = vpop.f32.mrf.mxu0
      %v559 = vadd.f32 %v259, %v558
      %560 = vdwg.mxu0
      %561 = vmatprep.subr.bf16.mxu0 0
      %562 = vmatpush1.bf16.msra.mxu0 0
      %563 = vmatprep.subr.bf16.mxu0 0
      %564 = vmatpush1.bf16.msra.mxu0 0
      %565 = vmatprep.subr.bf16.mxu0 0
      %566 = vmatpush1.bf16.msra.mxu0 0
      %567 = vmatprep.subr.bf16.mxu0 0
      %568 = vmatpush1.bf16.msra.mxu0 0
      %569 = vmatprep.subr.bf16.mxu0 0
      %570 = vmatpush1.bf16.msra.mxu0 0
      %571 = vmatprep.subr.bf16.mxu0 0
      %572 = vmatpush1.bf16.msra.mxu0 0
      %573 = vmatprep.subr.bf16.mxu0 0
      %574 = vmatpush1.bf16.msra.mxu0 0
      %575 = vmatprep.subr.bf16.mxu0 %v376
      %576 = vmatpush1.bf16.msra.mxu0 %v373
      %577 = vmatprep.subr.bf16.mxu0 0
      %578 = vmatpush2.bf16.msra.mxu0 0
      %579 = vmatprep.subr.bf16.mxu0 0
      %580 = vmatpush2.bf16.msra.mxu0 0
      %581 = vmatprep.subr.bf16.mxu0 0
      %582 = vmatpush2.bf16.msra.mxu0 0
      %583 = vmatprep.subr.bf16.mxu0 0
      %584 = vmatpush2.bf16.msra.mxu0 0
      %585 = vmatprep.subr.bf16.mxu0 0
      %586 = vmatpush2.bf16.msra.mxu0 0
      %587 = vmatprep.subr.bf16.mxu0 0
      %588 = vmatpush2.bf16.msra.mxu0 0
      %589 = vmatprep.subr.bf16.mxu0 0
      %590 = vmatpush2.bf16.msra.mxu0 0
      %591 = vmatprep.subr.bf16.mxu0 0
      %592 = vmatpush2.bf16.msra.mxu0 0
      %593 = vmatprep.mubr.bf16.mxu0 0
      %594 = vmatmul.mubr.bf16.gmra.mxu0 %v345
      %v595 = vpop.f32.mrf.mxu0
      %v596 = vadd.f32 %v244, %v595
      %v597 = vpop.f32.mrf.mxu0
      %v598 = vadd.f32 %v244, %v597
      %v599 = vpop.f32.mrf.mxu0
      %v600 = vadd.f32 %v249, %v599
      %v601 = vpop.f32.mrf.mxu0
      %v602 = vadd.f32 %v249, %v601
      %603 = vmatprep.mubr.bf16.mxu0 0
      %604 = vmatmul.mubr.bf16.gmra.mxu0 %v348
      %v605 = vpop.f32.mrf.mxu0
      %v606 = vadd.f32 %v254, %v605
      %v607 = vpop.f32.mrf.mxu0
      %v608 = vadd.f32 %v254, %v607
      %v609 = vpop.f32.mrf.mxu0
      %v610 = vadd.f32 %v259, %v609
      %v611 = vpop.f32.mrf.mxu0
      %v612 = vadd.f32 %v259, %v611
      %613 = vdwg.mxu0
      %614 = vmatprep.subr.bf16.mxu0 0
      %615 = vmatpush1.bf16.msra.mxu0 0
      %616 = vmatprep.subr.bf16.mxu0 0
      %617 = vmatpush1.bf16.msra.mxu0 0
      %618 = vmatprep.subr.bf16.mxu0 0
      %619 = vmatpush1.bf16.msra.mxu0 0
      %620 = vmatprep.subr.bf16.mxu0 0
      %621 = vmatpush1.bf16.msra.mxu0 0
      %622 = vmatprep.subr.bf16.mxu0 0
      %623 = vmatpush1.bf16.msra.mxu0 0
      %624 = vmatprep.subr.bf16.mxu0 0
      %625 = vmatpush1.bf16.msra.mxu0 0
      %626 = vmatprep.subr.bf16.mxu0 0
      %627 = vmatpush1.bf16.msra.mxu0 0
      %628 = vmatprep.subr.bf16.mxu0 %v382
      %629 = vmatpush1.bf16.msra.mxu0 %v379
      %630 = vmatprep.subr.bf16.mxu0 0
      %631 = vmatpush2.bf16.msra.mxu0 0
      %632 = vmatprep.subr.bf16.mxu0 0
      %633 = vmatpush2.bf16.msra.mxu0 0
      %634 = vmatprep.subr.bf16.mxu0 0
      %635 = vmatpush2.bf16.msra.mxu0 0
      %636 = vmatprep.subr.bf16.mxu0 0
      %637 = vmatpush2.bf16.msra.mxu0 0
      %638 = vmatprep.subr.bf16.mxu0 0
      %639 = vmatpush2.bf16.msra.mxu0 0
      %640 = vmatprep.subr.bf16.mxu0 0
      %641 = vmatpush2.bf16.msra.mxu0 0
      %642 = vmatprep.subr.bf16.mxu0 0
      %643 = vmatpush2.bf16.msra.mxu0 0
      %644 = vmatprep.subr.bf16.mxu0 0
      %645 = vmatpush2.bf16.msra.mxu0 0
      %646 = vmatprep.mubr.bf16.mxu0 0
      %647 = vmatmul.mubr.bf16.gmra.mxu0 %v345
      %v648 = vpop.f32.mrf.mxu0
      %v649 = vadd.f32 %v244, %v648
      %v650 = vpop.f32.mrf.mxu0
      %v651 = vadd.f32 %v244, %v650
      %v652 = vpop.f32.mrf.mxu0
      %v653 = vadd.f32 %v249, %v652
      %v654 = vpop.f32.mrf.mxu0
      %v655 = vadd.f32 %v249, %v654
      %656 = vmatprep.mubr.bf16.mxu0 0
      %657 = vmatmul.mubr.bf16.gmra.mxu0 %v348
      %v658 = vpop.f32.mrf.mxu0
      %v659 = vadd.f32 %v254, %v658
      %v660 = vpop.f32.mrf.mxu0
      %v661 = vadd.f32 %v254, %v660
      %v662 = vpop.f32.mrf.mxu0
      %v663 = vadd.f32 %v259, %v662
      %v664 = vpop.f32.mrf.mxu0
      %v665 = vadd.f32 %v259, %v664
      %666 = vdwg.mxu0
      %667 = vmatprep.subr.bf16.mxu0 0
      %668 = vmatpush1.bf16.msra.mxu0 0
      %669 = vmatprep.subr.bf16.mxu0 0
      %670 = vmatpush1.bf16.msra.mxu0 0
      %671 = vmatprep.subr.bf16.mxu0 0
      %672 = vmatpush1.bf16.msra.mxu0 0
      %673 = vmatprep.subr.bf16.mxu0 0
      %674 = vmatpush1.bf16.msra.mxu0 0
      %675 = vmatprep.subr.bf16.mxu0 0
      %676 = vmatpush1.bf16.msra.mxu0 0
      %677 = vmatprep.subr.bf16.mxu0 0
      %678 = vmatpush1.bf16.msra.mxu0 0
      %679 = vmatprep.subr.bf16.mxu0 0
      %680 = vmatpush1.bf16.msra.mxu0 0
      %681 = vmatprep.subr.bf16.mxu0 %v388
      %682 = vmatpush1.bf16.msra.mxu0 %v385
      %683 = vmatprep.subr.bf16.mxu0 0
      %684 = vmatpush2.bf16.msra.mxu0 0
      %685 = vmatprep.subr.bf16.mxu0 0
      %686 = vmatpush2.bf16.msra.mxu0 0
      %687 = vmatprep.subr.bf16.mxu0 0
      %688 = vmatpush2.bf16.msra.mxu0 0
      %689 = vmatprep.subr.bf16.mxu0 0
      %690 = vmatpush2.bf16.msra.mxu0 0
      %691 = vmatprep.subr.bf16.mxu0 0
      %692 = vmatpush2.bf16.msra.mxu0 0
      %693 = vmatprep.subr.bf16.mxu0 0
      %694 = vmatpush2.bf16.msra.mxu0 0
      %695 = vmatprep.subr.bf16.mxu0 0
      %696 = vmatpush2.bf16.msra.mxu0 0
      %697 = vmatprep.subr.bf16.mxu0 0
      %698 = vmatpush2.bf16.msra.mxu0 0
      %699 = vmatprep.mubr.bf16.mxu0 0
      %700 = vmatmul.mubr.bf16.gmra.mxu0 %v345
      %v701 = vpop.f32.mrf.mxu0
      %v702 = vadd.f32 %v244, %v701
      %v703 = vpop.f32.mrf.mxu0
      %v704 = vadd.f32 %v244, %v703
      %v705 = vpop.f32.mrf.mxu0
      %v706 = vadd.f32 %v249, %v705
      %v707 = vpop.f32.mrf.mxu0
      %v708 = vadd.f32 %v249, %v707
      %709 = vmatprep.mubr.bf16.mxu0 0
      %710 = vmatmul.mubr.bf16.gmra.mxu0 %v348
      %v711 = vpop.f32.mrf.mxu0
      %v712 = vadd.f32 %v254, %v711
      %v713 = vpop.f32.mrf.mxu0
      %v714 = vadd.f32 %v254, %v713
      %v715 = vpop.f32.mrf.mxu0
      %v716 = vadd.f32 %v259, %v715
      %v717 = vpop.f32.mrf.mxu0
      %v718 = vadd.f32 %v259, %v717
      %719 = vdwg.mxu0
      %720 = vmatprep.subr.bf16.mxu0 0
      %721 = vmatpush1.bf16.msra.mxu0 0
      %722 = vmatprep.subr.bf16.mxu0 0
      %723 = vmatpush1.bf16.msra.mxu0 0
      %724 = vmatprep.subr.bf16.mxu0 0
      %725 = vmatpush1.bf16.msra.mxu0 0
      %726 = vmatprep.subr.bf16.mxu0 0
      %727 = vmatpush1.bf16.msra.mxu0 0
      %728 = vmatprep.subr.bf16.mxu0 0
      %729 = vmatpush1.bf16.msra.mxu0 0
      %730 = vmatprep.subr.bf16.mxu0 0
      %731 = vmatpush1.bf16.msra.mxu0 0
      %732 = vmatprep.subr.bf16.mxu0 0
      %733 = vmatpush1.bf16.msra.mxu0 0
      %734 = vmatprep.subr.bf16.mxu0 %v394
      %735 = vmatpush1.bf16.msra.mxu0 %v391
      %736 = vmatprep.subr.bf16.mxu0 0
      %737 = vmatpush2.bf16.msra.mxu0 0
      %738 = vmatprep.subr.bf16.mxu0 0
      %739 = vmatpush2.bf16.msra.mxu0 0
      %740 = vmatprep.subr.bf16.mxu0 0
      %741 = vmatpush2.bf16.msra.mxu0 0
      %742 = vmatprep.subr.bf16.mxu0 0
      %743 = vmatpush2.bf16.msra.mxu0 0
      %744 = vmatprep.subr.bf16.mxu0 0
      %745 = vmatpush2.bf16.msra.mxu0 0
      %746 = vmatprep.subr.bf16.mxu0 0
      %747 = vmatpush2.bf16.msra.mxu0 0
      %748 = vmatprep.subr.bf16.mxu0 0
      %749 = vmatpush2.bf16.msra.mxu0 0
      %750 = vmatprep.subr.bf16.mxu0 0
      %751 = vmatpush2.bf16.msra.mxu0 0
      %752 = vmatprep.mubr.bf16.mxu0 0
      %753 = vmatmul.mubr.bf16.gmra.mxu0 %v345
      %v754 = vpop.f32.mrf.mxu0
      %v755 = vadd.f32 %v244, %v754
      %v756 = vpop.f32.mrf.mxu0
      %v757 = vadd.f32 %v244, %v756
      %v758 = vpop.f32.mrf.mxu0
      %v759 = vadd.f32 %v249, %v758
      %v760 = vpop.f32.mrf.mxu0
      %v761 = vadd.f32 %v249, %v760
      %762 = vmatprep.mubr.bf16.mxu0 0
      %763 = vmatmul.mubr.bf16.gmra.mxu0 %v348
      %v764 = vpop.f32.mrf.mxu0
      %v765 = vadd.f32 %v254, %v764
      %v766 = vpop.f32.mrf.mxu0
      %v767 = vadd.f32 %v254, %v766
      %v768 = vpop.f32.mrf.mxu0
      %v769 = vadd.f32 %v259, %v768
      %v770 = vpop.f32.mrf.mxu0
      %v771 = vadd.f32 %v259, %v770
      %772 = vdwg.mxu0
      %773 = vmatprep.subr.bf16.mxu0 0
      %774 = vmatpush1.bf16.msra.mxu0 0
      %775 = vmatprep.subr.bf16.mxu0 0
      %776 = vmatpush1.bf16.msra.mxu0 0
      %777 = vmatprep.subr.bf16.mxu0 0
      %778 = vmatpush1.bf16.msra.mxu0 0
      %779 = vmatprep.subr.bf16.mxu0 0
      %780 = vmatpush1.bf16.msra.mxu0 0
      %781 = vmatprep.subr.bf16.mxu0 0
      %782 = vmatpush1.bf16.msra.mxu0 0
      %783 = vmatprep.subr.bf16.mxu0 0
      %784 = vmatpush1.bf16.msra.mxu0 0
      %785 = vmatprep.subr.bf16.mxu0 0
      %786 = vmatpush1.bf16.msra.mxu0 0
      %787 = vmatprep.subr.bf16.mxu0 %v400
      %788 = vmatpush1.bf16.msra.mxu0 %v397
      %789 = vmatprep.subr.bf16.mxu0 0
      %790 = vmatpush2.bf16.msra.mxu0 0
      %791 = vmatprep.subr.bf16.mxu0 0
      %792 = vmatpush2.bf16.msra.mxu0 0
      %793 = vmatprep.subr.bf16.mxu0 0
      %794 = vmatpush2.bf16.msra.mxu0 0
      %795 = vmatprep.subr.bf16.mxu0 0
      %796 = vmatpush2.bf16.msra.mxu0 0
      %797 = vmatprep.subr.bf16.mxu0 0
      %798 = vmatpush2.bf16.msra.mxu0 0
      %799 = vmatprep.subr.bf16.mxu0 0
      %800 = vmatpush2.bf16.msra.mxu0 0
      %801 = vmatprep.subr.bf16.mxu0 0
      %802 = vmatpush2.bf16.msra.mxu0 0
      %803 = vmatprep.subr.bf16.mxu0 0
      %804 = vmatpush2.bf16.msra.mxu0 0
      %805 = vmatprep.mubr.bf16.mxu0 0
      %806 = vmatmul.mubr.bf16.gmra.mxu0 %v345
      %v807 = vpop.f32.mrf.mxu0
      %v808 = vadd.f32 %v244, %v807
      %v809 = vpop.f32.mrf.mxu0
      %v810 = vadd.f32 %v244, %v809
      %v811 = vpop.f32.mrf.mxu0
      %v812 = vadd.f32 %v249, %v811
      %v813 = vpop.f32.mrf.mxu0
      %v814 = vadd.f32 %v249, %v813
      %815 = vmatprep.mubr.bf16.mxu0 0
      %816 = vmatmul.mubr.bf16.gmra.mxu0 %v348
      %v817 = vpop.f32.mrf.mxu0
      %v818 = vadd.f32 %v254, %v817
      %v819 = vpop.f32.mrf.mxu0
      %v820 = vadd.f32 %v254, %v819
      %v821 = vpop.f32.mrf.mxu0
      %v822 = vadd.f32 %v259, %v821
      %v823 = vpop.f32.mrf.mxu0
      %v824 = vadd.f32 %v259, %v823
      %825 = vdwg.mxu0
      %v826 = vmax.f32 %v437, 0.0
      %v827 = vmax.f32 %v439, 0.0
      %v828 = vmax.f32 %v490, 0.0
      %v829 = vmax.f32 %v492, 0.0
      %v830 = vmax.f32 %v543, 0.0
      %v831 = vmax.f32 %v545, 0.0
      %v832 = vmax.f32 %v596, 0.0
      %v833 = vmax.f32 %v598, 0.0
      %v834 = vmax.f32 %v649, 0.0
      %v835 = vmax.f32 %v651, 0.0
      %v836 = vmax.f32 %v702, 0.0
      %v837 = vmax.f32 %v704, 0.0
      %v838 = vmax.f32 %v755, 0.0
      %v839 = vmax.f32 %v757, 0.0
      %v840 = vmax.f32 %v808, 0.0
      %v841 = vmax.f32 %v810, 0.0
      %v842 = vmax.f32 %v441, 0.0
      %v843 = vmax.f32 %v443, 0.0
      %v844 = vmax.f32 %v494, 0.0
      %v845 = vmax.f32 %v496, 0.0
      %v846 = vmax.f32 %v547, 0.0
      %v847 = vmax.f32 %v549, 0.0
      %v848 = vmax.f32 %v600, 0.0
      %v849 = vmax.f32 %v602, 0.0
      %v850 = vmax.f32 %v653, 0.0
      %v851 = vmax.f32 %v655, 0.0
      %v852 = vmax.f32 %v706, 0.0
      %v853 = vmax.f32 %v708, 0.0
      %v854 = vmax.f32 %v759, 0.0
      %v855 = vmax.f32 %v761, 0.0
      %v856 = vmax.f32 %v812, 0.0
      %v857 = vmax.f32 %v814, 0.0
      %v858 = vmax.f32 %v447, 0.0
      %v859 = vmax.f32 %v449, 0.0
      %v860 = vmax.f32 %v500, 0.0
      %v861 = vmax.f32 %v502, 0.0
      %v862 = vmax.f32 %v553, 0.0
      %v863 = vmax.f32 %v555, 0.0
      %v864 = vmax.f32 %v606, 0.0
      %v865 = vmax.f32 %v608, 0.0
      %v866 = vmax.f32 %v659, 0.0
      %v867 = vmax.f32 %v661, 0.0
      %v868 = vmax.f32 %v712, 0.0
      %v869 = vmax.f32 %v714, 0.0
      %v870 = vmax.f32 %v765, 0.0
      %v871 = vmax.f32 %v767, 0.0
      %v872 = vmax.f32 %v818, 0.0
      %v873 = vmax.f32 %v820, 0.0
      %v874 = vmax.f32 %v451, 0.0
      %v875 = vmax.f32 %v453, 0.0
      %v876 = vmax.f32 %v504, 0.0
      %v877 = vmax.f32 %v506, 0.0
      %v878 = vmax.f32 %v557, 0.0
      %v879 = vmax.f32 %v559, 0.0
      %v880 = vmax.f32 %v610, 0.0
      %v881 = vmax.f32 %v612, 0.0
      %v882 = vmax.f32 %v663, 0.0
      %v883 = vmax.f32 %v665, 0.0
      %v884 = vmax.f32 %v716, 0.0
      %v885 = vmax.f32 %v718, 0.0
      %v886 = vmax.f32 %v769, 0.0
      %v887 = vmax.f32 %v771, 0.0
      %v888 = vmax.f32 %v822, 0.0
      %v889 = vmax.f32 %v824, 0.0
      %890 = vxpose.xlu0.b32.start [1/16] %v826, 128
      %891 = vxpose.xlu0.b32.cont [2/16] %v842, 128
      %892 = vxpose.xlu0.b32.cont [3/16] %v858, 128
      %893 = vxpose.xlu0.b32.cont [4/16] %v874, 128
      %894 = vxpose.xlu0.b32.cont [5/16] 0.0, 128
      %895 = vxpose.xlu0.b32.cont [6/16] 0.0, 128
      %896 = vxpose.xlu0.b32.cont [7/16] 0.0, 128
      %897 = vxpose.xlu0.b32.cont [8/16] 0.0, 128
      %898 = vxpose.xlu0.b32.cont [9/16] 0.0, 128
      %899 = vxpose.xlu0.b32.cont [10/16] 0.0, 128
      %900 = vxpose.xlu0.b32.cont [11/16] 0.0, 128
      %901 = vxpose.xlu0.b32.cont [12/16] 0.0, 128
      %902 = vxpose.xlu0.b32.cont [13/16] 0.0, 128
      %903 = vxpose.xlu0.b32.cont [14/16] 0.0, 128
      %904 = vxpose.xlu0.b32.cont [15/16] 0.0, 128
      %905 = vxpose.xlu0.b32.end [16/16] 0.0, 128
      %v906 = vpop.trf.xlu0
      %v907 = vpop.trf.xlu0
      %v908 = vpop.trf.xlu0
      %v909 = vpop.trf.xlu0
      %v910 = vpop.trf.xlu0
      %v911 = vpop.trf.xlu0
      %v912 = vpop.trf.xlu0
      %v913 = vpop.trf.xlu0
      %v914 = vpop.trf.xlu0
      %v915 = vpop.trf.xlu0
      %v916 = vpop.trf.xlu0
      %v917 = vpop.trf.xlu0
      %v918 = vpop.trf.xlu0
      %v919 = vpop.trf.xlu0
      %v920 = vpop.trf.xlu0
      %v921 = vpop.trf.xlu0
      %922 = vxpose.xlu0.b32.start [1/16] %v827, 128
      %923 = vxpose.xlu0.b32.cont [2/16] %v843, 128
      %924 = vxpose.xlu0.b32.cont [3/16] %v859, 128
      %925 = vxpose.xlu0.b32.cont [4/16] %v875, 128
      %926 = vxpose.xlu0.b32.cont [5/16] 0.0, 128
      %927 = vxpose.xlu0.b32.cont [6/16] 0.0, 128
      %928 = vxpose.xlu0.b32.cont [7/16] 0.0, 128
      %929 = vxpose.xlu0.b32.cont [8/16] 0.0, 128
      %930 = vxpose.xlu0.b32.cont [9/16] 0.0, 128
      %931 = vxpose.xlu0.b32.cont [10/16] 0.0, 128
      %932 = vxpose.xlu0.b32.cont [11/16] 0.0, 128
      %933 = vxpose.xlu0.b32.cont [12/16] 0.0, 128
      %934 = vxpose.xlu0.b32.cont [13/16] 0.0, 128
      %935 = vxpose.xlu0.b32.cont [14/16] 0.0, 128
      %936 = vxpose.xlu0.b32.cont [15/16] 0.0, 128
      %937 = vxpose.xlu0.b32.end [16/16] 0.0, 128
      %v938 = vpop.trf.xlu0
      %v939 = vpop.trf.xlu0
      %v940 = vpop.trf.xlu0
      %v941 = vpop.trf.xlu0
      %v942 = vpop.trf.xlu0
      %v943 = vpop.trf.xlu0
      %v944 = vpop.trf.xlu0
      %v945 = vpop.trf.xlu0
      %v946 = vpop.trf.xlu0
      %v947 = vpop.trf.xlu0
      %v948 = vpop.trf.xlu0
      %v949 = vpop.trf.xlu0
      %v950 = vpop.trf.xlu0
      %v951 = vpop.trf.xlu0
      %v952 = vpop.trf.xlu0
      %v953 = vpop.trf.xlu0
      %954 = vxpose.xlu0.b32.start [1/16] %v828, 128
      %955 = vxpose.xlu0.b32.cont [2/16] %v844, 128
      %956 = vxpose.xlu0.b32.cont [3/16] %v860, 128
      %957 = vxpose.xlu0.b32.cont [4/16] %v876, 128
      %958 = vxpose.xlu0.b32.cont [5/16] 0.0, 128
      %959 = vxpose.xlu0.b32.cont [6/16] 0.0, 128
      %960 = vxpose.xlu0.b32.cont [7/16] 0.0, 128
      %961 = vxpose.xlu0.b32.cont [8/16] 0.0, 128
      %962 = vxpose.xlu0.b32.cont [9/16] 0.0, 128
      %963 = vxpose.xlu0.b32.cont [10/16] 0.0, 128
      %964 = vxpose.xlu0.b32.cont [11/16] 0.0, 128
      %965 = vxpose.xlu0.b32.cont [12/16] 0.0, 128
      %966 = vxpose.xlu0.b32.cont [13/16] 0.0, 128
      %967 = vxpose.xlu0.b32.cont [14/16] 0.0, 128
      %968 = vxpose.xlu0.b32.cont [15/16] 0.0, 128
      %969 = vxpose.xlu0.b32.end [16/16] 0.0, 128
      %v970 = vpop.trf.xlu0
      %v971 = vpop.trf.xlu0
      %v972 = vpop.trf.xlu0
      %v973 = vpop.trf.xlu0
      %v974 = vpop.trf.xlu0
      %v975 = vpop.trf.xlu0
      %v976 = vpop.trf.xlu0
      %v977 = vpop.trf.xlu0
      %v978 = vpop.trf.xlu0
      %v979 = vpop.trf.xlu0
      %v980 = vpop.trf.xlu0
      %v981 = vpop.trf.xlu0
      %v982 = vpop.trf.xlu0
      %v983 = vpop.trf.xlu0
      %v984 = vpop.trf.xlu0
      %v985 = vpop.trf.xlu0
      %986 = vxpose.xlu0.b32.start [1/16] %v829, 128
      %987 = vxpose.xlu0.b32.cont [2/16] %v845, 128
      %988 = vxpose.xlu0.b32.cont [3/16] %v861, 128
      %989 = vxpose.xlu0.b32.cont [4/16] %v877, 128
      %990 = vxpose.xlu0.b32.cont [5/16] 0.0, 128
      %991 = vxpose.xlu0.b32.cont [6/16] 0.0, 128
      %992 = vxpose.xlu0.b32.cont [7/16] 0.0, 128
      %993 = vxpose.xlu0.b32.cont [8/16] 0.0, 128
      %994 = vxpose.xlu0.b32.cont [9/16] 0.0, 128
      %995 = vxpose.xlu0.b32.cont [10/16] 0.0, 128
      %996 = vxpose.xlu0.b32.cont [11/16] 0.0, 128
      %997 = vxpose.xlu0.b32.cont [12/16] 0.0, 128
      %998 = vxpose.xlu0.b32.cont [13/16] 0.0, 128
      %999 = vxpose.xlu0.b32.cont [14/16] 0.0, 128
      %1000 = vxpose.xlu0.b32.cont [15/16] 0.0, 128
      %1001 = vxpose.xlu0.b32.end [16/16] 0.0, 128
      %v1002 = vpop.trf.xlu0
      %v1003 = vpop.trf.xlu0
      %v1004 = vpop.trf.xlu0
      %v1005 = vpop.trf.xlu0
      %v1006 = vpop.trf.xlu0
      %v1007 = vpop.trf.xlu0
      %v1008 = vpop.trf.xlu0
      %v1009 = vpop.trf.xlu0
      %v1010 = vpop.trf.xlu0
      %v1011 = vpop.trf.xlu0
      %v1012 = vpop.trf.xlu0
      %v1013 = vpop.trf.xlu0
      %v1014 = vpop.trf.xlu0
      %v1015 = vpop.trf.xlu0
      %v1016 = vpop.trf.xlu0
      %v1017 = vpop.trf.xlu0
      %1018 = vxpose.xlu0.b32.start [1/16] %v830, 128
      %1019 = vxpose.xlu0.b32.cont [2/16] %v846, 128
      %1020 = vxpose.xlu0.b32.cont [3/16] %v862, 128
      %1021 = vxpose.xlu0.b32.cont [4/16] %v878, 128
      %1022 = vxpose.xlu0.b32.cont [5/16] 0.0, 128
      %1023 = vxpose.xlu0.b32.cont [6/16] 0.0, 128
      %1024 = vxpose.xlu0.b32.cont [7/16] 0.0, 128
      %1025 = vxpose.xlu0.b32.cont [8/16] 0.0, 128
      %1026 = vxpose.xlu0.b32.cont [9/16] 0.0, 128
      %1027 = vxpose.xlu0.b32.cont [10/16] 0.0, 128
      %1028 = vxpose.xlu0.b32.cont [11/16] 0.0, 128
      %1029 = vxpose.xlu0.b32.cont [12/16] 0.0, 128
      %1030 = vxpose.xlu0.b32.cont [13/16] 0.0, 128
      %1031 = vxpose.xlu0.b32.cont [14/16] 0.0, 128
      %1032 = vxpose.xlu0.b32.cont [15/16] 0.0, 128
      %1033 = vxpose.xlu0.b32.end [16/16] 0.0, 128
      %v1034 = vpop.trf.xlu0
      %v1035 = vpop.trf.xlu0
      %v1036 = vpop.trf.xlu0
      %v1037 = vpop.trf.xlu0
      %v1038 = vpop.trf.xlu0
      %v1039 = vpop.trf.xlu0
      %v1040 = vpop.trf.xlu0
      %v1041 = vpop.trf.xlu0
      %v1042 = vpop.trf.xlu0
      %v1043 = vpop.trf.xlu0
      %v1044 = vpop.trf.xlu0
      %v1045 = vpop.trf.xlu0
      %v1046 = vpop.trf.xlu0
      %v1047 = vpop.trf.xlu0
      %v1048 = vpop.trf.xlu0
      %v1049 = vpop.trf.xlu0
      %1050 = vxpose.xlu0.b32.start [1/16] %v831, 128
      %1051 = vxpose.xlu0.b32.cont [2/16] %v847, 128
      %1052 = vxpose.xlu0.b32.cont [3/16] %v863, 128
      %1053 = vxpose.xlu0.b32.cont [4/16] %v879, 128
      %1054 = vxpose.xlu0.b32.cont [5/16] 0.0, 128
      %1055 = vxpose.xlu0.b32.cont [6/16] 0.0, 128
      %1056 = vxpose.xlu0.b32.cont [7/16] 0.0, 128
      %1057 = vxpose.xlu0.b32.cont [8/16] 0.0, 128
      %1058 = vxpose.xlu0.b32.cont [9/16] 0.0, 128
      %1059 = vxpose.xlu0.b32.cont [10/16] 0.0, 128
      %1060 = vxpose.xlu0.b32.cont [11/16] 0.0, 128
      %1061 = vxpose.xlu0.b32.cont [12/16] 0.0, 128
      %1062 = vxpose.xlu0.b32.cont [13/16] 0.0, 128
      %1063 = vxpose.xlu0.b32.cont [14/16] 0.0, 128
      %1064 = vxpose.xlu0.b32.cont [15/16] 0.0, 128
      %1065 = vxpose.xlu0.b32.end [16/16] 0.0, 128
      %v1066 = vpop.trf.xlu0
      %v1067 = vpop.trf.xlu0
      %v1068 = vpop.trf.xlu0
      %v1069 = vpop.trf.xlu0
      %v1070 = vpop.trf.xlu0
      %v1071 = vpop.trf.xlu0
      %v1072 = vpop.trf.xlu0
      %v1073 = vpop.trf.xlu0
      %v1074 = vpop.trf.xlu0
      %v1075 = vpop.trf.xlu0
      %v1076 = vpop.trf.xlu0
      %v1077 = vpop.trf.xlu0
      %v1078 = vpop.trf.xlu0
      %v1079 = vpop.trf.xlu0
      %v1080 = vpop.trf.xlu0
      %v1081 = vpop.trf.xlu0
      %1082 = vxpose.xlu0.b32.start [1/16] %v832, 128
      %1083 = vxpose.xlu0.b32.cont [2/16] %v848, 128
      %1084 = vxpose.xlu0.b32.cont [3/16] %v864, 128
      %1085 = vxpose.xlu0.b32.cont [4/16] %v880, 128
      %1086 = vxpose.xlu0.b32.cont [5/16] 0.0, 128
      %1087 = vxpose.xlu0.b32.cont [6/16] 0.0, 128
      %1088 = vxpose.xlu0.b32.cont [7/16] 0.0, 128
      %1089 = vxpose.xlu0.b32.cont [8/16] 0.0, 128
      %1090 = vxpose.xlu0.b32.cont [9/16] 0.0, 128
      %1091 = vxpose.xlu0.b32.cont [10/16] 0.0, 128
      %1092 = vxpose.xlu0.b32.cont [11/16] 0.0, 128
      %1093 = vxpose.xlu0.b32.cont [12/16] 0.0, 128
      %1094 = vxpose.xlu0.b32.cont [13/16] 0.0, 128
      %1095 = vxpose.xlu0.b32.cont [14/16] 0.0, 128
      %1096 = vxpose.xlu0.b32.cont [15/16] 0.0, 128
      %1097 = vxpose.xlu0.b32.end [16/16] 0.0, 128
      %v1098 = vpop.trf.xlu0
      %v1099 = vpop.trf.xlu0
      %v1100 = vpop.trf.xlu0
      %v1101 = vpop.trf.xlu0
      %v1102 = vpop.trf.xlu0
      %v1103 = vpop.trf.xlu0
      %v1104 = vpop.trf.xlu0
      %v1105 = vpop.trf.xlu0
      %v1106 = vpop.trf.xlu0
      %v1107 = vpop.trf.xlu0
      %v1108 = vpop.trf.xlu0
      %v1109 = vpop.trf.xlu0
      %v1110 = vpop.trf.xlu0
      %v1111 = vpop.trf.xlu0
      %v1112 = vpop.trf.xlu0
      %v1113 = vpop.trf.xlu0
      %1114 = vxpose.xlu0.b32.start [1/16] %v833, 128
      %1115 = vxpose.xlu0.b32.cont [2/16] %v849, 128
      %1116 = vxpose.xlu0.b32.cont [3/16] %v865, 128
      %1117 = vxpose.xlu0.b32.cont [4/16] %v881, 128
      %1118 = vxpose.xlu0.b32.cont [5/16] 0.0, 128
      %1119 = vxpose.xlu0.b32.cont [6/16] 0.0, 128
      %1120 = vxpose.xlu0.b32.cont [7/16] 0.0, 128
      %1121 = vxpose.xlu0.b32.cont [8/16] 0.0, 128
      %1122 = vxpose.xlu0.b32.cont [9/16] 0.0, 128
      %1123 = vxpose.xlu0.b32.cont [10/16] 0.0, 128
      %1124 = vxpose.xlu0.b32.cont [11/16] 0.0, 128
      %1125 = vxpose.xlu0.b32.cont [12/16] 0.0, 128
      %1126 = vxpose.xlu0.b32.cont [13/16] 0.0, 128
      %1127 = vxpose.xlu0.b32.cont [14/16] 0.0, 128
      %1128 = vxpose.xlu0.b32.cont [15/16] 0.0, 128
      %1129 = vxpose.xlu0.b32.end [16/16] 0.0, 128
      %v1130 = vpop.trf.xlu0
      %v1131 = vpop.trf.xlu0
      %v1132 = vpop.trf.xlu0
      %v1133 = vpop.trf.xlu0
      %v1134 = vpop.trf.xlu0
      %v1135 = vpop.trf.xlu0
      %v1136 = vpop.trf.xlu0
      %v1137 = vpop.trf.xlu0
      %v1138 = vpop.trf.xlu0
      %v1139 = vpop.trf.xlu0
      %v1140 = vpop.trf.xlu0
      %v1141 = vpop.trf.xlu0
      %v1142 = vpop.trf.xlu0
      %v1143 = vpop.trf.xlu0
      %v1144 = vpop.trf.xlu0
      %v1145 = vpop.trf.xlu0
      %1146 = vxpose.xlu0.b32.start [1/16] %v834, 128
      %1147 = vxpose.xlu0.b32.cont [2/16] %v850, 128
      %1148 = vxpose.xlu0.b32.cont [3/16] %v866, 128
      %1149 = vxpose.xlu0.b32.cont [4/16] %v882, 128
      %1150 = vxpose.xlu0.b32.cont [5/16] 0.0, 128
      %1151 = vxpose.xlu0.b32.cont [6/16] 0.0, 128
      %1152 = vxpose.xlu0.b32.cont [7/16] 0.0, 128
      %1153 = vxpose.xlu0.b32.cont [8/16] 0.0, 128
      %1154 = vxpose.xlu0.b32.cont [9/16] 0.0, 128
      %1155 = vxpose.xlu0.b32.cont [10/16] 0.0, 128
      %1156 = vxpose.xlu0.b32.cont [11/16] 0.0, 128
      %1157 = vxpose.xlu0.b32.cont [12/16] 0.0, 128
      %1158 = vxpose.xlu0.b32.cont [13/16] 0.0, 128
      %1159 = vxpose.xlu0.b32.cont [14/16] 0.0, 128
      %1160 = vxpose.xlu0.b32.cont [15/16] 0.0, 128
      %1161 = vxpose.xlu0.b32.end [16/16] 0.0, 128
      %v1162 = vpop.trf.xlu0
      %v1163 = vpop.trf.xlu0
      %v1164 = vpop.trf.xlu0
      %v1165 = vpop.trf.xlu0
      %v1166 = vpop.trf.xlu0
      %v1167 = vpop.trf.xlu0
      %v1168 = vpop.trf.xlu0
      %v1169 = vpop.trf.xlu0
      %v1170 = vpop.trf.xlu0
      %v1171 = vpop.trf.xlu0
      %v1172 = vpop.trf.xlu0
      %v1173 = vpop.trf.xlu0
      %v1174 = vpop.trf.xlu0
      %v1175 = vpop.trf.xlu0
      %v1176 = vpop.trf.xlu0
      %v1177 = vpop.trf.xlu0
      %1178 = vxpose.xlu0.b32.start [1/16] %v835, 128
      %1179 = vxpose.xlu0.b32.cont [2/16] %v851, 128
      %1180 = vxpose.xlu0.b32.cont [3/16] %v867, 128
      %1181 = vxpose.xlu0.b32.cont [4/16] %v883, 128
      %1182 = vxpose.xlu0.b32.cont [5/16] 0.0, 128
      %1183 = vxpose.xlu0.b32.cont [6/16] 0.0, 128
      %1184 = vxpose.xlu0.b32.cont [7/16] 0.0, 128
      %1185 = vxpose.xlu0.b32.cont [8/16] 0.0, 128
      %1186 = vxpose.xlu0.b32.cont [9/16] 0.0, 128
      %1187 = vxpose.xlu0.b32.cont [10/16] 0.0, 128
      %1188 = vxpose.xlu0.b32.cont [11/16] 0.0, 128
      %1189 = vxpose.xlu0.b32.cont [12/16] 0.0, 128
      %1190 = vxpose.xlu0.b32.cont [13/16] 0.0, 128
      %1191 = vxpose.xlu0.b32.cont [14/16] 0.0, 128
      %1192 = vxpose.xlu0.b32.cont [15/16] 0.0, 128
      %1193 = vxpose.xlu0.b32.end [16/16] 0.0, 128
      %v1194 = vpop.trf.xlu0
      %v1195 = vpop.trf.xlu0
      %v1196 = vpop.trf.xlu0
      %v1197 = vpop.trf.xlu0
      %v1198 = vpop.trf.xlu0
      %v1199 = vpop.trf.xlu0
      %v1200 = vpop.trf.xlu0
      %v1201 = vpop.trf.xlu0
      %v1202 = vpop.trf.xlu0
      %v1203 = vpop.trf.xlu0
      %v1204 = vpop.trf.xlu0
      %v1205 = vpop.trf.xlu0
      %v1206 = vpop.trf.xlu0
      %v1207 = vpop.trf.xlu0
      %v1208 = vpop.trf.xlu0
      %v1209 = vpop.trf.xlu0
      %1210 = vxpose.xlu0.b32.start [1/16] %v836, 128
      %1211 = vxpose.xlu0.b32.cont [2/16] %v852, 128
      %1212 = vxpose.xlu0.b32.cont [3/16] %v868, 128
      %1213 = vxpose.xlu0.b32.cont [4/16] %v884, 128
      %1214 = vxpose.xlu0.b32.cont [5/16] 0.0, 128
      %1215 = vxpose.xlu0.b32.cont [6/16] 0.0, 128
      %1216 = vxpose.xlu0.b32.cont [7/16] 0.0, 128
      %1217 = vxpose.xlu0.b32.cont [8/16] 0.0, 128
      %1218 = vxpose.xlu0.b32.cont [9/16] 0.0, 128
      %1219 = vxpose.xlu0.b32.cont [10/16] 0.0, 128
      %1220 = vxpose.xlu0.b32.cont [11/16] 0.0, 128
      %1221 = vxpose.xlu0.b32.cont [12/16] 0.0, 128
      %1222 = vxpose.xlu0.b32.cont [13/16] 0.0, 128
      %1223 = vxpose.xlu0.b32.cont [14/16] 0.0, 128
      %1224 = vxpose.xlu0.b32.cont [15/16] 0.0, 128
      %1225 = vxpose.xlu0.b32.end [16/16] 0.0, 128
      %v1226 = vpop.trf.xlu0
      %v1227 = vpop.trf.xlu0
      %v1228 = vpop.trf.xlu0
      %v1229 = vpop.trf.xlu0
      %v1230 = vpop.trf.xlu0
      %v1231 = vpop.trf.xlu0
      %v1232 = vpop.trf.xlu0
      %v1233 = vpop.trf.xlu0
      %v1234 = vpop.trf.xlu0
      %v1235 = vpop.trf.xlu0
      %v1236 = vpop.trf.xlu0
      %v1237 = vpop.trf.xlu0
      %v1238 = vpop.trf.xlu0
      %v1239 = vpop.trf.xlu0
      %v1240 = vpop.trf.xlu0
      %v1241 = vpop.trf.xlu0
      %1242 = vxpose.xlu0.b32.start [1/16] %v837, 128
      %1243 = vxpose.xlu0.b32.cont [2/16] %v853, 128
      %1244 = vxpose.xlu0.b32.cont [3/16] %v869, 128
      %1245 = vxpose.xlu0.b32.cont [4/16] %v885, 128
      %1246 = vxpose.xlu0.b32.cont [5/16] 0.0, 128
      %1247 = vxpose.xlu0.b32.cont [6/16] 0.0, 128
      %1248 = vxpose.xlu0.b32.cont [7/16] 0.0, 128
      %1249 = vxpose.xlu0.b32.cont [8/16] 0.0, 128
      %1250 = vxpose.xlu0.b32.cont [9/16] 0.0, 128
      %1251 = vxpose.xlu0.b32.cont [10/16] 0.0, 128
      %1252 = vxpose.xlu0.b32.cont [11/16] 0.0, 128
      %1253 = vxpose.xlu0.b32.cont [12/16] 0.0, 128
      %1254 = vxpose.xlu0.b32.cont [13/16] 0.0, 128
      %1255 = vxpose.xlu0.b32.cont [14/16] 0.0, 128
      %1256 = vxpose.xlu0.b32.cont [15/16] 0.0, 128
      %1257 = vxpose.xlu0.b32.end [16/16] 0.0, 128
      %v1258 = vpop.trf.xlu0
      %v1259 = vpop.trf.xlu0
      %v1260 = vpop.trf.xlu0
      %v1261 = vpop.trf.xlu0
      %v1262 = vpop.trf.xlu0
      %v1263 = vpop.trf.xlu0
      %v1264 = vpop.trf.xlu0
      %v1265 = vpop.trf.xlu0
      %v1266 = vpop.trf.xlu0
      %v1267 = vpop.trf.xlu0
      %v1268 = vpop.trf.xlu0
      %v1269 = vpop.trf.xlu0
      %v1270 = vpop.trf.xlu0
      %v1271 = vpop.trf.xlu0
      %v1272 = vpop.trf.xlu0
      %v1273 = vpop.trf.xlu0
      %1274 = vxpose.xlu0.b32.start [1/16] %v838, 128
      %1275 = vxpose.xlu0.b32.cont [2/16] %v854, 128
      %1276 = vxpose.xlu0.b32.cont [3/16] %v870, 128
      %1277 = vxpose.xlu0.b32.cont [4/16] %v886, 128
      %1278 = vxpose.xlu0.b32.cont [5/16] 0.0, 128
      %1279 = vxpose.xlu0.b32.cont [6/16] 0.0, 128
      %1280 = vxpose.xlu0.b32.cont [7/16] 0.0, 128
      %1281 = vxpose.xlu0.b32.cont [8/16] 0.0, 128
      %1282 = vxpose.xlu0.b32.cont [9/16] 0.0, 128
      %1283 = vxpose.xlu0.b32.cont [10/16] 0.0, 128
      %1284 = vxpose.xlu0.b32.cont [11/16] 0.0, 128
      %1285 = vxpose.xlu0.b32.cont [12/16] 0.0, 128
      %1286 = vxpose.xlu0.b32.cont [13/16] 0.0, 128
      %1287 = vxpose.xlu0.b32.cont [14/16] 0.0, 128
      %1288 = vxpose.xlu0.b32.cont [15/16] 0.0, 128
      %1289 = vxpose.xlu0.b32.end [16/16] 0.0, 128
      %v1290 = vpop.trf.xlu0
      %v1291 = vpop.trf.xlu0
      %v1292 = vpop.trf.xlu0
      %v1293 = vpop.trf.xlu0
      %v1294 = vpop.trf.xlu0
      %v1295 = vpop.trf.xlu0
      %v1296 = vpop.trf.xlu0
      %v1297 = vpop.trf.xlu0
      %v1298 = vpop.trf.xlu0
      %v1299 = vpop.trf.xlu0
      %v1300 = vpop.trf.xlu0
      %v1301 = vpop.trf.xlu0
      %v1302 = vpop.trf.xlu0
      %v1303 = vpop.trf.xlu0
      %v1304 = vpop.trf.xlu0
      %v1305 = vpop.trf.xlu0
      %1306 = vxpose.xlu0.b32.start [1/16] %v839, 128
      %1307 = vxpose.xlu0.b32.cont [2/16] %v855, 128
      %1308 = vxpose.xlu0.b32.cont [3/16] %v871, 128
      %1309 = vxpose.xlu0.b32.cont [4/16] %v887, 128
      %1310 = vxpose.xlu0.b32.cont [5/16] 0.0, 128
      %1311 = vxpose.xlu0.b32.cont [6/16] 0.0, 128
      %1312 = vxpose.xlu0.b32.cont [7/16] 0.0, 128
      %1313 = vxpose.xlu0.b32.cont [8/16] 0.0, 128
      %1314 = vxpose.xlu0.b32.cont [9/16] 0.0, 128
      %1315 = vxpose.xlu0.b32.cont [10/16] 0.0, 128
      %1316 = vxpose.xlu0.b32.cont [11/16] 0.0, 128
      %1317 = vxpose.xlu0.b32.cont [12/16] 0.0, 128
      %1318 = vxpose.xlu0.b32.cont [13/16] 0.0, 128
      %1319 = vxpose.xlu0.b32.cont [14/16] 0.0, 128
      %1320 = vxpose.xlu0.b32.cont [15/16] 0.0, 128
      %1321 = vxpose.xlu0.b32.end [16/16] 0.0, 128
      %v1322 = vpop.trf.xlu0
      %v1323 = vpop.trf.xlu0
      %v1324 = vpop.trf.xlu0
      %v1325 = vpop.trf.xlu0
      %v1326 = vpop.trf.xlu0
      %v1327 = vpop.trf.xlu0
      %v1328 = vpop.trf.xlu0
      %v1329 = vpop.trf.xlu0
      %v1330 = vpop.trf.xlu0
      %v1331 = vpop.trf.xlu0
      %v1332 = vpop.trf.xlu0
      %v1333 = vpop.trf.xlu0
      %v1334 = vpop.trf.xlu0
      %v1335 = vpop.trf.xlu0
      %v1336 = vpop.trf.xlu0
      %v1337 = vpop.trf.xlu0
      %1338 = vxpose.xlu0.b32.start [1/16] %v840, 128
      %1339 = vxpose.xlu0.b32.cont [2/16] %v856, 128
      %1340 = vxpose.xlu0.b32.cont [3/16] %v872, 128
      %1341 = vxpose.xlu0.b32.cont [4/16] %v888, 128
      %1342 = vxpose.xlu0.b32.cont [5/16] 0.0, 128
      %1343 = vxpose.xlu0.b32.cont [6/16] 0.0, 128
      %1344 = vxpose.xlu0.b32.cont [7/16] 0.0, 128
      %1345 = vxpose.xlu0.b32.cont [8/16] 0.0, 128
      %1346 = vxpose.xlu0.b32.cont [9/16] 0.0, 128
      %1347 = vxpose.xlu0.b32.cont [10/16] 0.0, 128
      %1348 = vxpose.xlu0.b32.cont [11/16] 0.0, 128
      %1349 = vxpose.xlu0.b32.cont [12/16] 0.0, 128
      %1350 = vxpose.xlu0.b32.cont [13/16] 0.0, 128
      %1351 = vxpose.xlu0.b32.cont [14/16] 0.0, 128
      %1352 = vxpose.xlu0.b32.cont [15/16] 0.0, 128
      %1353 = vxpose.xlu0.b32.end [16/16] 0.0, 128
      %v1354 = vpop.trf.xlu0
      %v1355 = vpop.trf.xlu0
      %v1356 = vpop.trf.xlu0
      %v1357 = vpop.trf.xlu0
      %v1358 = vpop.trf.xlu0
      %v1359 = vpop.trf.xlu0
      %v1360 = vpop.trf.xlu0
      %v1361 = vpop.trf.xlu0
      %v1362 = vpop.trf.xlu0
      %v1363 = vpop.trf.xlu0
      %v1364 = vpop.trf.xlu0
      %v1365 = vpop.trf.xlu0
      %v1366 = vpop.trf.xlu0
      %v1367 = vpop.trf.xlu0
      %v1368 = vpop.trf.xlu0
      %v1369 = vpop.trf.xlu0
      %1370 = vxpose.xlu0.b32.start [1/16] %v841, 128
      %1371 = vxpose.xlu0.b32.cont [2/16] %v857, 128
      %1372 = vxpose.xlu0.b32.cont [3/16] %v873, 128
      %1373 = vxpose.xlu0.b32.cont [4/16] %v889, 128
      %1374 = vxpose.xlu0.b32.cont [5/16] 0.0, 128
      %1375 = vxpose.xlu0.b32.cont [6/16] 0.0, 128
      %1376 = vxpose.xlu0.b32.cont [7/16] 0.0, 128
      %1377 = vxpose.xlu0.b32.cont [8/16] 0.0, 128
      %1378 = vxpose.xlu0.b32.cont [9/16] 0.0, 128
      %1379 = vxpose.xlu0.b32.cont [10/16] 0.0, 128
      %1380 = vxpose.xlu0.b32.cont [11/16] 0.0, 128
      %1381 = vxpose.xlu0.b32.cont [12/16] 0.0, 128
      %1382 = vxpose.xlu0.b32.cont [13/16] 0.0, 128
      %1383 = vxpose.xlu0.b32.cont [14/16] 0.0, 128
      %1384 = vxpose.xlu0.b32.cont [15/16] 0.0, 128
      %1385 = vxpose.xlu0.b32.end [16/16] 0.0, 128
      %v1386 = vpop.trf.xlu0
      %v1387 = vpop.trf.xlu0
      %v1388 = vpop.trf.xlu0
      %v1389 = vpop.trf.xlu0
      %v1390 = vpop.trf.xlu0
      %v1391 = vpop.trf.xlu0
      %v1392 = vpop.trf.xlu0
      %v1393 = vpop.trf.xlu0
      %v1394 = vpop.trf.xlu0
      %v1395 = vpop.trf.xlu0
      %v1396 = vpop.trf.xlu0
      %v1397 = vpop.trf.xlu0
      %v1398 = vpop.trf.xlu0
      %v1399 = vpop.trf.xlu0
      %v1400 = vpop.trf.xlu0
      %v1401 = vpop.trf.xlu0
      %v1402 = vpack.c.bf16 %v907, %v906
      %v1403 = vpack.c.bf16 %v909, %v908
      %v1404 = vpack.c.bf16 %v911, %v910
      %v1405 = vpack.c.bf16 %v913, %v912
      %v1406 = vpack.c.bf16 %v915, %v914
      %v1407 = vpack.c.bf16 %v917, %v916
      %v1408 = vpack.c.bf16 %v919, %v918
      %v1409 = vpack.c.bf16 %v921, %v920
      %v1410 = vpack.c.bf16 %v939, %v938
      %v1411 = vpack.c.bf16 %v941, %v940
      %v1412 = vpack.c.bf16 %v943, %v942
      %v1413 = vpack.c.bf16 %v945, %v944
      %v1414 = vpack.c.bf16 %v947, %v946
      %v1415 = vpack.c.bf16 %v949, %v948
      %v1416 = vpack.c.bf16 %v951, %v950
      %v1417 = vpack.c.bf16 %v953, %v952
      %v1418 = vpack.c.bf16 %v971, %v970
      %v1419 = vpack.c.bf16 %v973, %v972
      %v1420 = vpack.c.bf16 %v975, %v974
      %v1421 = vpack.c.bf16 %v977, %v976
      %v1422 = vpack.c.bf16 %v979, %v978
      %v1423 = vpack.c.bf16 %v981, %v980
      %v1424 = vpack.c.bf16 %v983, %v982
      %v1425 = vpack.c.bf16 %v985, %v984
      %v1426 = vpack.c.bf16 %v1003, %v1002
      %v1427 = vpack.c.bf16 %v1005, %v1004
      %v1428 = vpack.c.bf16 %v1007, %v1006
      %v1429 = vpack.c.bf16 %v1009, %v1008
      %v1430 = vpack.c.bf16 %v1011, %v1010
      %v1431 = vpack.c.bf16 %v1013, %v1012
      %v1432 = vpack.c.bf16 %v1015, %v1014
      %v1433 = vpack.c.bf16 %v1017, %v1016
      %v1434 = vpack.c.bf16 %v1035, %v1034
      %v1435 = vpack.c.bf16 %v1037, %v1036
      %v1436 = vpack.c.bf16 %v1039, %v1038
      %v1437 = vpack.c.bf16 %v1041, %v1040
      %v1438 = vpack.c.bf16 %v1043, %v1042
      %v1439 = vpack.c.bf16 %v1045, %v1044
      %v1440 = vpack.c.bf16 %v1047, %v1046
      %v1441 = vpack.c.bf16 %v1049, %v1048
      %v1442 = vpack.c.bf16 %v1067, %v1066
      %v1443 = vpack.c.bf16 %v1069, %v1068
      %v1444 = vpack.c.bf16 %v1071, %v1070
      %v1445 = vpack.c.bf16 %v1073, %v1072
      %v1446 = vpack.c.bf16 %v1075, %v1074
      %v1447 = vpack.c.bf16 %v1077, %v1076
      %v1448 = vpack.c.bf16 %v1079, %v1078
      %v1449 = vpack.c.bf16 %v1081, %v1080
      %v1450 = vpack.c.bf16 %v1099, %v1098
      %v1451 = vpack.c.bf16 %v1101, %v1100
      %v1452 = vpack.c.bf16 %v1103, %v1102
      %v1453 = vpack.c.bf16 %v1105, %v1104
      %v1454 = vpack.c.bf16 %v1107, %v1106
      %v1455 = vpack.c.bf16 %v1109, %v1108
      %v1456 = vpack.c.bf16 %v1111, %v1110
      %v1457 = vpack.c.bf16 %v1113, %v1112
      %v1458 = vpack.c.bf16 %v1131, %v1130
      %v1459 = vpack.c.bf16 %v1133, %v1132
      %v1460 = vpack.c.bf16 %v1135, %v1134
      %v1461 = vpack.c.bf16 %v1137, %v1136
      %v1462 = vpack.c.bf16 %v1139, %v1138
      %v1463 = vpack.c.bf16 %v1141, %v1140
      %v1464 = vpack.c.bf16 %v1143, %v1142
      %v1465 = vpack.c.bf16 %v1145, %v1144
      %v1466 = vpack.c.bf16 %v1163, %v1162
      %v1467 = vpack.c.bf16 %v1165, %v1164
      %v1468 = vpack.c.bf16 %v1167, %v1166
      %v1469 = vpack.c.bf16 %v1169, %v1168
      %v1470 = vpack.c.bf16 %v1171, %v1170
      %v1471 = vpack.c.bf16 %v1173, %v1172
      %v1472 = vpack.c.bf16 %v1175, %v1174
      %v1473 = vpack.c.bf16 %v1177, %v1176
      %v1474 = vpack.c.bf16 %v1195, %v1194
      %v1475 = vpack.c.bf16 %v1197, %v1196
      %v1476 = vpack.c.bf16 %v1199, %v1198
      %v1477 = vpack.c.bf16 %v1201, %v1200
      %v1478 = vpack.c.bf16 %v1203, %v1202
      %v1479 = vpack.c.bf16 %v1205, %v1204
      %v1480 = vpack.c.bf16 %v1207, %v1206
      %v1481 = vpack.c.bf16 %v1209, %v1208
      %v1482 = vpack.c.bf16 %v1227, %v1226
      %v1483 = vpack.c.bf16 %v1229, %v1228
      %v1484 = vpack.c.bf16 %v1231, %v1230
      %v1485 = vpack.c.bf16 %v1233, %v1232
      %v1486 = vpack.c.bf16 %v1235, %v1234
      %v1487 = vpack.c.bf16 %v1237, %v1236
      %v1488 = vpack.c.bf16 %v1239, %v1238
      %v1489 = vpack.c.bf16 %v1241, %v1240
      %v1490 = vpack.c.bf16 %v1259, %v1258
      %v1491 = vpack.c.bf16 %v1261, %v1260
      %v1492 = vpack.c.bf16 %v1263, %v1262
      %v1493 = vpack.c.bf16 %v1265, %v1264
      %v1494 = vpack.c.bf16 %v1267, %v1266
      %v1495 = vpack.c.bf16 %v1269, %v1268
      %v1496 = vpack.c.bf16 %v1271, %v1270
      %v1497 = vpack.c.bf16 %v1273, %v1272
      %v1498 = vpack.c.bf16 %v1291, %v1290
      %v1499 = vpack.c.bf16 %v1293, %v1292
      %v1500 = vpack.c.bf16 %v1295, %v1294
      %v1501 = vpack.c.bf16 %v1297, %v1296
      %v1502 = vpack.c.bf16 %v1299, %v1298
      %v1503 = vpack.c.bf16 %v1301, %v1300
      %v1504 = vpack.c.bf16 %v1303, %v1302
      %v1505 = vpack.c.bf16 %v1305, %v1304
      %v1506 = vpack.c.bf16 %v1323, %v1322
      %v1507 = vpack.c.bf16 %v1325, %v1324
      %v1508 = vpack.c.bf16 %v1327, %v1326
      %v1509 = vpack.c.bf16 %v1329, %v1328
      %v1510 = vpack.c.bf16 %v1331, %v1330
      %v1511 = vpack.c.bf16 %v1333, %v1332
      %v1512 = vpack.c.bf16 %v1335, %v1334
      %v1513 = vpack.c.bf16 %v1337, %v1336
      %v1514 = vpack.c.bf16 %v1355, %v1354
      %v1515 = vpack.c.bf16 %v1357, %v1356
      %v1516 = vpack.c.bf16 %v1359, %v1358
      %v1517 = vpack.c.bf16 %v1361, %v1360
      %v1518 = vpack.c.bf16 %v1363, %v1362
      %v1519 = vpack.c.bf16 %v1365, %v1364
      %v1520 = vpack.c.bf16 %v1367, %v1366
      %v1521 = vpack.c.bf16 %v1369, %v1368
      %v1522 = vpack.c.bf16 %v1387, %v1386
      %v1523 = vpack.c.bf16 %v1389, %v1388
      %v1524 = vpack.c.bf16 %v1391, %v1390
      %v1525 = vpack.c.bf16 %v1393, %v1392
      %v1526 = vpack.c.bf16 %v1395, %v1394
      %v1527 = vpack.c.bf16 %v1397, %v1396
      %v1528 = vpack.c.bf16 %v1399, %v1398
      %v1529 = vpack.c.bf16 %v1401, %v1400
      %v1530 = vld [vmem:[%s3] sm:$0xf]
      %v1531 = vld [vmem:[%s3 + $0x4] sm:$0xf]
      %v1532 = vld [vmem:[%s3 + $0x8] sm:$0xf]
      %v1533 = vld [vmem:[%s3 + $0xc] sm:$0xf]
      %v1534 = vld [vmem:[%s4] sm:$0x1]
      %v1536 = vlaneseq
      %v1537 = vshrl.u32 %v1536, 7
      %v1538 = vsub.s32 0, %v1537
      %v1539 = vrot.slane %v1534, %v1538
      %v1545 = vunpack.c.l.b16 %v1530
      %v1546 = vunpack.c.l.b16 %v1531
      %v1547 = vunpack.c.l.b16 %v1532
      %v1548 = vunpack.c.l.b16 %v1533
      %v1549 = vpack.c.b16 %v1546, %v1545
      %v1550 = vpack.c.b16 %v1548, %v1547
      %vm1553 = vcmask 261120
      %v1555 = vsel %vm1553, %v1402, 0
      %v1558 = vsel %vm1553, %v1403, 0
      %v1561 = vsel %vm1553, %v1404, 0
      %v1564 = vsel %vm1553, %v1405, 0
      %v1567 = vsel %vm1553, %v1406, 0
      %v1570 = vsel %vm1553, %v1407, 0
      %v1573 = vsel %vm1553, %v1408, 0
      %v1576 = vsel %vm1553, %v1409, 0
      %v1579 = vsel %vm1553, %v1410, 0
      %v1582 = vsel %vm1553, %v1411, 0
      %v1585 = vsel %vm1553, %v1412, 0
      %v1588 = vsel %vm1553, %v1413, 0
      %v1591 = vsel %vm1553, %v1414, 0
      %v1594 = vsel %vm1553, %v1415, 0
      %v1597 = vsel %vm1553, %v1416, 0
      %v1600 = vsel %vm1553, %v1417, 0
      %v1603 = vsel %vm1553, %v1418, 0
      %v1606 = vsel %vm1553, %v1419, 0
      %v1609 = vsel %vm1553, %v1420, 0
      %v1612 = vsel %vm1553, %v1421, 0
      %v1615 = vsel %vm1553, %v1422, 0
      %v1618 = vsel %vm1553, %v1423, 0
      %v1621 = vsel %vm1553, %v1424, 0
      %v1624 = vsel %vm1553, %v1425, 0
      %v1627 = vsel %vm1553, %v1426, 0
      %v1630 = vsel %vm1553, %v1427, 0
      %v1633 = vsel %vm1553, %v1428, 0
      %v1636 = vsel %vm1553, %v1429, 0
      %v1639 = vsel %vm1553, %v1430, 0
      %v1642 = vsel %vm1553, %v1431, 0
      %v1645 = vsel %vm1553, %v1432, 0
      %v1648 = vsel %vm1553, %v1433, 0
      %v1651 = vsel %vm1553, %v1434, 0
      %v1654 = vsel %vm1553, %v1435, 0
      %v1657 = vsel %vm1553, %v1436, 0
      %v1660 = vsel %vm1553, %v1437, 0
      %v1663 = vsel %vm1553, %v1438, 0
      %v1666 = vsel %vm1553, %v1439, 0
      %v1669 = vsel %vm1553, %v1440, 0
      %v1672 = vsel %vm1553, %v1441, 0
      %v1675 = vsel %vm1553, %v1442, 0
      %v1678 = vsel %vm1553, %v1443, 0
      %v1681 = vsel %vm1553, %v1444, 0
      %v1684 = vsel %vm1553, %v1445, 0
      %v1687 = vsel %vm1553, %v1446, 0
      %v1690 = vsel %vm1553, %v1447, 0
      %v1693 = vsel %vm1553, %v1448, 0
      %v1696 = vsel %vm1553, %v1449, 0
      %v1699 = vsel %vm1553, %v1450, 0
      %v1702 = vsel %vm1553, %v1451, 0
      %v1705 = vsel %vm1553, %v1452, 0
      %v1708 = vsel %vm1553, %v1453, 0
      %v1711 = vsel %vm1553, %v1454, 0
      %v1714 = vsel %vm1553, %v1455, 0
      %v1717 = vsel %vm1553, %v1456, 0
      %v1720 = vsel %vm1553, %v1457, 0
      %v1723 = vsel %vm1553, %v1458, 0
      %v1726 = vsel %vm1553, %v1459, 0
      %v1729 = vsel %vm1553, %v1460, 0
      %v1732 = vsel %vm1553, %v1461, 0
      %v1735 = vsel %vm1553, %v1462, 0
      %v1738 = vsel %vm1553, %v1463, 0
      %v1741 = vsel %vm1553, %v1464, 0
      %v1744 = vsel %vm1553, %v1465, 0
      %v1747 = vsel %vm1553, %v1466, 0
      %v1750 = vsel %vm1553, %v1467, 0
      %v1753 = vsel %vm1553, %v1468, 0
      %v1756 = vsel %vm1553, %v1469, 0
      %v1759 = vsel %vm1553, %v1470, 0
      %v1762 = vsel %vm1553, %v1471, 0
      %v1765 = vsel %vm1553, %v1472, 0
      %v1768 = vsel %vm1553, %v1473, 0
      %v1771 = vsel %vm1553, %v1474, 0
      %v1774 = vsel %vm1553, %v1475, 0
      %v1777 = vsel %vm1553, %v1476, 0
      %v1780 = vsel %vm1553, %v1477, 0
      %v1783 = vsel %vm1553, %v1478, 0
      %v1786 = vsel %vm1553, %v1479, 0
      %v1789 = vsel %vm1553, %v1480, 0
      %v1792 = vsel %vm1553, %v1481, 0
      %v1795 = vsel %vm1553, %v1482, 0
      %v1798 = vsel %vm1553, %v1483, 0
      %v1801 = vsel %vm1553, %v1484, 0
      %v1804 = vsel %vm1553, %v1485, 0
      %v1807 = vsel %vm1553, %v1486, 0
      %v1810 = vsel %vm1553, %v1487, 0
      %v1813 = vsel %vm1553, %v1488, 0
      %v1816 = vsel %vm1553, %v1489, 0
      %v1819 = vsel %vm1553, %v1490, 0
      %v1822 = vsel %vm1553, %v1491, 0
      %v1825 = vsel %vm1553, %v1492, 0
      %v1828 = vsel %vm1553, %v1493, 0
      %v1831 = vsel %vm1553, %v1494, 0
      %v1834 = vsel %vm1553, %v1495, 0
      %v1837 = vsel %vm1553, %v1496, 0
      %v1840 = vsel %vm1553, %v1497, 0
      %v1843 = vsel %vm1553, %v1498, 0
      %v1846 = vsel %vm1553, %v1499, 0
      %v1849 = vsel %vm1553, %v1500, 0
      %v1852 = vsel %vm1553, %v1501, 0
      %v1855 = vsel %vm1553, %v1502, 0
      %v1858 = vsel %vm1553, %v1503, 0
      %v1861 = vsel %vm1553, %v1504, 0
      %v1864 = vsel %vm1553, %v1505, 0
      %v1867 = vsel %vm1553, %v1506, 0
      %v1870 = vsel %vm1553, %v1507, 0
      %v1873 = vsel %vm1553, %v1508, 0
      %v1876 = vsel %vm1553, %v1509, 0
      %v1879 = vsel %vm1553, %v1510, 0
      %v1882 = vsel %vm1553, %v1511, 0
      %v1885 = vsel %vm1553, %v1512, 0
      %v1888 = vsel %vm1553, %v1513, 0
      %v1891 = vsel %vm1553, %v1514, 0
      %v1894 = vsel %vm1553, %v1515, 0
      %v1897 = vsel %vm1553, %v1516, 0
      %v1900 = vsel %vm1553, %v1517, 0
      %v1903 = vsel %vm1553, %v1518, 0
      %v1906 = vsel %vm1553, %v1519, 0
      %v1909 = vsel %vm1553, %v1520, 0
      %v1912 = vsel %vm1553, %v1521, 0
      %v1915 = vsel %vm1553, %v1522, 0
      %v1918 = vsel %vm1553, %v1523, 0
      %v1921 = vsel %vm1553, %v1524, 0
      %v1924 = vsel %vm1553, %v1525, 0
      %v1927 = vsel %vm1553, %v1526, 0
      %v1930 = vsel %vm1553, %v1527, 0
      %v1933 = vsel %vm1553, %v1528, 0
      %v1936 = vsel %vm1553, %v1529, 0
      %1938 = vmatprep.subr.bf16.mxu0 0
      %1939 = vmatpush1.bf16.msra.mxu0 0
      %1940 = vmatprep.subr.bf16.mxu0 0
      %1941 = vmatpush1.bf16.msra.mxu0 0
      %1942 = vmatprep.subr.bf16.mxu0 0
      %1943 = vmatpush1.bf16.msra.mxu0 0
      %1944 = vmatprep.subr.bf16.mxu0 0
      %1945 = vmatpush1.bf16.msra.mxu0 0
      %1946 = vmatprep.subr.bf16.mxu0 0
      %1947 = vmatpush1.bf16.msra.mxu0 0
      %1948 = vmatprep.subr.bf16.mxu0 0
      %1949 = vmatpush1.bf16.msra.mxu0 0
      %1950 = vmatprep.subr.bf16.mxu0 0
      %1951 = vmatpush1.bf16.msra.mxu0 %v1550
      %1952 = vmatprep.subr.bf16.mxu0 0
      %1953 = vmatpush1.bf16.msra.mxu0 %v1549
      %1954 = vmatprep.subr.bf16.mxu0 0
      %1955 = vmatpush2.bf16.msra.mxu0 0
      %1956 = vmatprep.subr.bf16.mxu0 0
      %1957 = vmatpush2.bf16.msra.mxu0 0
      %1958 = vmatprep.subr.bf16.mxu0 0
      %1959 = vmatpush2.bf16.msra.mxu0 0
      %1960 = vmatprep.subr.bf16.mxu0 0
      %1961 = vmatpush2.bf16.msra.mxu0 0
      %1962 = vmatprep.subr.bf16.mxu0 0
      %1963 = vmatpush2.bf16.msra.mxu0 0
      %1964 = vmatprep.subr.bf16.mxu0 0
      %1965 = vmatpush2.bf16.msra.mxu0 0
      %1966 = vmatprep.subr.bf16.mxu0 0
      %1967 = vmatpush2.bf16.msra.mxu0 0
      %1968 = vmatprep.subr.bf16.mxu0 0
      %1969 = vmatpush2.bf16.msra.mxu0 0
      %1970 = vmatprep.mubr.bf16.mxu0 0
      %1971 = vmatmul.mubr.bf16.gmra.mxu0 %v1555
      %v1972 = vpop.f32.mrf.mxu0
      %v1973 = vadd.f32 %v1539, %v1972
      %v1974 = vpop.f32.mrf.mxu0
      %v1975 = vpop.f32.mrf.mxu0
      %v1976 = vadd.f32 %v1539, %v1975
      %v1977 = vpop.f32.mrf.mxu0
      %1978 = vmatprep.mubr.bf16.mxu0 0
      %1979 = vmatmul.mubr.bf16.gmra.mxu0 %v1558
      %v1980 = vpop.f32.mrf.mxu0
      %v1981 = vadd.f32 %v1539, %v1980
      %v1982 = vpop.f32.mrf.mxu0
      %v1983 = vpop.f32.mrf.mxu0
      %v1984 = vadd.f32 %v1539, %v1983
      %v1985 = vpop.f32.mrf.mxu0
      %1986 = vmatprep.mubr.bf16.mxu0 0
      %1987 = vmatmul.mubr.bf16.gmra.mxu0 %v1561
      %v1988 = vpop.f32.mrf.mxu0
      %v1989 = vadd.f32 %v1539, %v1988
      %v1990 = vpop.f32.mrf.mxu0
      %v1991 = vpop.f32.mrf.mxu0
      %v1992 = vadd.f32 %v1539, %v1991
      %v1993 = vpop.f32.mrf.mxu0
      %1994 = vmatprep.mubr.bf16.mxu0 0
      %1995 = vmatmul.mubr.bf16.gmra.mxu0 %v1564
      %v1996 = vpop.f32.mrf.mxu0
      %v1997 = vadd.f32 %v1539, %v1996
      %v1998 = vpop.f32.mrf.mxu0
      %v1999 = vpop.f32.mrf.mxu0
      %v2000 = vadd.f32 %v1539, %v1999
      %v2001 = vpop.f32.mrf.mxu0
      %2002 = vmatprep.mubr.bf16.mxu0 0
      %2003 = vmatmul.mubr.bf16.gmra.mxu0 %v1567
      %v2004 = vpop.f32.mrf.mxu0
      %v2005 = vadd.f32 %v1539, %v2004
      %v2006 = vpop.f32.mrf.mxu0
      %v2007 = vpop.f32.mrf.mxu0
      %v2008 = vadd.f32 %v1539, %v2007
      %v2009 = vpop.f32.mrf.mxu0
      %2010 = vmatprep.mubr.bf16.mxu0 0
      %2011 = vmatmul.mubr.bf16.gmra.mxu0 %v1570
      %v2012 = vpop.f32.mrf.mxu0
      %v2013 = vadd.f32 %v1539, %v2012
      %v2014 = vpop.f32.mrf.mxu0
      %v2015 = vpop.f32.mrf.mxu0
      %v2016 = vadd.f32 %v1539, %v2015
      %v2017 = vpop.f32.mrf.mxu0
      %2018 = vmatprep.mubr.bf16.mxu0 0
      %2019 = vmatmul.mubr.bf16.gmra.mxu0 %v1573
      %v2020 = vpop.f32.mrf.mxu0
      %v2021 = vadd.f32 %v1539, %v2020
      %v2022 = vpop.f32.mrf.mxu0
      %v2023 = vpop.f32.mrf.mxu0
      %v2024 = vadd.f32 %v1539, %v2023
      %v2025 = vpop.f32.mrf.mxu0
      %2026 = vmatprep.mubr.bf16.mxu0 0
      %2027 = vmatmul.mubr.bf16.gmra.mxu0 %v1576
      %v2028 = vpop.f32.mrf.mxu0
      %v2029 = vadd.f32 %v1539, %v2028
      %v2030 = vpop.f32.mrf.mxu0
      %v2031 = vpop.f32.mrf.mxu0
      %v2032 = vadd.f32 %v1539, %v2031
      %v2033 = vpop.f32.mrf.mxu0
      %2034 = vmatprep.mubr.bf16.mxu0 0
      %2035 = vmatmul.mubr.bf16.gmra.mxu0 %v1579
      %v2036 = vpop.f32.mrf.mxu0
      %v2037 = vadd.f32 %v1539, %v2036
      %v2038 = vpop.f32.mrf.mxu0
      %v2039 = vpop.f32.mrf.mxu0
      %v2040 = vadd.f32 %v1539, %v2039
      %v2041 = vpop.f32.mrf.mxu0
      %2042 = vmatprep.mubr.bf16.mxu0 0
      %2043 = vmatmul.mubr.bf16.gmra.mxu0 %v1582
      %v2044 = vpop.f32.mrf.mxu0
      %v2045 = vadd.f32 %v1539, %v2044
      %v2046 = vpop.f32.mrf.mxu0
      %v2047 = vpop.f32.mrf.mxu0
      %v2048 = vadd.f32 %v1539, %v2047
      %v2049 = vpop.f32.mrf.mxu0
      %2050 = vmatprep.mubr.bf16.mxu0 0
      %2051 = vmatmul.mubr.bf16.gmra.mxu0 %v1585
      %v2052 = vpop.f32.mrf.mxu0
      %v2053 = vadd.f32 %v1539, %v2052
      %v2054 = vpop.f32.mrf.mxu0
      %v2055 = vpop.f32.mrf.mxu0
      %v2056 = vadd.f32 %v1539, %v2055
      %v2057 = vpop.f32.mrf.mxu0
      %2058 = vmatprep.mubr.bf16.mxu0 0
      %2059 = vmatmul.mubr.bf16.gmra.mxu0 %v1588
      %v2060 = vpop.f32.mrf.mxu0
      %v2061 = vadd.f32 %v1539, %v2060
      %v2062 = vpop.f32.mrf.mxu0
      %v2063 = vpop.f32.mrf.mxu0
      %v2064 = vadd.f32 %v1539, %v2063
      %v2065 = vpop.f32.mrf.mxu0
      %2066 = vmatprep.mubr.bf16.mxu0 0
      %2067 = vmatmul.mubr.bf16.gmra.mxu0 %v1591
      %v2068 = vpop.f32.mrf.mxu0
      %v2069 = vadd.f32 %v1539, %v2068
      %v2070 = vpop.f32.mrf.mxu0
      %v2071 = vpop.f32.mrf.mxu0
      %v2072 = vadd.f32 %v1539, %v2071
      %v2073 = vpop.f32.mrf.mxu0
      %2074 = vmatprep.mubr.bf16.mxu0 0
      %2075 = vmatmul.mubr.bf16.gmra.mxu0 %v1594
      %v2076 = vpop.f32.mrf.mxu0
      %v2077 = vadd.f32 %v1539, %v2076
      %v2078 = vpop.f32.mrf.mxu0
      %v2079 = vpop.f32.mrf.mxu0
      %v2080 = vadd.f32 %v1539, %v2079
      %v2081 = vpop.f32.mrf.mxu0
      %2082 = vmatprep.mubr.bf16.mxu0 0
      %2083 = vmatmul.mubr.bf16.gmra.mxu0 %v1597
      %v2084 = vpop.f32.mrf.mxu0
      %v2085 = vadd.f32 %v1539, %v2084
      %v2086 = vpop.f32.mrf.mxu0
      %v2087 = vpop.f32.mrf.mxu0
      %v2088 = vadd.f32 %v1539, %v2087
      %v2089 = vpop.f32.mrf.mxu0
      %2090 = vmatprep.mubr.bf16.mxu0 0
      %2091 = vmatmul.mubr.bf16.gmra.mxu0 %v1600
      %v2092 = vpop.f32.mrf.mxu0
      %v2093 = vadd.f32 %v1539, %v2092
      %v2094 = vpop.f32.mrf.mxu0
      %v2095 = vpop.f32.mrf.mxu0
      %v2096 = vadd.f32 %v1539, %v2095
      %v2097 = vpop.f32.mrf.mxu0
      %2098 = vmatprep.mubr.bf16.mxu0 0
      %2099 = vmatmul.mubr.bf16.gmra.mxu0 %v1603
      %v2100 = vpop.f32.mrf.mxu0
      %v2101 = vadd.f32 %v1539, %v2100
      %v2102 = vpop.f32.mrf.mxu0
      %v2103 = vpop.f32.mrf.mxu0
      %v2104 = vadd.f32 %v1539, %v2103
      %v2105 = vpop.f32.mrf.mxu0
      %2106 = vmatprep.mubr.bf16.mxu0 0
      %2107 = vmatmul.mubr.bf16.gmra.mxu0 %v1606
      %v2108 = vpop.f32.mrf.mxu0
      %v2109 = vadd.f32 %v1539, %v2108
      %v2110 = vpop.f32.mrf.mxu0
      %v2111 = vpop.f32.mrf.mxu0
      %v2112 = vadd.f32 %v1539, %v2111
      %v2113 = vpop.f32.mrf.mxu0
      %2114 = vmatprep.mubr.bf16.mxu0 0
      %2115 = vmatmul.mubr.bf16.gmra.mxu0 %v1609
      %v2116 = vpop.f32.mrf.mxu0
      %v2117 = vadd.f32 %v1539, %v2116
      %v2118 = vpop.f32.mrf.mxu0
      %v2119 = vpop.f32.mrf.mxu0
      %v2120 = vadd.f32 %v1539, %v2119
      %v2121 = vpop.f32.mrf.mxu0
      %2122 = vmatprep.mubr.bf16.mxu0 0
      %2123 = vmatmul.mubr.bf16.gmra.mxu0 %v1612
      %v2124 = vpop.f32.mrf.mxu0
      %v2125 = vadd.f32 %v1539, %v2124
      %v2126 = vpop.f32.mrf.mxu0
      %v2127 = vpop.f32.mrf.mxu0
      %v2128 = vadd.f32 %v1539, %v2127
      %v2129 = vpop.f32.mrf.mxu0
      %2130 = vmatprep.mubr.bf16.mxu0 0
      %2131 = vmatmul.mubr.bf16.gmra.mxu0 %v1615
      %v2132 = vpop.f32.mrf.mxu0
      %v2133 = vadd.f32 %v1539, %v2132
      %v2134 = vpop.f32.mrf.mxu0
      %v2135 = vpop.f32.mrf.mxu0
      %v2136 = vadd.f32 %v1539, %v2135
      %v2137 = vpop.f32.mrf.mxu0
      %2138 = vmatprep.mubr.bf16.mxu0 0
      %2139 = vmatmul.mubr.bf16.gmra.mxu0 %v1618
      %v2140 = vpop.f32.mrf.mxu0
      %v2141 = vadd.f32 %v1539, %v2140
      %v2142 = vpop.f32.mrf.mxu0
      %v2143 = vpop.f32.mrf.mxu0
      %v2144 = vadd.f32 %v1539, %v2143
      %v2145 = vpop.f32.mrf.mxu0
      %2146 = vmatprep.mubr.bf16.mxu0 0
      %2147 = vmatmul.mubr.bf16.gmra.mxu0 %v1621
      %v2148 = vpop.f32.mrf.mxu0
      %v2149 = vadd.f32 %v1539, %v2148
      %v2150 = vpop.f32.mrf.mxu0
      %v2151 = vpop.f32.mrf.mxu0
      %v2152 = vadd.f32 %v1539, %v2151
      %v2153 = vpop.f32.mrf.mxu0
      %2154 = vmatprep.mubr.bf16.mxu0 0
      %2155 = vmatmul.mubr.bf16.gmra.mxu0 %v1624
      %v2156 = vpop.f32.mrf.mxu0
      %v2157 = vadd.f32 %v1539, %v2156
      %v2158 = vpop.f32.mrf.mxu0
      %v2159 = vpop.f32.mrf.mxu0
      %v2160 = vadd.f32 %v1539, %v2159
      %v2161 = vpop.f32.mrf.mxu0
      %2162 = vmatprep.mubr.bf16.mxu0 0
      %2163 = vmatmul.mubr.bf16.gmra.mxu0 %v1627
      %v2164 = vpop.f32.mrf.mxu0
      %v2165 = vadd.f32 %v1539, %v2164
      %v2166 = vpop.f32.mrf.mxu0
      %v2167 = vpop.f32.mrf.mxu0
      %v2168 = vadd.f32 %v1539, %v2167
      %v2169 = vpop.f32.mrf.mxu0
      %2170 = vmatprep.mubr.bf16.mxu0 0
      %2171 = vmatmul.mubr.bf16.gmra.mxu0 %v1630
      %v2172 = vpop.f32.mrf.mxu0
      %v2173 = vadd.f32 %v1539, %v2172
      %v2174 = vpop.f32.mrf.mxu0
      %v2175 = vpop.f32.mrf.mxu0
      %v2176 = vadd.f32 %v1539, %v2175
      %v2177 = vpop.f32.mrf.mxu0
      %2178 = vmatprep.mubr.bf16.mxu0 0
      %2179 = vmatmul.mubr.bf16.gmra.mxu0 %v1633
      %v2180 = vpop.f32.mrf.mxu0
      %v2181 = vadd.f32 %v1539, %v2180
      %v2182 = vpop.f32.mrf.mxu0
      %v2183 = vpop.f32.mrf.mxu0
      %v2184 = vadd.f32 %v1539, %v2183
      %v2185 = vpop.f32.mrf.mxu0
      %2186 = vmatprep.mubr.bf16.mxu0 0
      %2187 = vmatmul.mubr.bf16.gmra.mxu0 %v1636
      %v2188 = vpop.f32.mrf.mxu0
      %v2189 = vadd.f32 %v1539, %v2188
      %v2190 = vpop.f32.mrf.mxu0
      %v2191 = vpop.f32.mrf.mxu0
      %v2192 = vadd.f32 %v1539, %v2191
      %v2193 = vpop.f32.mrf.mxu0
      %2194 = vmatprep.mubr.bf16.mxu0 0
      %2195 = vmatmul.mubr.bf16.gmra.mxu0 %v1639
      %v2196 = vpop.f32.mrf.mxu0
      %v2197 = vadd.f32 %v1539, %v2196
      %v2198 = vpop.f32.mrf.mxu0
      %v2199 = vpop.f32.mrf.mxu0
      %v2200 = vadd.f32 %v1539, %v2199
      %v2201 = vpop.f32.mrf.mxu0
      %2202 = vmatprep.mubr.bf16.mxu0 0
      %2203 = vmatmul.mubr.bf16.gmra.mxu0 %v1642
      %v2204 = vpop.f32.mrf.mxu0
      %v2205 = vadd.f32 %v1539, %v2204
      %v2206 = vpop.f32.mrf.mxu0
      %v2207 = vpop.f32.mrf.mxu0
      %v2208 = vadd.f32 %v1539, %v2207
      %v2209 = vpop.f32.mrf.mxu0
      %2210 = vmatprep.mubr.bf16.mxu0 0
      %2211 = vmatmul.mubr.bf16.gmra.mxu0 %v1645
      %v2212 = vpop.f32.mrf.mxu0
      %v2213 = vadd.f32 %v1539, %v2212
      %v2214 = vpop.f32.mrf.mxu0
      %v2215 = vpop.f32.mrf.mxu0
      %v2216 = vadd.f32 %v1539, %v2215
      %v2217 = vpop.f32.mrf.mxu0
      %2218 = vmatprep.mubr.bf16.mxu0 0
      %2219 = vmatmul.mubr.bf16.gmra.mxu0 %v1648
      %v2220 = vpop.f32.mrf.mxu0
      %v2221 = vadd.f32 %v1539, %v2220
      %v2222 = vpop.f32.mrf.mxu0
      %v2223 = vpop.f32.mrf.mxu0
      %v2224 = vadd.f32 %v1539, %v2223
      %v2225 = vpop.f32.mrf.mxu0
      %2226 = vmatprep.mubr.bf16.mxu0 0
      %2227 = vmatmul.mubr.bf16.gmra.mxu0 %v1651
      %v2228 = vpop.f32.mrf.mxu0
      %v2229 = vadd.f32 %v1539, %v2228
      %v2230 = vpop.f32.mrf.mxu0
      %v2231 = vpop.f32.mrf.mxu0
      %v2232 = vadd.f32 %v1539, %v2231
      %v2233 = vpop.f32.mrf.mxu0
      %2234 = vmatprep.mubr.bf16.mxu0 0
      %2235 = vmatmul.mubr.bf16.gmra.mxu0 %v1654
      %v2236 = vpop.f32.mrf.mxu0
      %v2237 = vadd.f32 %v1539, %v2236
      %v2238 = vpop.f32.mrf.mxu0
      %v2239 = vpop.f32.mrf.mxu0
      %v2240 = vadd.f32 %v1539, %v2239
      %v2241 = vpop.f32.mrf.mxu0
      %2242 = vmatprep.mubr.bf16.mxu0 0
      %2243 = vmatmul.mubr.bf16.gmra.mxu0 %v1657
      %v2244 = vpop.f32.mrf.mxu0
      %v2245 = vadd.f32 %v1539, %v2244
      %v2246 = vpop.f32.mrf.mxu0
      %v2247 = vpop.f32.mrf.mxu0
      %v2248 = vadd.f32 %v1539, %v2247
      %v2249 = vpop.f32.mrf.mxu0
      %2250 = vmatprep.mubr.bf16.mxu0 0
      %2251 = vmatmul.mubr.bf16.gmra.mxu0 %v1660
      %v2252 = vpop.f32.mrf.mxu0
      %v2253 = vadd.f32 %v1539, %v2252
      %v2254 = vpop.f32.mrf.mxu0
      %v2255 = vpop.f32.mrf.mxu0
      %v2256 = vadd.f32 %v1539, %v2255
      %v2257 = vpop.f32.mrf.mxu0
      %2258 = vmatprep.mubr.bf16.mxu0 0
      %2259 = vmatmul.mubr.bf16.gmra.mxu0 %v1663
      %v2260 = vpop.f32.mrf.mxu0
      %v2261 = vadd.f32 %v1539, %v2260
      %v2262 = vpop.f32.mrf.mxu0
      %v2263 = vpop.f32.mrf.mxu0
      %v2264 = vadd.f32 %v1539, %v2263
      %v2265 = vpop.f32.mrf.mxu0
      %2266 = vmatprep.mubr.bf16.mxu0 0
      %2267 = vmatmul.mubr.bf16.gmra.mxu0 %v1666
      %v2268 = vpop.f32.mrf.mxu0
      %v2269 = vadd.f32 %v1539, %v2268
      %v2270 = vpop.f32.mrf.mxu0
      %v2271 = vpop.f32.mrf.mxu0
      %v2272 = vadd.f32 %v1539, %v2271
      %v2273 = vpop.f32.mrf.mxu0
      %2274 = vmatprep.mubr.bf16.mxu0 0
      %2275 = vmatmul.mubr.bf16.gmra.mxu0 %v1669
      %v2276 = vpop.f32.mrf.mxu0
      %v2277 = vadd.f32 %v1539, %v2276
      %v2278 = vpop.f32.mrf.mxu0
      %v2279 = vpop.f32.mrf.mxu0
      %v2280 = vadd.f32 %v1539, %v2279
      %v2281 = vpop.f32.mrf.mxu0
      %2282 = vmatprep.mubr.bf16.mxu0 0
      %2283 = vmatmul.mubr.bf16.gmra.mxu0 %v1672
      %v2284 = vpop.f32.mrf.mxu0
      %v2285 = vadd.f32 %v1539, %v2284
      %v2286 = vpop.f32.mrf.mxu0
      %v2287 = vpop.f32.mrf.mxu0
      %v2288 = vadd.f32 %v1539, %v2287
      %v2289 = vpop.f32.mrf.mxu0
      %2290 = vmatprep.mubr.bf16.mxu0 0
      %2291 = vmatmul.mubr.bf16.gmra.mxu0 %v1675
      %v2292 = vpop.f32.mrf.mxu0
      %v2293 = vadd.f32 %v1539, %v2292
      %v2294 = vpop.f32.mrf.mxu0
      %v2295 = vpop.f32.mrf.mxu0
      %v2296 = vadd.f32 %v1539, %v2295
      %v2297 = vpop.f32.mrf.mxu0
      %2298 = vmatprep.mubr.bf16.mxu0 0
      %2299 = vmatmul.mubr.bf16.gmra.mxu0 %v1678
      %v2300 = vpop.f32.mrf.mxu0
      %v2301 = vadd.f32 %v1539, %v2300
      %v2302 = vpop.f32.mrf.mxu0
      %v2303 = vpop.f32.mrf.mxu0
      %v2304 = vadd.f32 %v1539, %v2303
      %v2305 = vpop.f32.mrf.mxu0
      %2306 = vmatprep.mubr.bf16.mxu0 0
      %2307 = vmatmul.mubr.bf16.gmra.mxu0 %v1681
      %v2308 = vpop.f32.mrf.mxu0
      %v2309 = vadd.f32 %v1539, %v2308
      %v2310 = vpop.f32.mrf.mxu0
      %v2311 = vpop.f32.mrf.mxu0
      %v2312 = vadd.f32 %v1539, %v2311
      %v2313 = vpop.f32.mrf.mxu0
      %2314 = vmatprep.mubr.bf16.mxu0 0
      %2315 = vmatmul.mubr.bf16.gmra.mxu0 %v1684
      %v2316 = vpop.f32.mrf.mxu0
      %v2317 = vadd.f32 %v1539, %v2316
      %v2318 = vpop.f32.mrf.mxu0
      %v2319 = vpop.f32.mrf.mxu0
      %v2320 = vadd.f32 %v1539, %v2319
      %v2321 = vpop.f32.mrf.mxu0
      %2322 = vmatprep.mubr.bf16.mxu0 0
      %2323 = vmatmul.mubr.bf16.gmra.mxu0 %v1687
      %v2324 = vpop.f32.mrf.mxu0
      %v2325 = vadd.f32 %v1539, %v2324
      %v2326 = vpop.f32.mrf.mxu0
      %v2327 = vpop.f32.mrf.mxu0
      %v2328 = vadd.f32 %v1539, %v2327
      %v2329 = vpop.f32.mrf.mxu0
      %2330 = vmatprep.mubr.bf16.mxu0 0
      %2331 = vmatmul.mubr.bf16.gmra.mxu0 %v1690
      %v2332 = vpop.f32.mrf.mxu0
      %v2333 = vadd.f32 %v1539, %v2332
      %v2334 = vpop.f32.mrf.mxu0
      %v2335 = vpop.f32.mrf.mxu0
      %v2336 = vadd.f32 %v1539, %v2335
      %v2337 = vpop.f32.mrf.mxu0
      %2338 = vmatprep.mubr.bf16.mxu0 0
      %2339 = vmatmul.mubr.bf16.gmra.mxu0 %v1693
      %v2340 = vpop.f32.mrf.mxu0
      %v2341 = vadd.f32 %v1539, %v2340
      %v2342 = vpop.f32.mrf.mxu0
      %v2343 = vpop.f32.mrf.mxu0
      %v2344 = vadd.f32 %v1539, %v2343
      %v2345 = vpop.f32.mrf.mxu0
      %2346 = vmatprep.mubr.bf16.mxu0 0
      %2347 = vmatmul.mubr.bf16.gmra.mxu0 %v1696
      %v2348 = vpop.f32.mrf.mxu0
      %v2349 = vadd.f32 %v1539, %v2348
      %v2350 = vpop.f32.mrf.mxu0
      %v2351 = vpop.f32.mrf.mxu0
      %v2352 = vadd.f32 %v1539, %v2351
      %v2353 = vpop.f32.mrf.mxu0
      %2354 = vmatprep.mubr.bf16.mxu0 0
      %2355 = vmatmul.mubr.bf16.gmra.mxu0 %v1699
      %v2356 = vpop.f32.mrf.mxu0
      %v2357 = vadd.f32 %v1539, %v2356
      %v2358 = vpop.f32.mrf.mxu0
      %v2359 = vpop.f32.mrf.mxu0
      %v2360 = vadd.f32 %v1539, %v2359
      %v2361 = vpop.f32.mrf.mxu0
      %2362 = vmatprep.mubr.bf16.mxu0 0
      %2363 = vmatmul.mubr.bf16.gmra.mxu0 %v1702
      %v2364 = vpop.f32.mrf.mxu0
      %v2365 = vadd.f32 %v1539, %v2364
      %v2366 = vpop.f32.mrf.mxu0
      %v2367 = vpop.f32.mrf.mxu0
      %v2368 = vadd.f32 %v1539, %v2367
      %v2369 = vpop.f32.mrf.mxu0
      %2370 = vmatprep.mubr.bf16.mxu0 0
      %2371 = vmatmul.mubr.bf16.gmra.mxu0 %v1705
      %v2372 = vpop.f32.mrf.mxu0
      %v2373 = vadd.f32 %v1539, %v2372
      %v2374 = vpop.f32.mrf.mxu0
      %v2375 = vpop.f32.mrf.mxu0
      %v2376 = vadd.f32 %v1539, %v2375
      %v2377 = vpop.f32.mrf.mxu0
      %2378 = vmatprep.mubr.bf16.mxu0 0
      %2379 = vmatmul.mubr.bf16.gmra.mxu0 %v1708
      %v2380 = vpop.f32.mrf.mxu0
      %v2381 = vadd.f32 %v1539, %v2380
      %v2382 = vpop.f32.mrf.mxu0
      %v2383 = vpop.f32.mrf.mxu0
      %v2384 = vadd.f32 %v1539, %v2383
      %v2385 = vpop.f32.mrf.mxu0
      %2386 = vmatprep.mubr.bf16.mxu0 0
      %2387 = vmatmul.mubr.bf16.gmra.mxu0 %v1711
      %v2388 = vpop.f32.mrf.mxu0
      %v2389 = vadd.f32 %v1539, %v2388
      %v2390 = vpop.f32.mrf.mxu0
      %v2391 = vpop.f32.mrf.mxu0
      %v2392 = vadd.f32 %v1539, %v2391
      %v2393 = vpop.f32.mrf.mxu0
      %2394 = vmatprep.mubr.bf16.mxu0 0
      %2395 = vmatmul.mubr.bf16.gmra.mxu0 %v1714
      %v2396 = vpop.f32.mrf.mxu0
      %v2397 = vadd.f32 %v1539, %v2396
      %v2398 = vpop.f32.mrf.mxu0
      %v2399 = vpop.f32.mrf.mxu0
      %v2400 = vadd.f32 %v1539, %v2399
      %v2401 = vpop.f32.mrf.mxu0
      %2402 = vmatprep.mubr.bf16.mxu0 0
      %2403 = vmatmul.mubr.bf16.gmra.mxu0 %v1717
      %v2404 = vpop.f32.mrf.mxu0
      %v2405 = vadd.f32 %v1539, %v2404
      %v2406 = vpop.f32.mrf.mxu0
      %v2407 = vpop.f32.mrf.mxu0
      %v2408 = vadd.f32 %v1539, %v2407
      %v2409 = vpop.f32.mrf.mxu0
      %2410 = vmatprep.mubr.bf16.mxu0 0
      %2411 = vmatmul.mubr.bf16.gmra.mxu0 %v1720
      %v2412 = vpop.f32.mrf.mxu0
      %v2413 = vadd.f32 %v1539, %v2412
      %v2414 = vpop.f32.mrf.mxu0
      %v2415 = vpop.f32.mrf.mxu0
      %v2416 = vadd.f32 %v1539, %v2415
      %v2417 = vpop.f32.mrf.mxu0
      %2418 = vmatprep.mubr.bf16.mxu0 0
      %2419 = vmatmul.mubr.bf16.gmra.mxu0 %v1723
      %v2420 = vpop.f32.mrf.mxu0
      %v2421 = vadd.f32 %v1539, %v2420
      %v2422 = vpop.f32.mrf.mxu0
      %v2423 = vpop.f32.mrf.mxu0
      %v2424 = vadd.f32 %v1539, %v2423
      %v2425 = vpop.f32.mrf.mxu0
      %2426 = vmatprep.mubr.bf16.mxu0 0
      %2427 = vmatmul.mubr.bf16.gmra.mxu0 %v1726
      %v2428 = vpop.f32.mrf.mxu0
      %v2429 = vadd.f32 %v1539, %v2428
      %v2430 = vpop.f32.mrf.mxu0
      %v2431 = vpop.f32.mrf.mxu0
      %v2432 = vadd.f32 %v1539, %v2431
      %v2433 = vpop.f32.mrf.mxu0
      %2434 = vmatprep.mubr.bf16.mxu0 0
      %2435 = vmatmul.mubr.bf16.gmra.mxu0 %v1729
      %v2436 = vpop.f32.mrf.mxu0
      %v2437 = vadd.f32 %v1539, %v2436
      %v2438 = vpop.f32.mrf.mxu0
      %v2439 = vpop.f32.mrf.mxu0
      %v2440 = vadd.f32 %v1539, %v2439
      %v2441 = vpop.f32.mrf.mxu0
      %2442 = vmatprep.mubr.bf16.mxu0 0
      %2443 = vmatmul.mubr.bf16.gmra.mxu0 %v1732
      %v2444 = vpop.f32.mrf.mxu0
      %v2445 = vadd.f32 %v1539, %v2444
      %v2446 = vpop.f32.mrf.mxu0
      %v2447 = vpop.f32.mrf.mxu0
      %v2448 = vadd.f32 %v1539, %v2447
      %v2449 = vpop.f32.mrf.mxu0
      %2450 = vmatprep.mubr.bf16.mxu0 0
      %2451 = vmatmul.mubr.bf16.gmra.mxu0 %v1735
      %v2452 = vpop.f32.mrf.mxu0
      %v2453 = vadd.f32 %v1539, %v2452
      %v2454 = vpop.f32.mrf.mxu0
      %v2455 = vpop.f32.mrf.mxu0
      %v2456 = vadd.f32 %v1539, %v2455
      %v2457 = vpop.f32.mrf.mxu0
      %2458 = vmatprep.mubr.bf16.mxu0 0
      %2459 = vmatmul.mubr.bf16.gmra.mxu0 %v1738
      %v2460 = vpop.f32.mrf.mxu0
      %v2461 = vadd.f32 %v1539, %v2460
      %v2462 = vpop.f32.mrf.mxu0
      %v2463 = vpop.f32.mrf.mxu0
      %v2464 = vadd.f32 %v1539, %v2463
      %v2465 = vpop.f32.mrf.mxu0
      %2466 = vmatprep.mubr.bf16.mxu0 0
      %2467 = vmatmul.mubr.bf16.gmra.mxu0 %v1741
      %v2468 = vpop.f32.mrf.mxu0
      %v2469 = vadd.f32 %v1539, %v2468
      %v2470 = vpop.f32.mrf.mxu0
      %v2471 = vpop.f32.mrf.mxu0
      %v2472 = vadd.f32 %v1539, %v2471
      %v2473 = vpop.f32.mrf.mxu0
      %2474 = vmatprep.mubr.bf16.mxu0 0
      %2475 = vmatmul.mubr.bf16.gmra.mxu0 %v1744
      %v2476 = vpop.f32.mrf.mxu0
      %v2477 = vadd.f32 %v1539, %v2476
      %v2478 = vpop.f32.mrf.mxu0
      %v2479 = vpop.f32.mrf.mxu0
      %v2480 = vadd.f32 %v1539, %v2479
      %v2481 = vpop.f32.mrf.mxu0
      %2482 = vmatprep.mubr.bf16.mxu0 0
      %2483 = vmatmul.mubr.bf16.gmra.mxu0 %v1747
      %v2484 = vpop.f32.mrf.mxu0
      %v2485 = vadd.f32 %v1539, %v2484
      %v2486 = vpop.f32.mrf.mxu0
      %v2487 = vpop.f32.mrf.mxu0
      %v2488 = vadd.f32 %v1539, %v2487
      %v2489 = vpop.f32.mrf.mxu0
      %2490 = vmatprep.mubr.bf16.mxu0 0
      %2491 = vmatmul.mubr.bf16.gmra.mxu0 %v1750
      %v2492 = vpop.f32.mrf.mxu0
      %v2493 = vadd.f32 %v1539, %v2492
      %v2494 = vpop.f32.mrf.mxu0
      %v2495 = vpop.f32.mrf.mxu0
      %v2496 = vadd.f32 %v1539, %v2495
      %v2497 = vpop.f32.mrf.mxu0
      %2498 = vmatprep.mubr.bf16.mxu0 0
      %2499 = vmatmul.mubr.bf16.gmra.mxu0 %v1753
      %v2500 = vpop.f32.mrf.mxu0
      %v2501 = vadd.f32 %v1539, %v2500
      %v2502 = vpop.f32.mrf.mxu0
      %v2503 = vpop.f32.mrf.mxu0
      %v2504 = vadd.f32 %v1539, %v2503
      %v2505 = vpop.f32.mrf.mxu0
      %2506 = vmatprep.mubr.bf16.mxu0 0
      %2507 = vmatmul.mubr.bf16.gmra.mxu0 %v1756
      %v2508 = vpop.f32.mrf.mxu0
      %v2509 = vadd.f32 %v1539, %v2508
      %v2510 = vpop.f32.mrf.mxu0
      %v2511 = vpop.f32.mrf.mxu0
      %v2512 = vadd.f32 %v1539, %v2511
      %v2513 = vpop.f32.mrf.mxu0
      %2514 = vmatprep.mubr.bf16.mxu0 0
      %2515 = vmatmul.mubr.bf16.gmra.mxu0 %v1759
      %v2516 = vpop.f32.mrf.mxu0
      %v2517 = vadd.f32 %v1539, %v2516
      %v2518 = vpop.f32.mrf.mxu0
      %v2519 = vpop.f32.mrf.mxu0
      %v2520 = vadd.f32 %v1539, %v2519
      %v2521 = vpop.f32.mrf.mxu0
      %2522 = vmatprep.mubr.bf16.mxu0 0
      %2523 = vmatmul.mubr.bf16.gmra.mxu0 %v1762
      %v2524 = vpop.f32.mrf.mxu0
      %v2525 = vadd.f32 %v1539, %v2524
      %v2526 = vpop.f32.mrf.mxu0
      %v2527 = vpop.f32.mrf.mxu0
      %v2528 = vadd.f32 %v1539, %v2527
      %v2529 = vpop.f32.mrf.mxu0
      %2530 = vmatprep.mubr.bf16.mxu0 0
      %2531 = vmatmul.mubr.bf16.gmra.mxu0 %v1765
      %v2532 = vpop.f32.mrf.mxu0
      %v2533 = vadd.f32 %v1539, %v2532
      %v2534 = vpop.f32.mrf.mxu0
      %v2535 = vpop.f32.mrf.mxu0
      %v2536 = vadd.f32 %v1539, %v2535
      %v2537 = vpop.f32.mrf.mxu0
      %2538 = vmatprep.mubr.bf16.mxu0 0
      %2539 = vmatmul.mubr.bf16.gmra.mxu0 %v1768
      %v2540 = vpop.f32.mrf.mxu0
      %v2541 = vadd.f32 %v1539, %v2540
      %v2542 = vpop.f32.mrf.mxu0
      %v2543 = vpop.f32.mrf.mxu0
      %v2544 = vadd.f32 %v1539, %v2543
      %v2545 = vpop.f32.mrf.mxu0
      %2546 = vmatprep.mubr.bf16.mxu0 0
      %2547 = vmatmul.mubr.bf16.gmra.mxu0 %v1771
      %v2548 = vpop.f32.mrf.mxu0
      %v2549 = vadd.f32 %v1539, %v2548
      %v2550 = vpop.f32.mrf.mxu0
      %v2551 = vpop.f32.mrf.mxu0
      %v2552 = vadd.f32 %v1539, %v2551
      %v2553 = vpop.f32.mrf.mxu0
      %2554 = vmatprep.mubr.bf16.mxu0 0
      %2555 = vmatmul.mubr.bf16.gmra.mxu0 %v1774
      %v2556 = vpop.f32.mrf.mxu0
      %v2557 = vadd.f32 %v1539, %v2556
      %v2558 = vpop.f32.mrf.mxu0
      %v2559 = vpop.f32.mrf.mxu0
      %v2560 = vadd.f32 %v1539, %v2559
      %v2561 = vpop.f32.mrf.mxu0
      %2562 = vmatprep.mubr.bf16.mxu0 0
      %2563 = vmatmul.mubr.bf16.gmra.mxu0 %v1777
      %v2564 = vpop.f32.mrf.mxu0
      %v2565 = vadd.f32 %v1539, %v2564
      %v2566 = vpop.f32.mrf.mxu0
      %v2567 = vpop.f32.mrf.mxu0
      %v2568 = vadd.f32 %v1539, %v2567
      %v2569 = vpop.f32.mrf.mxu0
      %2570 = vmatprep.mubr.bf16.mxu0 0
      %2571 = vmatmul.mubr.bf16.gmra.mxu0 %v1780
      %v2572 = vpop.f32.mrf.mxu0
      %v2573 = vadd.f32 %v1539, %v2572
      %v2574 = vpop.f32.mrf.mxu0
      %v2575 = vpop.f32.mrf.mxu0
      %v2576 = vadd.f32 %v1539, %v2575
      %v2577 = vpop.f32.mrf.mxu0
      %2578 = vmatprep.mubr.bf16.mxu0 0
      %2579 = vmatmul.mubr.bf16.gmra.mxu0 %v1783
      %v2580 = vpop.f32.mrf.mxu0
      %v2581 = vadd.f32 %v1539, %v2580
      %v2582 = vpop.f32.mrf.mxu0
      %v2583 = vpop.f32.mrf.mxu0
      %v2584 = vadd.f32 %v1539, %v2583
      %v2585 = vpop.f32.mrf.mxu0
      %2586 = vmatprep.mubr.bf16.mxu0 0
      %2587 = vmatmul.mubr.bf16.gmra.mxu0 %v1786
      %v2588 = vpop.f32.mrf.mxu0
      %v2589 = vadd.f32 %v1539, %v2588
      %v2590 = vpop.f32.mrf.mxu0
      %v2591 = vpop.f32.mrf.mxu0
      %v2592 = vadd.f32 %v1539, %v2591
      %v2593 = vpop.f32.mrf.mxu0
      %2594 = vmatprep.mubr.bf16.mxu0 0
      %2595 = vmatmul.mubr.bf16.gmra.mxu0 %v1789
      %v2596 = vpop.f32.mrf.mxu0
      %v2597 = vadd.f32 %v1539, %v2596
      %v2598 = vpop.f32.mrf.mxu0
      %v2599 = vpop.f32.mrf.mxu0
      %v2600 = vadd.f32 %v1539, %v2599
      %v2601 = vpop.f32.mrf.mxu0
      %2602 = vmatprep.mubr.bf16.mxu0 0
      %2603 = vmatmul.mubr.bf16.gmra.mxu0 %v1792
      %v2604 = vpop.f32.mrf.mxu0
      %v2605 = vadd.f32 %v1539, %v2604
      %v2606 = vpop.f32.mrf.mxu0
      %v2607 = vpop.f32.mrf.mxu0
      %v2608 = vadd.f32 %v1539, %v2607
      %v2609 = vpop.f32.mrf.mxu0
      %2610 = vmatprep.mubr.bf16.mxu0 0
      %2611 = vmatmul.mubr.bf16.gmra.mxu0 %v1795
      %v2612 = vpop.f32.mrf.mxu0
      %v2613 = vadd.f32 %v1539, %v2612
      %v2614 = vpop.f32.mrf.mxu0
      %v2615 = vpop.f32.mrf.mxu0
      %v2616 = vadd.f32 %v1539, %v2615
      %v2617 = vpop.f32.mrf.mxu0
      %2618 = vmatprep.mubr.bf16.mxu0 0
      %2619 = vmatmul.mubr.bf16.gmra.mxu0 %v1798
      %v2620 = vpop.f32.mrf.mxu0
      %v2621 = vadd.f32 %v1539, %v2620
      %v2622 = vpop.f32.mrf.mxu0
      %v2623 = vpop.f32.mrf.mxu0
      %v2624 = vadd.f32 %v1539, %v2623
      %v2625 = vpop.f32.mrf.mxu0
      %2626 = vmatprep.mubr.bf16.mxu0 0
      %2627 = vmatmul.mubr.bf16.gmra.mxu0 %v1801
      %v2628 = vpop.f32.mrf.mxu0
      %v2629 = vadd.f32 %v1539, %v2628
      %v2630 = vpop.f32.mrf.mxu0
      %v2631 = vpop.f32.mrf.mxu0
      %v2632 = vadd.f32 %v1539, %v2631
      %v2633 = vpop.f32.mrf.mxu0
      %2634 = vmatprep.mubr.bf16.mxu0 0
      %2635 = vmatmul.mubr.bf16.gmra.mxu0 %v1804
      %v2636 = vpop.f32.mrf.mxu0
      %v2637 = vadd.f32 %v1539, %v2636
      %v2638 = vpop.f32.mrf.mxu0
      %v2639 = vpop.f32.mrf.mxu0
      %v2640 = vadd.f32 %v1539, %v2639
      %v2641 = vpop.f32.mrf.mxu0
      %2642 = vmatprep.mubr.bf16.mxu0 0
      %2643 = vmatmul.mubr.bf16.gmra.mxu0 %v1807
      %v2644 = vpop.f32.mrf.mxu0
      %v2645 = vadd.f32 %v1539, %v2644
      %v2646 = vpop.f32.mrf.mxu0
      %v2647 = vpop.f32.mrf.mxu0
      %v2648 = vadd.f32 %v1539, %v2647
      %v2649 = vpop.f32.mrf.mxu0
      %2650 = vmatprep.mubr.bf16.mxu0 0
      %2651 = vmatmul.mubr.bf16.gmra.mxu0 %v1810
      %v2652 = vpop.f32.mrf.mxu0
      %v2653 = vadd.f32 %v1539, %v2652
      %v2654 = vpop.f32.mrf.mxu0
      %v2655 = vpop.f32.mrf.mxu0
      %v2656 = vadd.f32 %v1539, %v2655
      %v2657 = vpop.f32.mrf.mxu0
      %2658 = vmatprep.mubr.bf16.mxu0 0
      %2659 = vmatmul.mubr.bf16.gmra.mxu0 %v1813
      %v2660 = vpop.f32.mrf.mxu0
      %v2661 = vadd.f32 %v1539, %v2660
      %v2662 = vpop.f32.mrf.mxu0
      %v2663 = vpop.f32.mrf.mxu0
      %v2664 = vadd.f32 %v1539, %v2663
      %v2665 = vpop.f32.mrf.mxu0
      %2666 = vmatprep.mubr.bf16.mxu0 0
      %2667 = vmatmul.mubr.bf16.gmra.mxu0 %v1816
      %v2668 = vpop.f32.mrf.mxu0
      %v2669 = vadd.f32 %v1539, %v2668
      %v2670 = vpop.f32.mrf.mxu0
      %v2671 = vpop.f32.mrf.mxu0
      %v2672 = vadd.f32 %v1539, %v2671
      %v2673 = vpop.f32.mrf.mxu0
      %2674 = vmatprep.mubr.bf16.mxu0 0
      %2675 = vmatmul.mubr.bf16.gmra.mxu0 %v1819
      %v2676 = vpop.f32.mrf.mxu0
      %v2677 = vadd.f32 %v1539, %v2676
      %v2678 = vpop.f32.mrf.mxu0
      %v2679 = vpop.f32.mrf.mxu0
      %v2680 = vadd.f32 %v1539, %v2679
      %v2681 = vpop.f32.mrf.mxu0
      %2682 = vmatprep.mubr.bf16.mxu0 0
      %2683 = vmatmul.mubr.bf16.gmra.mxu0 %v1822
      %v2684 = vpop.f32.mrf.mxu0
      %v2685 = vadd.f32 %v1539, %v2684
      %v2686 = vpop.f32.mrf.mxu0
      %v2687 = vpop.f32.mrf.mxu0
      %v2688 = vadd.f32 %v1539, %v2687
      %v2689 = vpop.f32.mrf.mxu0
      %2690 = vmatprep.mubr.bf16.mxu0 0
      %2691 = vmatmul.mubr.bf16.gmra.mxu0 %v1825
      %v2692 = vpop.f32.mrf.mxu0
      %v2693 = vadd.f32 %v1539, %v2692
      %v2694 = vpop.f32.mrf.mxu0
      %v2695 = vpop.f32.mrf.mxu0
      %v2696 = vadd.f32 %v1539, %v2695
      %v2697 = vpop.f32.mrf.mxu0
      %2698 = vmatprep.mubr.bf16.mxu0 0
      %2699 = vmatmul.mubr.bf16.gmra.mxu0 %v1828
      %v2700 = vpop.f32.mrf.mxu0
      %v2701 = vadd.f32 %v1539, %v2700
      %v2702 = vpop.f32.mrf.mxu0
      %v2703 = vpop.f32.mrf.mxu0
      %v2704 = vadd.f32 %v1539, %v2703
      %v2705 = vpop.f32.mrf.mxu0
      %2706 = vmatprep.mubr.bf16.mxu0 0
      %2707 = vmatmul.mubr.bf16.gmra.mxu0 %v1831
      %v2708 = vpop.f32.mrf.mxu0
      %v2709 = vadd.f32 %v1539, %v2708
      %v2710 = vpop.f32.mrf.mxu0
      %v2711 = vpop.f32.mrf.mxu0
      %v2712 = vadd.f32 %v1539, %v2711
      %v2713 = vpop.f32.mrf.mxu0
      %2714 = vmatprep.mubr.bf16.mxu0 0
      %2715 = vmatmul.mubr.bf16.gmra.mxu0 %v1834
      %v2716 = vpop.f32.mrf.mxu0
      %v2717 = vadd.f32 %v1539, %v2716
      %v2718 = vpop.f32.mrf.mxu0
      %v2719 = vpop.f32.mrf.mxu0
      %v2720 = vadd.f32 %v1539, %v2719
      %v2721 = vpop.f32.mrf.mxu0
      %2722 = vmatprep.mubr.bf16.mxu0 0
      %2723 = vmatmul.mubr.bf16.gmra.mxu0 %v1837
      %v2724 = vpop.f32.mrf.mxu0
      %v2725 = vadd.f32 %v1539, %v2724
      %v2726 = vpop.f32.mrf.mxu0
      %v2727 = vpop.f32.mrf.mxu0
      %v2728 = vadd.f32 %v1539, %v2727
      %v2729 = vpop.f32.mrf.mxu0
      %2730 = vmatprep.mubr.bf16.mxu0 0
      %2731 = vmatmul.mubr.bf16.gmra.mxu0 %v1840
      %v2732 = vpop.f32.mrf.mxu0
      %v2733 = vadd.f32 %v1539, %v2732
      %v2734 = vpop.f32.mrf.mxu0
      %v2735 = vpop.f32.mrf.mxu0
      %v2736 = vadd.f32 %v1539, %v2735
      %v2737 = vpop.f32.mrf.mxu0
      %2738 = vmatprep.mubr.bf16.mxu0 0
      %2739 = vmatmul.mubr.bf16.gmra.mxu0 %v1843
      %v2740 = vpop.f32.mrf.mxu0
      %v2741 = vadd.f32 %v1539, %v2740
      %v2742 = vpop.f32.mrf.mxu0
      %v2743 = vpop.f32.mrf.mxu0
      %v2744 = vadd.f32 %v1539, %v2743
      %v2745 = vpop.f32.mrf.mxu0
      %2746 = vmatprep.mubr.bf16.mxu0 0
      %2747 = vmatmul.mubr.bf16.gmra.mxu0 %v1846
      %v2748 = vpop.f32.mrf.mxu0
      %v2749 = vadd.f32 %v1539, %v2748
      %v2750 = vpop.f32.mrf.mxu0
      %v2751 = vpop.f32.mrf.mxu0
      %v2752 = vadd.f32 %v1539, %v2751
      %v2753 = vpop.f32.mrf.mxu0
      %2754 = vmatprep.mubr.bf16.mxu0 0
      %2755 = vmatmul.mubr.bf16.gmra.mxu0 %v1849
      %v2756 = vpop.f32.mrf.mxu0
      %v2757 = vadd.f32 %v1539, %v2756
      %v2758 = vpop.f32.mrf.mxu0
      %v2759 = vpop.f32.mrf.mxu0
      %v2760 = vadd.f32 %v1539, %v2759
      %v2761 = vpop.f32.mrf.mxu0
      %2762 = vmatprep.mubr.bf16.mxu0 0
      %2763 = vmatmul.mubr.bf16.gmra.mxu0 %v1852
      %v2764 = vpop.f32.mrf.mxu0
      %v2765 = vadd.f32 %v1539, %v2764
      %v2766 = vpop.f32.mrf.mxu0
      %v2767 = vpop.f32.mrf.mxu0
      %v2768 = vadd.f32 %v1539, %v2767
      %v2769 = vpop.f32.mrf.mxu0
      %2770 = vmatprep.mubr.bf16.mxu0 0
      %2771 = vmatmul.mubr.bf16.gmra.mxu0 %v1855
      %v2772 = vpop.f32.mrf.mxu0
      %v2773 = vadd.f32 %v1539, %v2772
      %v2774 = vpop.f32.mrf.mxu0
      %v2775 = vpop.f32.mrf.mxu0
      %v2776 = vadd.f32 %v1539, %v2775
      %v2777 = vpop.f32.mrf.mxu0
      %2778 = vmatprep.mubr.bf16.mxu0 0
      %2779 = vmatmul.mubr.bf16.gmra.mxu0 %v1858
      %v2780 = vpop.f32.mrf.mxu0
      %v2781 = vadd.f32 %v1539, %v2780
      %v2782 = vpop.f32.mrf.mxu0
      %v2783 = vpop.f32.mrf.mxu0
      %v2784 = vadd.f32 %v1539, %v2783
      %v2785 = vpop.f32.mrf.mxu0
      %2786 = vmatprep.mubr.bf16.mxu0 0
      %2787 = vmatmul.mubr.bf16.gmra.mxu0 %v1861
      %v2788 = vpop.f32.mrf.mxu0
      %v2789 = vadd.f32 %v1539, %v2788
      %v2790 = vpop.f32.mrf.mxu0
      %v2791 = vpop.f32.mrf.mxu0
      %v2792 = vadd.f32 %v1539, %v2791
      %v2793 = vpop.f32.mrf.mxu0
      %2794 = vmatprep.mubr.bf16.mxu0 0
      %2795 = vmatmul.mubr.bf16.gmra.mxu0 %v1864
      %v2796 = vpop.f32.mrf.mxu0
      %v2797 = vadd.f32 %v1539, %v2796
      %v2798 = vpop.f32.mrf.mxu0
      %v2799 = vpop.f32.mrf.mxu0
      %v2800 = vadd.f32 %v1539, %v2799
      %v2801 = vpop.f32.mrf.mxu0
      %2802 = vmatprep.mubr.bf16.mxu0 0
      %2803 = vmatmul.mubr.bf16.gmra.mxu0 %v1867
      %v2804 = vpop.f32.mrf.mxu0
      %v2805 = vadd.f32 %v1539, %v2804
      %v2806 = vpop.f32.mrf.mxu0
      %v2807 = vpop.f32.mrf.mxu0
      %v2808 = vadd.f32 %v1539, %v2807
      %v2809 = vpop.f32.mrf.mxu0
      %2810 = vmatprep.mubr.bf16.mxu0 0
      %2811 = vmatmul.mubr.bf16.gmra.mxu0 %v1870
      %v2812 = vpop.f32.mrf.mxu0
      %v2813 = vadd.f32 %v1539, %v2812
      %v2814 = vpop.f32.mrf.mxu0
      %v2815 = vpop.f32.mrf.mxu0
      %v2816 = vadd.f32 %v1539, %v2815
      %v2817 = vpop.f32.mrf.mxu0
      %2818 = vmatprep.mubr.bf16.mxu0 0
      %2819 = vmatmul.mubr.bf16.gmra.mxu0 %v1873
      %v2820 = vpop.f32.mrf.mxu0
      %v2821 = vadd.f32 %v1539, %v2820
      %v2822 = vpop.f32.mrf.mxu0
      %v2823 = vpop.f32.mrf.mxu0
      %v2824 = vadd.f32 %v1539, %v2823
      %v2825 = vpop.f32.mrf.mxu0
      %2826 = vmatprep.mubr.bf16.mxu0 0
      %2827 = vmatmul.mubr.bf16.gmra.mxu0 %v1876
      %v2828 = vpop.f32.mrf.mxu0
      %v2829 = vadd.f32 %v1539, %v2828
      %v2830 = vpop.f32.mrf.mxu0
      %v2831 = vpop.f32.mrf.mxu0
      %v2832 = vadd.f32 %v1539, %v2831
      %v2833 = vpop.f32.mrf.mxu0
      %2834 = vmatprep.mubr.bf16.mxu0 0
      %2835 = vmatmul.mubr.bf16.gmra.mxu0 %v1879
      %v2836 = vpop.f32.mrf.mxu0
      %v2837 = vadd.f32 %v1539, %v2836
      %v2838 = vpop.f32.mrf.mxu0
      %v2839 = vpop.f32.mrf.mxu0
      %v2840 = vadd.f32 %v1539, %v2839
      %v2841 = vpop.f32.mrf.mxu0
      %2842 = vmatprep.mubr.bf16.mxu0 0
      %2843 = vmatmul.mubr.bf16.gmra.mxu0 %v1882
      %v2844 = vpop.f32.mrf.mxu0
      %v2845 = vadd.f32 %v1539, %v2844
      %v2846 = vpop.f32.mrf.mxu0
      %v2847 = vpop.f32.mrf.mxu0
      %v2848 = vadd.f32 %v1539, %v2847
      %v2849 = vpop.f32.mrf.mxu0
      %2850 = vmatprep.mubr.bf16.mxu0 0
      %2851 = vmatmul.mubr.bf16.gmra.mxu0 %v1885
      %v2852 = vpop.f32.mrf.mxu0
      %v2853 = vadd.f32 %v1539, %v2852
      %v2854 = vpop.f32.mrf.mxu0
      %v2855 = vpop.f32.mrf.mxu0
      %v2856 = vadd.f32 %v1539, %v2855
      %v2857 = vpop.f32.mrf.mxu0
      %2858 = vmatprep.mubr.bf16.mxu0 0
      %2859 = vmatmul.mubr.bf16.gmra.mxu0 %v1888
      %v2860 = vpop.f32.mrf.mxu0
      %v2861 = vadd.f32 %v1539, %v2860
      %v2862 = vpop.f32.mrf.mxu0
      %v2863 = vpop.f32.mrf.mxu0
      %v2864 = vadd.f32 %v1539, %v2863
      %v2865 = vpop.f32.mrf.mxu0
      %2866 = vmatprep.mubr.bf16.mxu0 0
      %2867 = vmatmul.mubr.bf16.gmra.mxu0 %v1891
      %v2868 = vpop.f32.mrf.mxu0
      %v2869 = vadd.f32 %v1539, %v2868
      %v2870 = vpop.f32.mrf.mxu0
      %v2871 = vpop.f32.mrf.mxu0
      %v2872 = vadd.f32 %v1539, %v2871
      %v2873 = vpop.f32.mrf.mxu0
      %2874 = vmatprep.mubr.bf16.mxu0 0
      %2875 = vmatmul.mubr.bf16.gmra.mxu0 %v1894
      %v2876 = vpop.f32.mrf.mxu0
      %v2877 = vadd.f32 %v1539, %v2876
      %v2878 = vpop.f32.mrf.mxu0
      %v2879 = vpop.f32.mrf.mxu0
      %v2880 = vadd.f32 %v1539, %v2879
      %v2881 = vpop.f32.mrf.mxu0
      %2882 = vmatprep.mubr.bf16.mxu0 0
      %2883 = vmatmul.mubr.bf16.gmra.mxu0 %v1897
      %v2884 = vpop.f32.mrf.mxu0
      %v2885 = vadd.f32 %v1539, %v2884
      %v2886 = vpop.f32.mrf.mxu0
      %v2887 = vpop.f32.mrf.mxu0
      %v2888 = vadd.f32 %v1539, %v2887
      %v2889 = vpop.f32.mrf.mxu0
      %2890 = vmatprep.mubr.bf16.mxu0 0
      %2891 = vmatmul.mubr.bf16.gmra.mxu0 %v1900
      %v2892 = vpop.f32.mrf.mxu0
      %v2893 = vadd.f32 %v1539, %v2892
      %v2894 = vpop.f32.mrf.mxu0
      %v2895 = vpop.f32.mrf.mxu0
      %v2896 = vadd.f32 %v1539, %v2895
      %v2897 = vpop.f32.mrf.mxu0
      %2898 = vmatprep.mubr.bf16.mxu0 0
      %2899 = vmatmul.mubr.bf16.gmra.mxu0 %v1903
      %v2900 = vpop.f32.mrf.mxu0
      %v2901 = vadd.f32 %v1539, %v2900
      %v2902 = vpop.f32.mrf.mxu0
      %v2903 = vpop.f32.mrf.mxu0
      %v2904 = vadd.f32 %v1539, %v2903
      %v2905 = vpop.f32.mrf.mxu0
      %2906 = vmatprep.mubr.bf16.mxu0 0
      %2907 = vmatmul.mubr.bf16.gmra.mxu0 %v1906
      %v2908 = vpop.f32.mrf.mxu0
      %v2909 = vadd.f32 %v1539, %v2908
      %v2910 = vpop.f32.mrf.mxu0
      %v2911 = vpop.f32.mrf.mxu0
      %v2912 = vadd.f32 %v1539, %v2911
      %v2913 = vpop.f32.mrf.mxu0
      %2914 = vmatprep.mubr.bf16.mxu0 0
      %2915 = vmatmul.mubr.bf16.gmra.mxu0 %v1909
      %v2916 = vpop.f32.mrf.mxu0
      %v2917 = vadd.f32 %v1539, %v2916
      %v2918 = vpop.f32.mrf.mxu0
      %v2919 = vpop.f32.mrf.mxu0
      %v2920 = vadd.f32 %v1539, %v2919
      %v2921 = vpop.f32.mrf.mxu0
      %2922 = vmatprep.mubr.bf16.mxu0 0
      %2923 = vmatmul.mubr.bf16.gmra.mxu0 %v1912
      %v2924 = vpop.f32.mrf.mxu0
      %v2925 = vadd.f32 %v1539, %v2924
      %v2926 = vpop.f32.mrf.mxu0
      %v2927 = vpop.f32.mrf.mxu0
      %v2928 = vadd.f32 %v1539, %v2927
      %v2929 = vpop.f32.mrf.mxu0
      %2930 = vmatprep.mubr.bf16.mxu0 0
      %2931 = vmatmul.mubr.bf16.gmra.mxu0 %v1915
      %v2932 = vpop.f32.mrf.mxu0
      %v2933 = vadd.f32 %v1539, %v2932
      %v2934 = vpop.f32.mrf.mxu0
      %v2935 = vpop.f32.mrf.mxu0
      %v2936 = vadd.f32 %v1539, %v2935
      %v2937 = vpop.f32.mrf.mxu0
      %2938 = vmatprep.mubr.bf16.mxu0 0
      %2939 = vmatmul.mubr.bf16.gmra.mxu0 %v1918
      %v2940 = vpop.f32.mrf.mxu0
      %v2941 = vadd.f32 %v1539, %v2940
      %v2942 = vpop.f32.mrf.mxu0
      %v2943 = vpop.f32.mrf.mxu0
      %v2944 = vadd.f32 %v1539, %v2943
      %v2945 = vpop.f32.mrf.mxu0
      %2946 = vmatprep.mubr.bf16.mxu0 0
      %2947 = vmatmul.mubr.bf16.gmra.mxu0 %v1921
      %v2948 = vpop.f32.mrf.mxu0
      %v2949 = vadd.f32 %v1539, %v2948
      %v2950 = vpop.f32.mrf.mxu0
      %v2951 = vpop.f32.mrf.mxu0
      %v2952 = vadd.f32 %v1539, %v2951
      %v2953 = vpop.f32.mrf.mxu0
      %2954 = vmatprep.mubr.bf16.mxu0 0
      %2955 = vmatmul.mubr.bf16.gmra.mxu0 %v1924
      %v2956 = vpop.f32.mrf.mxu0
      %v2957 = vadd.f32 %v1539, %v2956
      %v2958 = vpop.f32.mrf.mxu0
      %v2959 = vpop.f32.mrf.mxu0
      %v2960 = vadd.f32 %v1539, %v2959
      %v2961 = vpop.f32.mrf.mxu0
      %2962 = vmatprep.mubr.bf16.mxu0 0
      %2963 = vmatmul.mubr.bf16.gmra.mxu0 %v1927
      %v2964 = vpop.f32.mrf.mxu0
      %v2965 = vadd.f32 %v1539, %v2964
      %v2966 = vpop.f32.mrf.mxu0
      %v2967 = vpop.f32.mrf.mxu0
      %v2968 = vadd.f32 %v1539, %v2967
      %v2969 = vpop.f32.mrf.mxu0
      %2970 = vmatprep.mubr.bf16.mxu0 0
      %2971 = vmatmul.mubr.bf16.gmra.mxu0 %v1930
      %v2972 = vpop.f32.mrf.mxu0
      %v2973 = vadd.f32 %v1539, %v2972
      %v2974 = vpop.f32.mrf.mxu0
      %v2975 = vpop.f32.mrf.mxu0
      %v2976 = vadd.f32 %v1539, %v2975
      %v2977 = vpop.f32.mrf.mxu0
      %2978 = vmatprep.mubr.bf16.mxu0 0
      %2979 = vmatmul.mubr.bf16.gmra.mxu0 %v1933
      %v2980 = vpop.f32.mrf.mxu0
      %v2981 = vadd.f32 %v1539, %v2980
      %v2982 = vpop.f32.mrf.mxu0
      %v2983 = vpop.f32.mrf.mxu0
      %v2984 = vadd.f32 %v1539, %v2983
      %v2985 = vpop.f32.mrf.mxu0
      %2986 = vmatprep.mubr.bf16.mxu0 0
      %2987 = vmatmul.mubr.bf16.gmra.mxu0 %v1936
      %v2988 = vpop.f32.mrf.mxu0
      %v2989 = vadd.f32 %v1539, %v2988
      %v2990 = vpop.f32.mrf.mxu0
      %v2991 = vpop.f32.mrf.mxu0
      %v2992 = vadd.f32 %v1539, %v2991
      %v2993 = vpop.f32.mrf.mxu0
      %2994 = vdwg.mxu0
      %v2995 = vpack.c.bf16 %v1976, %v1973
      %v2996 = vpack.c.bf16 %v1984, %v1981
      %v2997 = vpack.c.bf16 %v1992, %v1989
      %v2998 = vpack.c.bf16 %v2000, %v1997
      %v2999 = vpack.c.bf16 %v2008, %v2005
      %v3000 = vpack.c.bf16 %v2016, %v2013
      %v3001 = vpack.c.bf16 %v2024, %v2021
      %v3002 = vpack.c.bf16 %v2032, %v2029
      %v3003 = vpack.c.bf16 %v2040, %v2037
      %v3004 = vpack.c.bf16 %v2048, %v2045
      %v3005 = vpack.c.bf16 %v2056, %v2053
      %v3006 = vpack.c.bf16 %v2064, %v2061
      %v3007 = vpack.c.bf16 %v2072, %v2069
      %v3008 = vpack.c.bf16 %v2080, %v2077
      %v3009 = vpack.c.bf16 %v2088, %v2085
      %v3010 = vpack.c.bf16 %v2096, %v2093
      %v3011 = vpack.c.bf16 %v2104, %v2101
      %v3012 = vpack.c.bf16 %v2112, %v2109
      %v3013 = vpack.c.bf16 %v2120, %v2117
      %v3014 = vpack.c.bf16 %v2128, %v2125
      %v3015 = vpack.c.bf16 %v2136, %v2133
      %v3016 = vpack.c.bf16 %v2144, %v2141
      %v3017 = vpack.c.bf16 %v2152, %v2149
      %v3018 = vpack.c.bf16 %v2160, %v2157
      %v3019 = vpack.c.bf16 %v2168, %v2165
      %v3020 = vpack.c.bf16 %v2176, %v2173
      %v3021 = vpack.c.bf16 %v2184, %v2181
      %v3022 = vpack.c.bf16 %v2192, %v2189
      %v3023 = vpack.c.bf16 %v2200, %v2197
      %v3024 = vpack.c.bf16 %v2208, %v2205
      %v3025 = vpack.c.bf16 %v2216, %v2213
      %v3026 = vpack.c.bf16 %v2224, %v2221
      %v3027 = vpack.c.bf16 %v2232, %v2229
      %v3028 = vpack.c.bf16 %v2240, %v2237
      %v3029 = vpack.c.bf16 %v2248, %v2245
      %v3030 = vpack.c.bf16 %v2256, %v2253
      %v3031 = vpack.c.bf16 %v2264, %v2261
      %v3032 = vpack.c.bf16 %v2272, %v2269
      %v3033 = vpack.c.bf16 %v2280, %v2277
      %v3034 = vpack.c.bf16 %v2288, %v2285
      %v3035 = vpack.c.bf16 %v2296, %v2293
      %v3036 = vpack.c.bf16 %v2304, %v2301
      %v3037 = vpack.c.bf16 %v2312, %v2309
      %v3038 = vpack.c.bf16 %v2320, %v2317
      %v3039 = vpack.c.bf16 %v2328, %v2325
      %v3040 = vpack.c.bf16 %v2336, %v2333
      %v3041 = vpack.c.bf16 %v2344, %v2341
      %v3042 = vpack.c.bf16 %v2352, %v2349
      %v3043 = vpack.c.bf16 %v2360, %v2357
      %v3044 = vpack.c.bf16 %v2368, %v2365
      %v3045 = vpack.c.bf16 %v2376, %v2373
      %v3046 = vpack.c.bf16 %v2384, %v2381
      %v3047 = vpack.c.bf16 %v2392, %v2389
      %v3048 = vpack.c.bf16 %v2400, %v2397
      %v3049 = vpack.c.bf16 %v2408, %v2405
      %v3050 = vpack.c.bf16 %v2416, %v2413
      %v3051 = vpack.c.bf16 %v2424, %v2421
      %v3052 = vpack.c.bf16 %v2432, %v2429
      %v3053 = vpack.c.bf16 %v2440, %v2437
      %v3054 = vpack.c.bf16 %v2448, %v2445
      %v3055 = vpack.c.bf16 %v2456, %v2453
      %v3056 = vpack.c.bf16 %v2464, %v2461
      %v3057 = vpack.c.bf16 %v2472, %v2469
      %v3058 = vpack.c.bf16 %v2480, %v2477
      %v3059 = vpack.c.bf16 %v2488, %v2485
      %v3060 = vpack.c.bf16 %v2496, %v2493
      %v3061 = vpack.c.bf16 %v2504, %v2501
      %v3062 = vpack.c.bf16 %v2512, %v2509
      %v3063 = vpack.c.bf16 %v2520, %v2517
      %v3064 = vpack.c.bf16 %v2528, %v2525
      %v3065 = vpack.c.bf16 %v2536, %v2533
      %v3066 = vpack.c.bf16 %v2544, %v2541
      %v3067 = vpack.c.bf16 %v2552, %v2549
      %v3068 = vpack.c.bf16 %v2560, %v2557
      %v3069 = vpack.c.bf16 %v2568, %v2565
      %v3070 = vpack.c.bf16 %v2576, %v2573
      %v3071 = vpack.c.bf16 %v2584, %v2581
      %v3072 = vpack.c.bf16 %v2592, %v2589
      %v3073 = vpack.c.bf16 %v2600, %v2597
      %v3074 = vpack.c.bf16 %v2608, %v2605
      %v3075 = vpack.c.bf16 %v2616, %v2613
      %v3076 = vpack.c.bf16 %v2624, %v2621
      %v3077 = vpack.c.bf16 %v2632, %v2629
      %v3078 = vpack.c.bf16 %v2640, %v2637
      %v3079 = vpack.c.bf16 %v2648, %v2645
      %v3080 = vpack.c.bf16 %v2656, %v2653
      %v3081 = vpack.c.bf16 %v2664, %v2661
      %v3082 = vpack.c.bf16 %v2672, %v2669
      %v3083 = vpack.c.bf16 %v2680, %v2677
      %v3084 = vpack.c.bf16 %v2688, %v2685
      %v3085 = vpack.c.bf16 %v2696, %v2693
      %v3086 = vpack.c.bf16 %v2704, %v2701
      %v3087 = vpack.c.bf16 %v2712, %v2709
      %v3088 = vpack.c.bf16 %v2720, %v2717
      %v3089 = vpack.c.bf16 %v2728, %v2725
      %v3090 = vpack.c.bf16 %v2736, %v2733
      %v3091 = vpack.c.bf16 %v2744, %v2741
      %v3092 = vpack.c.bf16 %v2752, %v2749
      %v3093 = vpack.c.bf16 %v2760, %v2757
      %v3094 = vpack.c.bf16 %v2768, %v2765
      %v3095 = vpack.c.bf16 %v2776, %v2773
      %v3096 = vpack.c.bf16 %v2784, %v2781
      %v3097 = vpack.c.bf16 %v2792, %v2789
      %v3098 = vpack.c.bf16 %v2800, %v2797
      %v3099 = vpack.c.bf16 %v2808, %v2805
      %v3100 = vpack.c.bf16 %v2816, %v2813
      %v3101 = vpack.c.bf16 %v2824, %v2821
      %v3102 = vpack.c.bf16 %v2832, %v2829
      %v3103 = vpack.c.bf16 %v2840, %v2837
      %v3104 = vpack.c.bf16 %v2848, %v2845
      %v3105 = vpack.c.bf16 %v2856, %v2853
      %v3106 = vpack.c.bf16 %v2864, %v2861
      %v3107 = vpack.c.bf16 %v2872, %v2869
      %v3108 = vpack.c.bf16 %v2880, %v2877
      %v3109 = vpack.c.bf16 %v2888, %v2885
      %v3110 = vpack.c.bf16 %v2896, %v2893
      %v3111 = vpack.c.bf16 %v2904, %v2901
      %v3112 = vpack.c.bf16 %v2912, %v2909
      %v3113 = vpack.c.bf16 %v2920, %v2917
      %v3114 = vpack.c.bf16 %v2928, %v2925
      %v3115 = vpack.c.bf16 %v2936, %v2933
      %v3116 = vpack.c.bf16 %v2944, %v2941
      %v3117 = vpack.c.bf16 %v2952, %v2949
      %v3118 = vpack.c.bf16 %v2960, %v2957
      %v3119 = vpack.c.bf16 %v2968, %v2965
      %v3120 = vpack.c.bf16 %v2976, %v2973
      %v3121 = vpack.c.bf16 %v2984, %v2981
      %v3122 = vpack.c.bf16 %v2992, %v2989
      %v3251 = vunpack.c.l.b16 %v2995
      %v3252 = vunpack.c.h.b16 %v2995
      %v3253 = vunpack.c.l.b16 %v2996
      %v3254 = vunpack.c.h.b16 %v2996
      %v3255 = vunpack.c.l.b16 %v2997
      %v3256 = vunpack.c.h.b16 %v2997
      %v3257 = vunpack.c.l.b16 %v2998
      %v3258 = vunpack.c.h.b16 %v2998
      %v3259 = vunpack.c.l.b16 %v2999
      %v3260 = vunpack.c.h.b16 %v2999
      %v3261 = vunpack.c.l.b16 %v3000
      %v3262 = vunpack.c.h.b16 %v3000
      %v3263 = vunpack.c.l.b16 %v3001
      %v3264 = vunpack.c.h.b16 %v3001
      %v3265 = vunpack.c.l.b16 %v3002
      %v3266 = vunpack.c.h.b16 %v3002
      %v3267 = vunpack.c.l.b16 %v3003
      %v3268 = vunpack.c.h.b16 %v3003
      %v3269 = vunpack.c.l.b16 %v3004
      %v3270 = vunpack.c.h.b16 %v3004
      %v3271 = vunpack.c.l.b16 %v3005
      %v3272 = vunpack.c.h.b16 %v3005
      %v3273 = vunpack.c.l.b16 %v3006
      %v3274 = vunpack.c.h.b16 %v3006
      %v3275 = vunpack.c.l.b16 %v3007
      %v3276 = vunpack.c.h.b16 %v3007
      %v3277 = vunpack.c.l.b16 %v3008
      %v3278 = vunpack.c.h.b16 %v3008
      %v3279 = vunpack.c.l.b16 %v3009
      %v3280 = vunpack.c.h.b16 %v3009
      %v3281 = vunpack.c.l.b16 %v3010
      %v3282 = vunpack.c.h.b16 %v3010
      %v3283 = vunpack.c.l.b16 %v3011
      %v3284 = vunpack.c.h.b16 %v3011
      %v3285 = vunpack.c.l.b16 %v3012
      %v3286 = vunpack.c.h.b16 %v3012
      %v3287 = vunpack.c.l.b16 %v3013
      %v3288 = vunpack.c.h.b16 %v3013
      %v3289 = vunpack.c.l.b16 %v3014
      %v3290 = vunpack.c.h.b16 %v3014
      %v3291 = vunpack.c.l.b16 %v3015
      %v3292 = vunpack.c.h.b16 %v3015
      %v3293 = vunpack.c.l.b16 %v3016
      %v3294 = vunpack.c.h.b16 %v3016
      %v3295 = vunpack.c.l.b16 %v3017
      %v3296 = vunpack.c.h.b16 %v3017
      %v3297 = vunpack.c.l.b16 %v3018
      %v3298 = vunpack.c.h.b16 %v3018
      %v3299 = vunpack.c.l.b16 %v3019
      %v3300 = vunpack.c.h.b16 %v3019
      %v3301 = vunpack.c.l.b16 %v3020
      %v3302 = vunpack.c.h.b16 %v3020
      %v3303 = vunpack.c.l.b16 %v3021
      %v3304 = vunpack.c.h.b16 %v3021
      %v3305 = vunpack.c.l.b16 %v3022
      %v3306 = vunpack.c.h.b16 %v3022
      %v3307 = vunpack.c.l.b16 %v3023
      %v3308 = vunpack.c.h.b16 %v3023
      %v3309 = vunpack.c.l.b16 %v3024
      %v3310 = vunpack.c.h.b16 %v3024
      %v3311 = vunpack.c.l.b16 %v3025
      %v3312 = vunpack.c.h.b16 %v3025
      %v3313 = vunpack.c.l.b16 %v3026
      %v3314 = vunpack.c.h.b16 %v3026
      %v3315 = vunpack.c.l.b16 %v3027
      %v3316 = vunpack.c.h.b16 %v3027
      %v3317 = vunpack.c.l.b16 %v3028
      %v3318 = vunpack.c.h.b16 %v3028
      %v3319 = vunpack.c.l.b16 %v3029
      %v3320 = vunpack.c.h.b16 %v3029
      %v3321 = vunpack.c.l.b16 %v3030
      %v3322 = vunpack.c.h.b16 %v3030
      %v3323 = vunpack.c.l.b16 %v3031
      %v3324 = vunpack.c.h.b16 %v3031
      %v3325 = vunpack.c.l.b16 %v3032
      %v3326 = vunpack.c.h.b16 %v3032
      %v3327 = vunpack.c.l.b16 %v3033
      %v3328 = vunpack.c.h.b16 %v3033
      %v3329 = vunpack.c.l.b16 %v3034
      %v3330 = vunpack.c.h.b16 %v3034
      %v3331 = vunpack.c.l.b16 %v3035
      %v3332 = vunpack.c.h.b16 %v3035
      %v3333 = vunpack.c.l.b16 %v3036
      %v3334 = vunpack.c.h.b16 %v3036
      %v3335 = vunpack.c.l.b16 %v3037
      %v3336 = vunpack.c.h.b16 %v3037
      %v3337 = vunpack.c.l.b16 %v3038
      %v3338 = vunpack.c.h.b16 %v3038
      %v3339 = vunpack.c.l.b16 %v3039
      %v3340 = vunpack.c.h.b16 %v3039
      %v3341 = vunpack.c.l.b16 %v3040
      %v3342 = vunpack.c.h.b16 %v3040
      %v3343 = vunpack.c.l.b16 %v3041
      %v3344 = vunpack.c.h.b16 %v3041
      %v3345 = vunpack.c.l.b16 %v3042
      %v3346 = vunpack.c.h.b16 %v3042
      %v3347 = vunpack.c.l.b16 %v3043
      %v3348 = vunpack.c.h.b16 %v3043
      %v3349 = vunpack.c.l.b16 %v3044
      %v3350 = vunpack.c.h.b16 %v3044
      %v3351 = vunpack.c.l.b16 %v3045
      %v3352 = vunpack.c.h.b16 %v3045
      %v3353 = vunpack.c.l.b16 %v3046
      %v3354 = vunpack.c.h.b16 %v3046
      %v3355 = vunpack.c.l.b16 %v3047
      %v3356 = vunpack.c.h.b16 %v3047
      %v3357 = vunpack.c.l.b16 %v3048
      %v3358 = vunpack.c.h.b16 %v3048
      %v3359 = vunpack.c.l.b16 %v3049
      %v3360 = vunpack.c.h.b16 %v3049
      %v3361 = vunpack.c.l.b16 %v3050
      %v3362 = vunpack.c.h.b16 %v3050
      %v3363 = vunpack.c.l.b16 %v3051
      %v3364 = vunpack.c.h.b16 %v3051
      %v3365 = vunpack.c.l.b16 %v3052
      %v3366 = vunpack.c.h.b16 %v3052
      %v3367 = vunpack.c.l.b16 %v3053
      %v3368 = vunpack.c.h.b16 %v3053
      %v3369 = vunpack.c.l.b16 %v3054
      %v3370 = vunpack.c.h.b16 %v3054
      %v3371 = vunpack.c.l.b16 %v3055
      %v3372 = vunpack.c.h.b16 %v3055
      %v3373 = vunpack.c.l.b16 %v3056
      %v3374 = vunpack.c.h.b16 %v3056
      %v3375 = vunpack.c.l.b16 %v3057
      %v3376 = vunpack.c.h.b16 %v3057
      %v3377 = vunpack.c.l.b16 %v3058
      %v3378 = vunpack.c.h.b16 %v3058
      %v3379 = vunpack.c.l.b16 %v3059
      %v3380 = vunpack.c.h.b16 %v3059
      %v3381 = vunpack.c.l.b16 %v3060
      %v3382 = vunpack.c.h.b16 %v3060
      %v3383 = vunpack.c.l.b16 %v3061
      %v3384 = vunpack.c.h.b16 %v3061
      %v3385 = vunpack.c.l.b16 %v3062
      %v3386 = vunpack.c.h.b16 %v3062
      %v3387 = vunpack.c.l.b16 %v3063
      %v3388 = vunpack.c.h.b16 %v3063
      %v3389 = vunpack.c.l.b16 %v3064
      %v3390 = vunpack.c.h.b16 %v3064
      %v3391 = vunpack.c.l.b16 %v3065
      %v3392 = vunpack.c.h.b16 %v3065
      %v3393 = vunpack.c.l.b16 %v3066
      %v3394 = vunpack.c.h.b16 %v3066
      %v3395 = vunpack.c.l.b16 %v3067
      %v3396 = vunpack.c.h.b16 %v3067
      %v3397 = vunpack.c.l.b16 %v3068
      %v3398 = vunpack.c.h.b16 %v3068
      %v3399 = vunpack.c.l.b16 %v3069
      %v3400 = vunpack.c.h.b16 %v3069
      %v3401 = vunpack.c.l.b16 %v3070
      %v3402 = vunpack.c.h.b16 %v3070
      %v3403 = vunpack.c.l.b16 %v3071
      %v3404 = vunpack.c.h.b16 %v3071
      %v3405 = vunpack.c.l.b16 %v3072
      %v3406 = vunpack.c.h.b16 %v3072
      %v3407 = vunpack.c.l.b16 %v3073
      %v3408 = vunpack.c.h.b16 %v3073
      %v3409 = vunpack.c.l.b16 %v3074
      %v3410 = vunpack.c.h.b16 %v3074
      %v3411 = vunpack.c.l.b16 %v3075
      %v3412 = vunpack.c.h.b16 %v3075
      %v3413 = vunpack.c.l.b16 %v3076
      %v3414 = vunpack.c.h.b16 %v3076
      %v3415 = vunpack.c.l.b16 %v3077
      %v3416 = vunpack.c.h.b16 %v3077
      %v3417 = vunpack.c.l.b16 %v3078
      %v3418 = vunpack.c.h.b16 %v3078
      %v3419 = vunpack.c.l.b16 %v3079
      %v3420 = vunpack.c.h.b16 %v3079
      %v3421 = vunpack.c.l.b16 %v3080
      %v3422 = vunpack.c.h.b16 %v3080
      %v3423 = vunpack.c.l.b16 %v3081
      %v3424 = vunpack.c.h.b16 %v3081
      %v3425 = vunpack.c.l.b16 %v3082
      %v3426 = vunpack.c.h.b16 %v3082
      %v3427 = vunpack.c.l.b16 %v3083
      %v3428 = vunpack.c.h.b16 %v3083
      %v3429 = vunpack.c.l.b16 %v3084
      %v3430 = vunpack.c.h.b16 %v3084
      %v3431 = vunpack.c.l.b16 %v3085
      %v3432 = vunpack.c.h.b16 %v3085
      %v3433 = vunpack.c.l.b16 %v3086
      %v3434 = vunpack.c.h.b16 %v3086
      %v3435 = vunpack.c.l.b16 %v3087
      %v3436 = vunpack.c.h.b16 %v3087
      %v3437 = vunpack.c.l.b16 %v3088
      %v3438 = vunpack.c.h.b16 %v3088
      %v3439 = vunpack.c.l.b16 %v3089
      %v3440 = vunpack.c.h.b16 %v3089
      %v3441 = vunpack.c.l.b16 %v3090
      %v3442 = vunpack.c.h.b16 %v3090
      %v3443 = vunpack.c.l.b16 %v3091
      %v3444 = vunpack.c.h.b16 %v3091
      %v3445 = vunpack.c.l.b16 %v3092
      %v3446 = vunpack.c.h.b16 %v3092
      %v3447 = vunpack.c.l.b16 %v3093
      %v3448 = vunpack.c.h.b16 %v3093
      %v3449 = vunpack.c.l.b16 %v3094
      %v3450 = vunpack.c.h.b16 %v3094
      %v3451 = vunpack.c.l.b16 %v3095
      %v3452 = vunpack.c.h.b16 %v3095
      %v3453 = vunpack.c.l.b16 %v3096
      %v3454 = vunpack.c.h.b16 %v3096
      %v3455 = vunpack.c.l.b16 %v3097
      %v3456 = vunpack.c.h.b16 %v3097
      %v3457 = vunpack.c.l.b16 %v3098
      %v3458 = vunpack.c.h.b16 %v3098
      %v3459 = vunpack.c.l.b16 %v3099
      %v3460 = vunpack.c.h.b16 %v3099
      %v3461 = vunpack.c.l.b16 %v3100
      %v3462 = vunpack.c.h.b16 %v3100
      %v3463 = vunpack.c.l.b16 %v3101
      %v3464 = vunpack.c.h.b16 %v3101
      %v3465 = vunpack.c.l.b16 %v3102
      %v3466 = vunpack.c.h.b16 %v3102
      %v3467 = vunpack.c.l.b16 %v3103
      %v3468 = vunpack.c.h.b16 %v3103
      %v3469 = vunpack.c.l.b16 %v3104
      %v3470 = vunpack.c.h.b16 %v3104
      %v3471 = vunpack.c.l.b16 %v3105
      %v3472 = vunpack.c.h.b16 %v3105
      %v3473 = vunpack.c.l.b16 %v3106
      %v3474 = vunpack.c.h.b16 %v3106
      %v3475 = vunpack.c.l.b16 %v3107
      %v3476 = vunpack.c.h.b16 %v3107
      %v3477 = vunpack.c.l.b16 %v3108
      %v3478 = vunpack.c.h.b16 %v3108
      %v3479 = vunpack.c.l.b16 %v3109
      %v3480 = vunpack.c.h.b16 %v3109
      %v3481 = vunpack.c.l.b16 %v3110
      %v3482 = vunpack.c.h.b16 %v3110
      %v3483 = vunpack.c.l.b16 %v3111
      %v3484 = vunpack.c.h.b16 %v3111
      %v3485 = vunpack.c.l.b16 %v3112
      %v3486 = vunpack.c.h.b16 %v3112
      %v3487 = vunpack.c.l.b16 %v3113
      %v3488 = vunpack.c.h.b16 %v3113
      %v3489 = vunpack.c.l.b16 %v3114
      %v3490 = vunpack.c.h.b16 %v3114
      %v3491 = vunpack.c.l.b16 %v3115
      %v3492 = vunpack.c.h.b16 %v3115
      %v3493 = vunpack.c.l.b16 %v3116
      %v3494 = vunpack.c.h.b16 %v3116
      %v3495 = vunpack.c.l.b16 %v3117
      %v3496 = vunpack.c.h.b16 %v3117
      %v3497 = vunpack.c.l.b16 %v3118
      %v3498 = vunpack.c.h.b16 %v3118
      %v3499 = vunpack.c.l.b16 %v3119
      %v3500 = vunpack.c.h.b16 %v3119
      %v3501 = vunpack.c.l.b16 %v3120
      %v3502 = vunpack.c.h.b16 %v3120
      %v3503 = vunpack.c.l.b16 %v3121
      %v3504 = vunpack.c.h.b16 %v3121
      %v3505 = vunpack.c.l.b16 %v3122
      %v3506 = vunpack.c.h.b16 %v3122
      %v3507 = vpack.c.b16 %v3251, %v3251
      %v3508 = vpack.c.b16 %v3252, %v3252
      %v3509 = vpack.c.b16 %v3253, %v3253
      %v3510 = vpack.c.b16 %v3254, %v3254
      %v3511 = vpack.c.b16 %v3255, %v3255
      %v3512 = vpack.c.b16 %v3256, %v3256
      %v3513 = vpack.c.b16 %v3257, %v3257
      %v3514 = vpack.c.b16 %v3258, %v3258
      %v3515 = vpack.c.b16 %v3259, %v3259
      %v3516 = vpack.c.b16 %v3260, %v3260
      %v3517 = vpack.c.b16 %v3261, %v3261
      %v3518 = vpack.c.b16 %v3262, %v3262
      %v3519 = vpack.c.b16 %v3263, %v3263
      %v3520 = vpack.c.b16 %v3264, %v3264
      %v3521 = vpack.c.b16 %v3265, %v3265
      %v3522 = vpack.c.b16 %v3266, %v3266
      %v3523 = vpack.c.b16 %v3267, %v3267
      %v3524 = vpack.c.b16 %v3268, %v3268
      %v3525 = vpack.c.b16 %v3269, %v3269
      %v3526 = vpack.c.b16 %v3270, %v3270
      %v3527 = vpack.c.b16 %v3271, %v3271
      %v3528 = vpack.c.b16 %v3272, %v3272
      %v3529 = vpack.c.b16 %v3273, %v3273
      %v3530 = vpack.c.b16 %v3274, %v3274
      %v3531 = vpack.c.b16 %v3275, %v3275
      %v3532 = vpack.c.b16 %v3276, %v3276
      %v3533 = vpack.c.b16 %v3277, %v3277
      %v3534 = vpack.c.b16 %v3278, %v3278
      %v3535 = vpack.c.b16 %v3279, %v3279
      %v3536 = vpack.c.b16 %v3280, %v3280
      %v3537 = vpack.c.b16 %v3281, %v3281
      %v3538 = vpack.c.b16 %v3282, %v3282
      %v3539 = vpack.c.b16 %v3283, %v3283
      %v3540 = vpack.c.b16 %v3284, %v3284
      %v3541 = vpack.c.b16 %v3285, %v3285
      %v3542 = vpack.c.b16 %v3286, %v3286
      %v3543 = vpack.c.b16 %v3287, %v3287
      %v3544 = vpack.c.b16 %v3288, %v3288
      %v3545 = vpack.c.b16 %v3289, %v3289
      %v3546 = vpack.c.b16 %v3290, %v3290
      %v3547 = vpack.c.b16 %v3291, %v3291
      %v3548 = vpack.c.b16 %v3292, %v3292
      %v3549 = vpack.c.b16 %v3293, %v3293
      %v3550 = vpack.c.b16 %v3294, %v3294
      %v3551 = vpack.c.b16 %v3295, %v3295
      %v3552 = vpack.c.b16 %v3296, %v3296
      %v3553 = vpack.c.b16 %v3297, %v3297
      %v3554 = vpack.c.b16 %v3298, %v3298
      %v3555 = vpack.c.b16 %v3299, %v3299
      %v3556 = vpack.c.b16 %v3300, %v3300
      %v3557 = vpack.c.b16 %v3301, %v3301
      %v3558 = vpack.c.b16 %v3302, %v3302
      %v3559 = vpack.c.b16 %v3303, %v3303
      %v3560 = vpack.c.b16 %v3304, %v3304
      %v3561 = vpack.c.b16 %v3305, %v3305
      %v3562 = vpack.c.b16 %v3306, %v3306
      %v3563 = vpack.c.b16 %v3307, %v3307
      %v3564 = vpack.c.b16 %v3308, %v3308
      %v3565 = vpack.c.b16 %v3309, %v3309
      %v3566 = vpack.c.b16 %v3310, %v3310
      %v3567 = vpack.c.b16 %v3311, %v3311
      %v3568 = vpack.c.b16 %v3312, %v3312
      %v3569 = vpack.c.b16 %v3313, %v3313
      %v3570 = vpack.c.b16 %v3314, %v3314
      %v3571 = vpack.c.b16 %v3315, %v3315
      %v3572 = vpack.c.b16 %v3316, %v3316
      %v3573 = vpack.c.b16 %v3317, %v3317
      %v3574 = vpack.c.b16 %v3318, %v3318
      %v3575 = vpack.c.b16 %v3319, %v3319
      %v3576 = vpack.c.b16 %v3320, %v3320
      %v3577 = vpack.c.b16 %v3321, %v3321
      %v3578 = vpack.c.b16 %v3322, %v3322
      %v3579 = vpack.c.b16 %v3323, %v3323
      %v3580 = vpack.c.b16 %v3324, %v3324
      %v3581 = vpack.c.b16 %v3325, %v3325
      %v3582 = vpack.c.b16 %v3326, %v3326
      %v3583 = vpack.c.b16 %v3327, %v3327
      %v3584 = vpack.c.b16 %v3328, %v3328
      %v3585 = vpack.c.b16 %v3329, %v3329
      %v3586 = vpack.c.b16 %v3330, %v3330
      %v3587 = vpack.c.b16 %v3331, %v3331
      %v3588 = vpack.c.b16 %v3332, %v3332
      %v3589 = vpack.c.b16 %v3333, %v3333
      %v3590 = vpack.c.b16 %v3334, %v3334
      %v3591 = vpack.c.b16 %v3335, %v3335
      %v3592 = vpack.c.b16 %v3336, %v3336
      %v3593 = vpack.c.b16 %v3337, %v3337
      %v3594 = vpack.c.b16 %v3338, %v3338
      %v3595 = vpack.c.b16 %v3339, %v3339
      %v3596 = vpack.c.b16 %v3340, %v3340
      %v3597 = vpack.c.b16 %v3341, %v3341
      %v3598 = vpack.c.b16 %v3342, %v3342
      %v3599 = vpack.c.b16 %v3343, %v3343
      %v3600 = vpack.c.b16 %v3344, %v3344
      %v3601 = vpack.c.b16 %v3345, %v3345
      %v3602 = vpack.c.b16 %v3346, %v3346
      %v3603 = vpack.c.b16 %v3347, %v3347
      %v3604 = vpack.c.b16 %v3348, %v3348
      %v3605 = vpack.c.b16 %v3349, %v3349
      %v3606 = vpack.c.b16 %v3350, %v3350
      %v3607 = vpack.c.b16 %v3351, %v3351
      %v3608 = vpack.c.b16 %v3352, %v3352
      %v3609 = vpack.c.b16 %v3353, %v3353
      %v3610 = vpack.c.b16 %v3354, %v3354
      %v3611 = vpack.c.b16 %v3355, %v3355
      %v3612 = vpack.c.b16 %v3356, %v3356
      %v3613 = vpack.c.b16 %v3357, %v3357
      %v3614 = vpack.c.b16 %v3358, %v3358
      %v3615 = vpack.c.b16 %v3359, %v3359
      %v3616 = vpack.c.b16 %v3360, %v3360
      %v3617 = vpack.c.b16 %v3361, %v3361
      %v3618 = vpack.c.b16 %v3362, %v3362
      %v3619 = vpack.c.b16 %v3363, %v3363
      %v3620 = vpack.c.b16 %v3364, %v3364
      %v3621 = vpack.c.b16 %v3365, %v3365
      %v3622 = vpack.c.b16 %v3366, %v3366
      %v3623 = vpack.c.b16 %v3367, %v3367
      %v3624 = vpack.c.b16 %v3368, %v3368
      %v3625 = vpack.c.b16 %v3369, %v3369
      %v3626 = vpack.c.b16 %v3370, %v3370
      %v3627 = vpack.c.b16 %v3371, %v3371
      %v3628 = vpack.c.b16 %v3372, %v3372
      %v3629 = vpack.c.b16 %v3373, %v3373
      %v3630 = vpack.c.b16 %v3374, %v3374
      %v3631 = vpack.c.b16 %v3375, %v3375
      %v3632 = vpack.c.b16 %v3376, %v3376
      %v3633 = vpack.c.b16 %v3377, %v3377
      %v3634 = vpack.c.b16 %v3378, %v3378
      %v3635 = vpack.c.b16 %v3379, %v3379
      %v3636 = vpack.c.b16 %v3380, %v3380
      %v3637 = vpack.c.b16 %v3381, %v3381
      %v3638 = vpack.c.b16 %v3382, %v3382
      %v3639 = vpack.c.b16 %v3383, %v3383
      %v3640 = vpack.c.b16 %v3384, %v3384
      %v3641 = vpack.c.b16 %v3385, %v3385
      %v3642 = vpack.c.b16 %v3386, %v3386
      %v3643 = vpack.c.b16 %v3387, %v3387
      %v3644 = vpack.c.b16 %v3388, %v3388
      %v3645 = vpack.c.b16 %v3389, %v3389
      %v3646 = vpack.c.b16 %v3390, %v3390
      %v3647 = vpack.c.b16 %v3391, %v3391
      %v3648 = vpack.c.b16 %v3392, %v3392
      %v3649 = vpack.c.b16 %v3393, %v3393
      %v3650 = vpack.c.b16 %v3394, %v3394
      %v3651 = vpack.c.b16 %v3395, %v3395
      %v3652 = vpack.c.b16 %v3396, %v3396
      %v3653 = vpack.c.b16 %v3397, %v3397
      %v3654 = vpack.c.b16 %v3398, %v3398
      %v3655 = vpack.c.b16 %v3399, %v3399
      %v3656 = vpack.c.b16 %v3400, %v3400
      %v3657 = vpack.c.b16 %v3401, %v3401
      %v3658 = vpack.c.b16 %v3402, %v3402
      %v3659 = vpack.c.b16 %v3403, %v3403
      %v3660 = vpack.c.b16 %v3404, %v3404
      %v3661 = vpack.c.b16 %v3405, %v3405
      %v3662 = vpack.c.b16 %v3406, %v3406
      %v3663 = vpack.c.b16 %v3407, %v3407
      %v3664 = vpack.c.b16 %v3408, %v3408
      %v3665 = vpack.c.b16 %v3409, %v3409
      %v3666 = vpack.c.b16 %v3410, %v3410
      %v3667 = vpack.c.b16 %v3411, %v3411
      %v3668 = vpack.c.b16 %v3412, %v3412
      %v3669 = vpack.c.b16 %v3413, %v3413
      %v3670 = vpack.c.b16 %v3414, %v3414
      %v3671 = vpack.c.b16 %v3415, %v3415
      %v3672 = vpack.c.b16 %v3416, %v3416
      %v3673 = vpack.c.b16 %v3417, %v3417
      %v3674 = vpack.c.b16 %v3418, %v3418
      %v3675 = vpack.c.b16 %v3419, %v3419
      %v3676 = vpack.c.b16 %v3420, %v3420
      %v3677 = vpack.c.b16 %v3421, %v3421
      %v3678 = vpack.c.b16 %v3422, %v3422
      %v3679 = vpack.c.b16 %v3423, %v3423
      %v3680 = vpack.c.b16 %v3424, %v3424
      %v3681 = vpack.c.b16 %v3425, %v3425
      %v3682 = vpack.c.b16 %v3426, %v3426
      %v3683 = vpack.c.b16 %v3427, %v3427
      %v3684 = vpack.c.b16 %v3428, %v3428
      %v3685 = vpack.c.b16 %v3429, %v3429
      %v3686 = vpack.c.b16 %v3430, %v3430
      %v3687 = vpack.c.b16 %v3431, %v3431
      %v3688 = vpack.c.b16 %v3432, %v3432
      %v3689 = vpack.c.b16 %v3433, %v3433
      %v3690 = vpack.c.b16 %v3434, %v3434
      %v3691 = vpack.c.b16 %v3435, %v3435
      %v3692 = vpack.c.b16 %v3436, %v3436
      %v3693 = vpack.c.b16 %v3437, %v3437
      %v3694 = vpack.c.b16 %v3438, %v3438
      %v3695 = vpack.c.b16 %v3439, %v3439
      %v3696 = vpack.c.b16 %v3440, %v3440
      %v3697 = vpack.c.b16 %v3441, %v3441
      %v3698 = vpack.c.b16 %v3442, %v3442
      %v3699 = vpack.c.b16 %v3443, %v3443
      %v3700 = vpack.c.b16 %v3444, %v3444
      %v3701 = vpack.c.b16 %v3445, %v3445
      %v3702 = vpack.c.b16 %v3446, %v3446
      %v3703 = vpack.c.b16 %v3447, %v3447
      %v3704 = vpack.c.b16 %v3448, %v3448
      %v3705 = vpack.c.b16 %v3449, %v3449
      %v3706 = vpack.c.b16 %v3450, %v3450
      %v3707 = vpack.c.b16 %v3451, %v3451
      %v3708 = vpack.c.b16 %v3452, %v3452
      %v3709 = vpack.c.b16 %v3453, %v3453
      %v3710 = vpack.c.b16 %v3454, %v3454
      %v3711 = vpack.c.b16 %v3455, %v3455
      %v3712 = vpack.c.b16 %v3456, %v3456
      %v3713 = vpack.c.b16 %v3457, %v3457
      %v3714 = vpack.c.b16 %v3458, %v3458
      %v3715 = vpack.c.b16 %v3459, %v3459
      %v3716 = vpack.c.b16 %v3460, %v3460
      %v3717 = vpack.c.b16 %v3461, %v3461
      %v3718 = vpack.c.b16 %v3462, %v3462
      %v3719 = vpack.c.b16 %v3463, %v3463
      %v3720 = vpack.c.b16 %v3464, %v3464
      %v3721 = vpack.c.b16 %v3465, %v3465
      %v3722 = vpack.c.b16 %v3466, %v3466
      %v3723 = vpack.c.b16 %v3467, %v3467
      %v3724 = vpack.c.b16 %v3468, %v3468
      %v3725 = vpack.c.b16 %v3469, %v3469
      %v3726 = vpack.c.b16 %v3470, %v3470
      %v3727 = vpack.c.b16 %v3471, %v3471
      %v3728 = vpack.c.b16 %v3472, %v3472
      %v3729 = vpack.c.b16 %v3473, %v3473
      %v3730 = vpack.c.b16 %v3474, %v3474
      %v3731 = vpack.c.b16 %v3475, %v3475
      %v3732 = vpack.c.b16 %v3476, %v3476
      %v3733 = vpack.c.b16 %v3477, %v3477
      %v3734 = vpack.c.b16 %v3478, %v3478
      %v3735 = vpack.c.b16 %v3479, %v3479
      %v3736 = vpack.c.b16 %v3480, %v3480
      %v3737 = vpack.c.b16 %v3481, %v3481
      %v3738 = vpack.c.b16 %v3482, %v3482
      %v3739 = vpack.c.b16 %v3483, %v3483
      %v3740 = vpack.c.b16 %v3484, %v3484
      %v3741 = vpack.c.b16 %v3485, %v3485
      %v3742 = vpack.c.b16 %v3486, %v3486
      %v3743 = vpack.c.b16 %v3487, %v3487
      %v3744 = vpack.c.b16 %v3488, %v3488
      %v3745 = vpack.c.b16 %v3489, %v3489
      %v3746 = vpack.c.b16 %v3490, %v3490
      %v3747 = vpack.c.b16 %v3491, %v3491
      %v3748 = vpack.c.b16 %v3492, %v3492
      %v3749 = vpack.c.b16 %v3493, %v3493
      %v3750 = vpack.c.b16 %v3494, %v3494
      %v3751 = vpack.c.b16 %v3495, %v3495
      %v3752 = vpack.c.b16 %v3496, %v3496
      %v3753 = vpack.c.b16 %v3497, %v3497
      %v3754 = vpack.c.b16 %v3498, %v3498
      %v3755 = vpack.c.b16 %v3499, %v3499
      %v3756 = vpack.c.b16 %v3500, %v3500
      %v3757 = vpack.c.b16 %v3501, %v3501
      %v3758 = vpack.c.b16 %v3502, %v3502
      %v3759 = vpack.c.b16 %v3503, %v3503
      %v3760 = vpack.c.b16 %v3504, %v3504
      %v3761 = vpack.c.b16 %v3505, %v3505
      %v3762 = vpack.c.b16 %v3506, %v3506
      %vm4019 = vcmask 158720
      %4020 = vst.msk [vmem:[%s226] sm:$0xf] %vm4019, %v3507
      %4021 = vst.msk [vmem:[%s226 + $0x4] sm:$0xf] %vm4019, %v3508
      %4022 = vst.msk [vmem:[%s226 + $0x8] sm:$0xf] %vm4019, %v3509
      %4023 = vst.msk [vmem:[%s226 + $0xc] sm:$0xf] %vm4019, %v3510
      %4024 = vst.msk [vmem:[%s226 + $0x10] sm:$0xf] %vm4019, %v3511
      %4025 = vst.msk [vmem:[%s226 + $0x14] sm:$0xf] %vm4019, %v3512
      %4026 = vst.msk [vmem:[%s226 + $0x18] sm:$0xf] %vm4019, %v3513
      %4027 = vst.msk [vmem:[%s226 + $0x1c] sm:$0xf] %vm4019, %v3514
      %4028 = vst.msk [vmem:[%s226 + $0x20] sm:$0xf] %vm4019, %v3515
      %4029 = vst.msk [vmem:[%s226 + $0x24] sm:$0xf] %vm4019, %v3516
      %4030 = vst.msk [vmem:[%s226 + $0x28] sm:$0xf] %vm4019, %v3517
      %4031 = vst.msk [vmem:[%s226 + $0x2c] sm:$0xf] %vm4019, %v3518
      %4032 = vst.msk [vmem:[%s226 + $0x30] sm:$0xf] %vm4019, %v3519
      %4033 = vst.msk [vmem:[%s226 + $0x34] sm:$0xf] %vm4019, %v3520
      %4034 = vst.msk [vmem:[%s226 + $0x38] sm:$0xf] %vm4019, %v3521
      %4035 = vst.msk [vmem:[%s226 + $0x3c] sm:$0xf] %vm4019, %v3522
      %4036 = vst.msk [vmem:[%s226 + $0x40] sm:$0xf] %vm4019, %v3523
      %4037 = vst.msk [vmem:[%s226 + $0x44] sm:$0xf] %vm4019, %v3524
      %4038 = vst.msk [vmem:[%s226 + $0x48] sm:$0xf] %vm4019, %v3525
      %4039 = vst.msk [vmem:[%s226 + $0x4c] sm:$0xf] %vm4019, %v3526
      %4040 = vst.msk [vmem:[%s226 + $0x50] sm:$0xf] %vm4019, %v3527
      %4041 = vst.msk [vmem:[%s226 + $0x54] sm:$0xf] %vm4019, %v3528
      %4042 = vst.msk [vmem:[%s226 + $0x58] sm:$0xf] %vm4019, %v3529
      %4043 = vst.msk [vmem:[%s226 + $0x5c] sm:$0xf] %vm4019, %v3530
      %4044 = vst.msk [vmem:[%s226 + $0x60] sm:$0xf] %vm4019, %v3531
      %4045 = vst.msk [vmem:[%s226 + $0x64] sm:$0xf] %vm4019, %v3532
      %4046 = vst.msk [vmem:[%s226 + $0x68] sm:$0xf] %vm4019, %v3533
      %4047 = vst.msk [vmem:[%s226 + $0x6c] sm:$0xf] %vm4019, %v3534
      %4048 = vst.msk [vmem:[%s226 + $0x70] sm:$0xf] %vm4019, %v3535
      %4049 = vst.msk [vmem:[%s226 + $0x74] sm:$0xf] %vm4019, %v3536
      %4050 = vst.msk [vmem:[%s226 + $0x78] sm:$0xf] %vm4019, %v3537
      %4051 = vst.msk [vmem:[%s226 + $0x7c] sm:$0xf] %vm4019, %v3538
      %4052 = vst.msk [vmem:[%s226 + $0x80] sm:$0xf] %vm4019, %v3539
      %4053 = vst.msk [vmem:[%s226 + $0x84] sm:$0xf] %vm4019, %v3540
      %4054 = vst.msk [vmem:[%s226 + $0x88] sm:$0xf] %vm4019, %v3541
      %4055 = vst.msk [vmem:[%s226 + $0x8c] sm:$0xf] %vm4019, %v3542
      %4056 = vst.msk [vmem:[%s226 + $0x90] sm:$0xf] %vm4019, %v3543
      %4057 = vst.msk [vmem:[%s226 + $0x94] sm:$0xf] %vm4019, %v3544
      %4058 = vst.msk [vmem:[%s226 + $0x98] sm:$0xf] %vm4019, %v3545
      %4059 = vst.msk [vmem:[%s226 + $0x9c] sm:$0xf] %vm4019, %v3546
      %4060 = vst.msk [vmem:[%s226 + $0xa0] sm:$0xf] %vm4019, %v3547
      %4061 = vst.msk [vmem:[%s226 + $0xa4] sm:$0xf] %vm4019, %v3548
      %4062 = vst.msk [vmem:[%s226 + $0xa8] sm:$0xf] %vm4019, %v3549
      %4063 = vst.msk [vmem:[%s226 + $0xac] sm:$0xf] %vm4019, %v3550
      %4064 = vst.msk [vmem:[%s226 + $0xb0] sm:$0xf] %vm4019, %v3551
      %4065 = vst.msk [vmem:[%s226 + $0xb4] sm:$0xf] %vm4019, %v3552
      %4066 = vst.msk [vmem:[%s226 + $0xb8] sm:$0xf] %vm4019, %v3553
      %4067 = vst.msk [vmem:[%s226 + $0xbc] sm:$0xf] %vm4019, %v3554
      %4068 = vst.msk [vmem:[%s226 + $0xc0] sm:$0xf] %vm4019, %v3555
      %4069 = vst.msk [vmem:[%s226 + $0xc4] sm:$0xf] %vm4019, %v3556
      %4070 = vst.msk [vmem:[%s226 + $0xc8] sm:$0xf] %vm4019, %v3557
      %4071 = vst.msk [vmem:[%s226 + $0xcc] sm:$0xf] %vm4019, %v3558
      %4072 = vst.msk [vmem:[%s226 + $0xd0] sm:$0xf] %vm4019, %v3559
      %4073 = vst.msk [vmem:[%s226 + $0xd4] sm:$0xf] %vm4019, %v3560
      %4074 = vst.msk [vmem:[%s226 + $0xd8] sm:$0xf] %vm4019, %v3561
      %4075 = vst.msk [vmem:[%s226 + $0xdc] sm:$0xf] %vm4019, %v3562
      %4076 = vst.msk [vmem:[%s226 + $0xe0] sm:$0xf] %vm4019, %v3563
      %4077 = vst.msk [vmem:[%s226 + $0xe4] sm:$0xf] %vm4019, %v3564
      %4078 = vst.msk [vmem:[%s226 + $0xe8] sm:$0xf] %vm4019, %v3565
      %4079 = vst.msk [vmem:[%s226 + $0xec] sm:$0xf] %vm4019, %v3566
      %4080 = vst.msk [vmem:[%s226 + $0xf0] sm:$0xf] %vm4019, %v3567
      %4081 = vst.msk [vmem:[%s226 + $0xf4] sm:$0xf] %vm4019, %v3568
      %4082 = vst.msk [vmem:[%s226 + $0xf8] sm:$0xf] %vm4019, %v3569
      %4083 = vst.msk [vmem:[%s226 + $0xfc] sm:$0xf] %vm4019, %v3570
      %4084 = vst.msk [vmem:[%s226 + $0x100] sm:$0xf] %vm4019, %v3571
      %4085 = vst.msk [vmem:[%s226 + $0x104] sm:$0xf] %vm4019, %v3572
      %4086 = vst.msk [vmem:[%s226 + $0x108] sm:$0xf] %vm4019, %v3573
      %4087 = vst.msk [vmem:[%s226 + $0x10c] sm:$0xf] %vm4019, %v3574
      %4088 = vst.msk [vmem:[%s226 + $0x110] sm:$0xf] %vm4019, %v3575
      %4089 = vst.msk [vmem:[%s226 + $0x114] sm:$0xf] %vm4019, %v3576
      %4090 = vst.msk [vmem:[%s226 + $0x118] sm:$0xf] %vm4019, %v3577
      %4091 = vst.msk [vmem:[%s226 + $0x11c] sm:$0xf] %vm4019, %v3578
      %4092 = vst.msk [vmem:[%s226 + $0x120] sm:$0xf] %vm4019, %v3579
      %4093 = vst.msk [vmem:[%s226 + $0x124] sm:$0xf] %vm4019, %v3580
      %4094 = vst.msk [vmem:[%s226 + $0x128] sm:$0xf] %vm4019, %v3581
      %4095 = vst.msk [vmem:[%s226 + $0x12c] sm:$0xf] %vm4019, %v3582
      %4096 = vst.msk [vmem:[%s226 + $0x130] sm:$0xf] %vm4019, %v3583
      %4097 = vst.msk [vmem:[%s226 + $0x134] sm:$0xf] %vm4019, %v3584
      %4098 = vst.msk [vmem:[%s226 + $0x138] sm:$0xf] %vm4019, %v3585
      %4099 = vst.msk [vmem:[%s226 + $0x13c] sm:$0xf] %vm4019, %v3586
      %4100 = vst.msk [vmem:[%s226 + $0x140] sm:$0xf] %vm4019, %v3587
      %4101 = vst.msk [vmem:[%s226 + $0x144] sm:$0xf] %vm4019, %v3588
      %4102 = vst.msk [vmem:[%s226 + $0x148] sm:$0xf] %vm4019, %v3589
      %4103 = vst.msk [vmem:[%s226 + $0x14c] sm:$0xf] %vm4019, %v3590
      %4104 = vst.msk [vmem:[%s226 + $0x150] sm:$0xf] %vm4019, %v3591
      %4105 = vst.msk [vmem:[%s226 + $0x154] sm:$0xf] %vm4019, %v3592
      %4106 = vst.msk [vmem:[%s226 + $0x158] sm:$0xf] %vm4019, %v3593
      %4107 = vst.msk [vmem:[%s226 + $0x15c] sm:$0xf] %vm4019, %v3594
      %4108 = vst.msk [vmem:[%s226 + $0x160] sm:$0xf] %vm4019, %v3595
      %4109 = vst.msk [vmem:[%s226 + $0x164] sm:$0xf] %vm4019, %v3596
      %4110 = vst.msk [vmem:[%s226 + $0x168] sm:$0xf] %vm4019, %v3597
      %4111 = vst.msk [vmem:[%s226 + $0x16c] sm:$0xf] %vm4019, %v3598
      %4112 = vst.msk [vmem:[%s226 + $0x170] sm:$0xf] %vm4019, %v3599
      %4113 = vst.msk [vmem:[%s226 + $0x174] sm:$0xf] %vm4019, %v3600
      %4114 = vst.msk [vmem:[%s226 + $0x178] sm:$0xf] %vm4019, %v3601
      %4115 = vst.msk [vmem:[%s226 + $0x17c] sm:$0xf] %vm4019, %v3602
      %4116 = vst.msk [vmem:[%s226 + $0x180] sm:$0xf] %vm4019, %v3603
      %4117 = vst.msk [vmem:[%s226 + $0x184] sm:$0xf] %vm4019, %v3604
      %4118 = vst.msk [vmem:[%s226 + $0x188] sm:$0xf] %vm4019, %v3605
      %4119 = vst.msk [vmem:[%s226 + $0x18c] sm:$0xf] %vm4019, %v3606
      %4120 = vst.msk [vmem:[%s226 + $0x190] sm:$0xf] %vm4019, %v3607
      %4121 = vst.msk [vmem:[%s226 + $0x194] sm:$0xf] %vm4019, %v3608
      %4122 = vst.msk [vmem:[%s226 + $0x198] sm:$0xf] %vm4019, %v3609
      %4123 = vst.msk [vmem:[%s226 + $0x19c] sm:$0xf] %vm4019, %v3610
      %4124 = vst.msk [vmem:[%s226 + $0x1a0] sm:$0xf] %vm4019, %v3611
      %4125 = vst.msk [vmem:[%s226 + $0x1a4] sm:$0xf] %vm4019, %v3612
      %4126 = vst.msk [vmem:[%s226 + $0x1a8] sm:$0xf] %vm4019, %v3613
      %4127 = vst.msk [vmem:[%s226 + $0x1ac] sm:$0xf] %vm4019, %v3614
      %4128 = vst.msk [vmem:[%s226 + $0x1b0] sm:$0xf] %vm4019, %v3615
      %4129 = vst.msk [vmem:[%s226 + $0x1b4] sm:$0xf] %vm4019, %v3616
      %4130 = vst.msk [vmem:[%s226 + $0x1b8] sm:$0xf] %vm4019, %v3617
      %4131 = vst.msk [vmem:[%s226 + $0x1bc] sm:$0xf] %vm4019, %v3618
      %4132 = vst.msk [vmem:[%s226 + $0x1c0] sm:$0xf] %vm4019, %v3619
      %4133 = vst.msk [vmem:[%s226 + $0x1c4] sm:$0xf] %vm4019, %v3620
      %4134 = vst.msk [vmem:[%s226 + $0x1c8] sm:$0xf] %vm4019, %v3621
      %4135 = vst.msk [vmem:[%s226 + $0x1cc] sm:$0xf] %vm4019, %v3622
      %4136 = vst.msk [vmem:[%s226 + $0x1d0] sm:$0xf] %vm4019, %v3623
      %4137 = vst.msk [vmem:[%s226 + $0x1d4] sm:$0xf] %vm4019, %v3624
      %4138 = vst.msk [vmem:[%s226 + $0x1d8] sm:$0xf] %vm4019, %v3625
      %4139 = vst.msk [vmem:[%s226 + $0x1dc] sm:$0xf] %vm4019, %v3626
      %4140 = vst.msk [vmem:[%s226 + $0x1e0] sm:$0xf] %vm4019, %v3627
      %4141 = vst.msk [vmem:[%s226 + $0x1e4] sm:$0xf] %vm4019, %v3628
      %4142 = vst.msk [vmem:[%s226 + $0x1e8] sm:$0xf] %vm4019, %v3629
      %4143 = vst.msk [vmem:[%s226 + $0x1ec] sm:$0xf] %vm4019, %v3630
      %4144 = vst.msk [vmem:[%s226 + $0x1f0] sm:$0xf] %vm4019, %v3631
      %4145 = vst.msk [vmem:[%s226 + $0x1f4] sm:$0xf] %vm4019, %v3632
      %4146 = vst.msk [vmem:[%s226 + $0x1f8] sm:$0xf] %vm4019, %v3633
      %4147 = vst.msk [vmem:[%s226 + $0x1fc] sm:$0xf] %vm4019, %v3634
      %4148 = vst.msk [vmem:[%s226 + $0x200] sm:$0xf] %vm4019, %v3635
      %4149 = vst.msk [vmem:[%s226 + $0x204] sm:$0xf] %vm4019, %v3636
      %4150 = vst.msk [vmem:[%s226 + $0x208] sm:$0xf] %vm4019, %v3637
      %4151 = vst.msk [vmem:[%s226 + $0x20c] sm:$0xf] %vm4019, %v3638
      %4152 = vst.msk [vmem:[%s226 + $0x210] sm:$0xf] %vm4019, %v3639
      %4153 = vst.msk [vmem:[%s226 + $0x214] sm:$0xf] %vm4019, %v3640
      %4154 = vst.msk [vmem:[%s226 + $0x218] sm:$0xf] %vm4019, %v3641
      %4155 = vst.msk [vmem:[%s226 + $0x21c] sm:$0xf] %vm4019, %v3642
      %4156 = vst.msk [vmem:[%s226 + $0x220] sm:$0xf] %vm4019, %v3643
      %4157 = vst.msk [vmem:[%s226 + $0x224] sm:$0xf] %vm4019, %v3644
      %4158 = vst.msk [vmem:[%s226 + $0x228] sm:$0xf] %vm4019, %v3645
      %4159 = vst.msk [vmem:[%s226 + $0x22c] sm:$0xf] %vm4019, %v3646
      %4160 = vst.msk [vmem:[%s226 + $0x230] sm:$0xf] %vm4019, %v3647
      %4161 = vst.msk [vmem:[%s226 + $0x234] sm:$0xf] %vm4019, %v3648
      %4162 = vst.msk [vmem:[%s226 + $0x238] sm:$0xf] %vm4019, %v3649
      %4163 = vst.msk [vmem:[%s226 + $0x23c] sm:$0xf] %vm4019, %v3650
      %4164 = vst.msk [vmem:[%s226 + $0x240] sm:$0xf] %vm4019, %v3651
      %4165 = vst.msk [vmem:[%s226 + $0x244] sm:$0xf] %vm4019, %v3652
      %4166 = vst.msk [vmem:[%s226 + $0x248] sm:$0xf] %vm4019, %v3653
      %4167 = vst.msk [vmem:[%s226 + $0x24c] sm:$0xf] %vm4019, %v3654
      %4168 = vst.msk [vmem:[%s226 + $0x250] sm:$0xf] %vm4019, %v3655
      %4169 = vst.msk [vmem:[%s226 + $0x254] sm:$0xf] %vm4019, %v3656
      %4170 = vst.msk [vmem:[%s226 + $0x258] sm:$0xf] %vm4019, %v3657
      %4171 = vst.msk [vmem:[%s226 + $0x25c] sm:$0xf] %vm4019, %v3658
      %4172 = vst.msk [vmem:[%s226 + $0x260] sm:$0xf] %vm4019, %v3659
      %4173 = vst.msk [vmem:[%s226 + $0x264] sm:$0xf] %vm4019, %v3660
      %4174 = vst.msk [vmem:[%s226 + $0x268] sm:$0xf] %vm4019, %v3661
      %4175 = vst.msk [vmem:[%s226 + $0x26c] sm:$0xf] %vm4019, %v3662
      %4176 = vst.msk [vmem:[%s226 + $0x270] sm:$0xf] %vm4019, %v3663
      %4177 = vst.msk [vmem:[%s226 + $0x274] sm:$0xf] %vm4019, %v3664
      %4178 = vst.msk [vmem:[%s226 + $0x278] sm:$0xf] %vm4019, %v3665
      %4179 = vst.msk [vmem:[%s226 + $0x27c] sm:$0xf] %vm4019, %v3666
      %4180 = vst.msk [vmem:[%s226 + $0x280] sm:$0xf] %vm4019, %v3667
      %4181 = vst.msk [vmem:[%s226 + $0x284] sm:$0xf] %vm4019, %v3668
      %4182 = vst.msk [vmem:[%s226 + $0x288] sm:$0xf] %vm4019, %v3669
      %4183 = vst.msk [vmem:[%s226 + $0x28c] sm:$0xf] %vm4019, %v3670
      %4184 = vst.msk [vmem:[%s226 + $0x290] sm:$0xf] %vm4019, %v3671
      %4185 = vst.msk [vmem:[%s226 + $0x294] sm:$0xf] %vm4019, %v3672
      %4186 = vst.msk [vmem:[%s226 + $0x298] sm:$0xf] %vm4019, %v3673
      %4187 = vst.msk [vmem:[%s226 + $0x29c] sm:$0xf] %vm4019, %v3674
      %4188 = vst.msk [vmem:[%s226 + $0x2a0] sm:$0xf] %vm4019, %v3675
      %4189 = vst.msk [vmem:[%s226 + $0x2a4] sm:$0xf] %vm4019, %v3676
      %4190 = vst.msk [vmem:[%s226 + $0x2a8] sm:$0xf] %vm4019, %v3677
      %4191 = vst.msk [vmem:[%s226 + $0x2ac] sm:$0xf] %vm4019, %v3678
      %4192 = vst.msk [vmem:[%s226 + $0x2b0] sm:$0xf] %vm4019, %v3679
      %4193 = vst.msk [vmem:[%s226 + $0x2b4] sm:$0xf] %vm4019, %v3680
      %4194 = vst.msk [vmem:[%s226 + $0x2b8] sm:$0xf] %vm4019, %v3681
      %4195 = vst.msk [vmem:[%s226 + $0x2bc] sm:$0xf] %vm4019, %v3682
      %4196 = vst.msk [vmem:[%s226 + $0x2c0] sm:$0xf] %vm4019, %v3683
      %4197 = vst.msk [vmem:[%s226 + $0x2c4] sm:$0xf] %vm4019, %v3684
      %4198 = vst.msk [vmem:[%s226 + $0x2c8] sm:$0xf] %vm4019, %v3685
      %4199 = vst.msk [vmem:[%s226 + $0x2cc] sm:$0xf] %vm4019, %v3686
      %4200 = vst.msk [vmem:[%s226 + $0x2d0] sm:$0xf] %vm4019, %v3687
      %4201 = vst.msk [vmem:[%s226 + $0x2d4] sm:$0xf] %vm4019, %v3688
      %4202 = vst.msk [vmem:[%s226 + $0x2d8] sm:$0xf] %vm4019, %v3689
      %4203 = vst.msk [vmem:[%s226 + $0x2dc] sm:$0xf] %vm4019, %v3690
      %4204 = vst.msk [vmem:[%s226 + $0x2e0] sm:$0xf] %vm4019, %v3691
      %4205 = vst.msk [vmem:[%s226 + $0x2e4] sm:$0xf] %vm4019, %v3692
      %4206 = vst.msk [vmem:[%s226 + $0x2e8] sm:$0xf] %vm4019, %v3693
      %4207 = vst.msk [vmem:[%s226 + $0x2ec] sm:$0xf] %vm4019, %v3694
      %4208 = vst.msk [vmem:[%s226 + $0x2f0] sm:$0xf] %vm4019, %v3695
      %4209 = vst.msk [vmem:[%s226 + $0x2f4] sm:$0xf] %vm4019, %v3696
      %4210 = vst.msk [vmem:[%s226 + $0x2f8] sm:$0xf] %vm4019, %v3697
      %4211 = vst.msk [vmem:[%s226 + $0x2fc] sm:$0xf] %vm4019, %v3698
      %4212 = vst.msk [vmem:[%s226 + $0x300] sm:$0xf] %vm4019, %v3699
      %4213 = vst.msk [vmem:[%s226 + $0x304] sm:$0xf] %vm4019, %v3700
      %4214 = vst.msk [vmem:[%s226 + $0x308] sm:$0xf] %vm4019, %v3701
      %4215 = vst.msk [vmem:[%s226 + $0x30c] sm:$0xf] %vm4019, %v3702
      %4216 = vst.msk [vmem:[%s226 + $0x310] sm:$0xf] %vm4019, %v3703
      %4217 = vst.msk [vmem:[%s226 + $0x314] sm:$0xf] %vm4019, %v3704
      %4218 = vst.msk [vmem:[%s226 + $0x318] sm:$0xf] %vm4019, %v3705
      %4219 = vst.msk [vmem:[%s226 + $0x31c] sm:$0xf] %vm4019, %v3706
      %4220 = vst.msk [vmem:[%s226 + $0x320] sm:$0xf] %vm4019, %v3707
      %4221 = vst.msk [vmem:[%s226 + $0x324] sm:$0xf] %vm4019, %v3708
      %4222 = vst.msk [vmem:[%s226 + $0x328] sm:$0xf] %vm4019, %v3709
      %4223 = vst.msk [vmem:[%s226 + $0x32c] sm:$0xf] %vm4019, %v3710
      %4224 = vst.msk [vmem:[%s226 + $0x330] sm:$0xf] %vm4019, %v3711
      %4225 = vst.msk [vmem:[%s226 + $0x334] sm:$0xf] %vm4019, %v3712
      %4226 = vst.msk [vmem:[%s226 + $0x338] sm:$0xf] %vm4019, %v3713
      %4227 = vst.msk [vmem:[%s226 + $0x33c] sm:$0xf] %vm4019, %v3714
      %4228 = vst.msk [vmem:[%s226 + $0x340] sm:$0xf] %vm4019, %v3715
      %4229 = vst.msk [vmem:[%s226 + $0x344] sm:$0xf] %vm4019, %v3716
      %4230 = vst.msk [vmem:[%s226 + $0x348] sm:$0xf] %vm4019, %v3717
      %4231 = vst.msk [vmem:[%s226 + $0x34c] sm:$0xf] %vm4019, %v3718
      %4232 = vst.msk [vmem:[%s226 + $0x350] sm:$0xf] %vm4019, %v3719
      %4233 = vst.msk [vmem:[%s226 + $0x354] sm:$0xf] %vm4019, %v3720
      %4234 = vst.msk [vmem:[%s226 + $0x358] sm:$0xf] %vm4019, %v3721
      %4235 = vst.msk [vmem:[%s226 + $0x35c] sm:$0xf] %vm4019, %v3722
      %4236 = vst.msk [vmem:[%s226 + $0x360] sm:$0xf] %vm4019, %v3723
      %4237 = vst.msk [vmem:[%s226 + $0x364] sm:$0xf] %vm4019, %v3724
      %4238 = vst.msk [vmem:[%s226 + $0x368] sm:$0xf] %vm4019, %v3725
      %4239 = vst.msk [vmem:[%s226 + $0x36c] sm:$0xf] %vm4019, %v3726
      %4240 = vst.msk [vmem:[%s226 + $0x370] sm:$0xf] %vm4019, %v3727
      %4241 = vst.msk [vmem:[%s226 + $0x374] sm:$0xf] %vm4019, %v3728
      %4242 = vst.msk [vmem:[%s226 + $0x378] sm:$0xf] %vm4019, %v3729
      %4243 = vst.msk [vmem:[%s226 + $0x37c] sm:$0xf] %vm4019, %v3730
      %4244 = vst.msk [vmem:[%s226 + $0x380] sm:$0xf] %vm4019, %v3731
      %4245 = vst.msk [vmem:[%s226 + $0x384] sm:$0xf] %vm4019, %v3732
      %4246 = vst.msk [vmem:[%s226 + $0x388] sm:$0xf] %vm4019, %v3733
      %4247 = vst.msk [vmem:[%s226 + $0x38c] sm:$0xf] %vm4019, %v3734
      %4248 = vst.msk [vmem:[%s226 + $0x390] sm:$0xf] %vm4019, %v3735
      %4249 = vst.msk [vmem:[%s226 + $0x394] sm:$0xf] %vm4019, %v3736
      %4250 = vst.msk [vmem:[%s226 + $0x398] sm:$0xf] %vm4019, %v3737
      %4251 = vst.msk [vmem:[%s226 + $0x39c] sm:$0xf] %vm4019, %v3738
      %4252 = vst.msk [vmem:[%s226 + $0x3a0] sm:$0xf] %vm4019, %v3739
      %4253 = vst.msk [vmem:[%s226 + $0x3a4] sm:$0xf] %vm4019, %v3740
      %4254 = vst.msk [vmem:[%s226 + $0x3a8] sm:$0xf] %vm4019, %v3741
      %4255 = vst.msk [vmem:[%s226 + $0x3ac] sm:$0xf] %vm4019, %v3742
      %4256 = vst.msk [vmem:[%s226 + $0x3b0] sm:$0xf] %vm4019, %v3743
      %4257 = vst.msk [vmem:[%s226 + $0x3b4] sm:$0xf] %vm4019, %v3744
      %4258 = vst.msk [vmem:[%s226 + $0x3b8] sm:$0xf] %vm4019, %v3745
      %4259 = vst.msk [vmem:[%s226 + $0x3bc] sm:$0xf] %vm4019, %v3746
      %4260 = vst.msk [vmem:[%s226 + $0x3c0] sm:$0xf] %vm4019, %v3747
      %4261 = vst.msk [vmem:[%s226 + $0x3c4] sm:$0xf] %vm4019, %v3748
      %4262 = vst.msk [vmem:[%s226 + $0x3c8] sm:$0xf] %vm4019, %v3749
      %4263 = vst.msk [vmem:[%s226 + $0x3cc] sm:$0xf] %vm4019, %v3750
      %4264 = vst.msk [vmem:[%s226 + $0x3d0] sm:$0xf] %vm4019, %v3751
      %4265 = vst.msk [vmem:[%s226 + $0x3d4] sm:$0xf] %vm4019, %v3752
      %4266 = vst.msk [vmem:[%s226 + $0x3d8] sm:$0xf] %vm4019, %v3753
      %4267 = vst.msk [vmem:[%s226 + $0x3dc] sm:$0xf] %vm4019, %v3754
      %4268 = vst.msk [vmem:[%s226 + $0x3e0] sm:$0xf] %vm4019, %v3755
      %4269 = vst.msk [vmem:[%s226 + $0x3e4] sm:$0xf] %vm4019, %v3756
      %4270 = vst.msk [vmem:[%s226 + $0x3e8] sm:$0xf] %vm4019, %v3757
      %4271 = vst.msk [vmem:[%s226 + $0x3ec] sm:$0xf] %vm4019, %v3758
      %4272 = vst.msk [vmem:[%s226 + $0x3f0] sm:$0xf] %vm4019, %v3759
      %4273 = vst.msk [vmem:[%s226 + $0x3f4] sm:$0xf] %vm4019, %v3760
      %4274 = vst.msk [vmem:[%s226 + $0x3f8] sm:$0xf] %vm4019, %v3761
      %4275 = vst.msk [vmem:[%s226 + $0x3fc] sm:$0xf] %vm4019, %v3762
      %s4276 = smul.u32 256, %s16
      %p4277 = scmp.lt.s32.totalorder %s4276, 511
      %s4278 = scalar_select %p4277, %s4276, 511
      %s4279 = smul.addr %s4278, 4
      %s4280 = scalar_lea.vmem %s5, %s4279
      // Predicated region
      $region41: #{tpu_custom_call.1} parent=39 // pred_check
        %p4281 = pneg %p144
      $region42: #{tpu_custom_call.1} parent=39 // pred_check_branch
        %4283 = sbr.rel (%p4281) target = $region44
      $region43: #{tpu_custom_call.1} parent=39 // pred_region
        %s4284 = smul.u32 256, %s16
      $region44: #{tpu_custom_call.1} parent=39 // pred_fallthru
        _
    $region40: #{tpu_custom_call.1} parent=5 // pred_fallthru
      _
    %p4285 = scmp.le.s32.totalorder 2, %s11
    // Predicated region
    $region45: #{tpu_custom_call.1} parent=5 // pred_check
      %p4286 = pneg %p4285
    $region46: #{tpu_custom_call.1} parent=5 // pred_check_branch
      %4288 = sbr.rel (%p4286) target = $region48
    $region47: #{tpu_custom_call.1} parent=5 // pred_region
      %s4289 = ssub.s32 %s11, 2
      // Predicated region
      $region49: #{tpu_custom_call.1} parent=47 // pred_check
        %p4290 = pneg %p150
      $region50: #{tpu_custom_call.1} parent=47 // pred_check_branch
        %4292 = sbr.rel (%p4290) target = $region52
      $region51: #{tpu_custom_call.1} parent=47 // pred_region
        %s4293 = smul.u32 256, %s17
        %p4294 = scmp.lt.s32.totalorder %s4293, 511
        %s4295 = scalar_select %p4294, %s4293, 511
        %s4296 = smul.addr %s4295, 4
        %s4297 = scalar_lea.vmem %s5, %s4296
      $region52: #{tpu_custom_call.1} parent=47 // pred_fallthru
        _
    $region48: #{tpu_custom_call.1} parent=5 // pred_fallthru
      _
  $region6: #{tpu_custom_call.1} parent=0 // loop_footer
    %s15 = sadd.s32 1, %s11
  $region7: #{tpu_custom_call.1} parent=0 // loop_footer_branch
    %10 = sbr.rel target = $region3
  $region8: #{tpu_custom_call.1} parent=0 // loop_exit
    _

</llo_original>
